<compile_context>
chip_gen: v7x
topology: tpu7x:2x2x1
jax: 0.10.0
libtpu: 0.0.40
codegen_flags: <defaults>
</compile_context>

<pallas_src>
import math

import jax
import jax.numpy as jnp
import numpy as np
from jax.experimental import pallas as pl
from jax.experimental.pallas import tpu as pltpu


# ---------------- fused Pallas kernel (one layer per grid step) ----------------

def _make_kernel(*, n_head, head_dim, d_model, seq, bt, n_layers, use_mask):
    H, hd, D, S = n_head, head_dim, d_model, seq

    def kernel(*refs):
        if use_mask:
            (x_ref, mask_ref,
             ln1w_ref, ln1b_ref, wqkv_ref, bqkv_ref, wo_ref, bo_ref,
             ln2w_ref, ln2b_ref, wfc_ref, bfc_ref, wpr_ref, bpr_ref,
             out_ref, xs_ref) = refs
        else:
            (x_ref,
             ln1w_ref, ln1b_ref, wqkv_ref, bqkv_ref, wo_ref, bo_ref,
             ln2w_ref, ln2b_ref, wfc_ref, bfc_ref, wpr_ref, bpr_ref,
             out_ref, xs_ref) = refs
            mask_ref = None

        l = pl.program_id(1)

        # Initialise the persistent residual stream at the first layer.
        @pl.when(l == 0)
        def _():
            xs_ref[...] = x_ref[...].astype(jnp.float32)

        x = xs_ref[...]                               # (Bt*S, D) f32 residual

        def layer_norm(v, g, b):
            mu = jnp.mean(v, axis=-1, keepdims=True)
            c = v - mu
            var = jnp.mean(c * c, axis=-1, keepdims=True)
            return c * jax.lax.rsqrt(var + 1e-5) * g + b

        # ---- multi-head self-attention ----
        h = layer_norm(x, ln1w_ref[0], ln1b_ref[0])
        # Fused QKV projection: (Bt*S, D) @ (D, 3D), bf16 operands, f32 acc.
        qkv = jnp.dot(h.astype(jnp.bfloat16), wqkv_ref[0],
                      preferred_element_type=jnp.float32) + bqkv_ref[0]
        wo = wo_ref[0]                                # (D, D) bf16
        mask = mask_ref[...] if use_mask else None    # (S, S) f32 additive

        attn_rows = []
        for b in range(bt):                           # small static batch tile
            r0 = b * S
            acc = jnp.zeros((S, D), jnp.float32)
            for hh in range(H):                       # static head loop
                c0 = hh * hd
                qh = qkv[r0:r0 + S, c0:c0 + hd]               # scale pre-folded
                kh = qkv[r0:r0 + S, D + c0:D + c0 + hd]
                vh = qkv[r0:r0 + S, 2 * D + c0:2 * D + c0 + hd]
                s = jax.lax.dot_general(
                    qh.astype(jnp.bfloat16), kh.astype(jnp.bfloat16),
                    (((1,), (1,)), ((), ())),
                    preferred_element_type=jnp.float32)       # (S, S)
                if use_mask:
                    s = s + mask
                m = jnp.max(s, axis=-1, keepdims=True)
                e = jnp.exp(s - m)
                p = e * pl.reciprocal(jnp.sum(e, axis=-1, keepdims=True),
                                      approx=True)
                oh = jnp.dot(p.astype(jnp.bfloat16), vh.astype(jnp.bfloat16),
                             preferred_element_type=jnp.float32)
                # Fold head output straight into the output projection.
                acc = acc + jnp.dot(oh.astype(jnp.bfloat16), wo[c0:c0 + hd, :],
                                    preferred_element_type=jnp.float32)
            attn_rows.append(acc)
        attn = attn_rows[0] if bt == 1 else jnp.concatenate(attn_rows, axis=0)
        x = x + attn + bo_ref[0]

        # ---- MLP: c_fc -> QuickGELU -> c_proj ----
        h = layer_norm(x, ln2w_ref[0], ln2b_ref[0])
        hfc = jnp.dot(h.astype(jnp.bfloat16), wfc_ref[0],
                      preferred_element_type=jnp.float32) + bfc_ref[0]
        hfc = hfc * pl.reciprocal(1.0 + jnp.exp(-1.702 * hfc), approx=True)
        x = x + jnp.dot(hfc.astype(jnp.bfloat16), wpr_ref[0],
                        preferred_element_type=jnp.float32) + bpr_ref[0]

        xs_ref[...] = x

        @pl.when(l == n_layers - 1)
        def _():
            out_ref[...] = x.astype(out_ref.dtype)

    return kernel


# ---------------- wrapper ----------------

def transformer_forward(x_sbd, params, n_head, attn_mask=None):
    """x_sbd: (seq, batch, width) -> (seq, batch, width)."""
    S, B, D = x_sbd.shape
    L = params["ln1_w"].shape[0]
    hd = D // n_head
    F = params["wfc"].shape[-1]
    scale = 1.0 / math.sqrt(hd)
    use_mask = attn_mask is not None

    # Fold 1/sqrt(head_dim) into the Q columns of the fused QKV projection,
    # cast weights to bf16 (f32 accumulation in-kernel), keep biases f32.
    qkv_scale = jnp.concatenate(
        [jnp.full((D,), scale, jnp.float32), jnp.ones((2 * D,), jnp.float32)])
    wqkv = (params["wqkv"] * qkv_scale).astype(jnp.bfloat16)
    bqkv = params["bqkv"] * qkv_scale
    wo = params["wo"].astype(jnp.bfloat16)
    wfc = params["wfc"].astype(jnp.bfloat16)
    wpr = params["wproj"].astype(jnp.bfloat16)

    # (S, B, D) -> (B*S, D) flat residual stream (lane-dense last dim).
    x_flat = jnp.transpose(x_sbd, (1, 0, 2)).astype(jnp.float32).reshape(B * S, D)

    # Batch tile: fold a few sequences into the matmul M dimension.
    bt = 1
    for cand in range(min(B, 8), 0, -1):
        if B % cand == 0 and ((cand * S) % 8 == 0 or cand == B):
            bt = cand
            break
    nb = B // bt

    kernel = _make_kernel(n_head=n_head, head_dim=hd, d_model=D, seq=S,
                          bt=bt, n_layers=L, use_mask=use_mask)

    def wspec(*shape):
        return pl.BlockSpec((1,) + shape,
                            lambda b, l: (l,) + (0,) * len(shape))

    in_specs = [pl.BlockSpec((bt * S, D), lambda b, l: (b, 0))]
    args = [x_flat]
    if use_mask:
        in_specs.append(pl.BlockSpec((S, S), lambda b, l: (0, 0)))
        args.append(attn_mask.astype(jnp.float32))
    in_specs += [
        wspec(1, D), wspec(1, D),            # ln1_w, ln1_b
        wspec(D, 3 * D), wspec(1, 3 * D),    # wqkv, bqkv
        wspec(D, D), wspec(1, D),            # wo, bo
        wspec(1, D), wspec(1, D),            # ln2_w, ln2_b
        wspec(D, F), wspec(1, F),            # wfc, bfc
        wspec(F, D), wspec(1, D),            # wproj, bproj
    ]
    args += [params["ln1_w"], params["ln1_b"], wqkv, bqkv, wo, params["bo"],
             params["ln2_w"], params["ln2_b"], wfc, params["bfc"],
             wpr, params["bproj"]]

    out_flat = pl.pallas_call(
        kernel,
        out_shape=jax.ShapeDtypeStruct((B * S, D), jnp.float32),
        grid=(nb, L),
        in_specs=in_specs,
        out_specs=pl.BlockSpec((bt * S, D), lambda b, l: (b, 0)),
        scratch_shapes=[pltpu.VMEM((bt * S, D), jnp.float32)],
        compiler_params=pltpu.CompilerParams(
            dimension_semantics=("parallel", "arbitrary")),
    )(*args)

    return jnp.transpose(out_flat.reshape(B, S, D), (1, 0, 2))


# ---------------- parameter init (packed, matmul-ready layout) ----------------

def init_params(key, width, layers, heads):
    D, L = width, layers
    F = 4 * D
    ks = jax.random.split(key, 5)
    r = lambda k, shape, std: jax.random.normal(k, shape, jnp.float32) * std
    attn_std = D ** -0.5
    return {
        "ln1_w": jnp.ones((L, 1, D), jnp.float32),
        "ln1_b": jnp.zeros((L, 1, D), jnp.float32),
        # qkv = x @ wqkv + bqkv, columns ordered [Q | K | V], heads contiguous.
        "wqkv": r(ks[0], (L, D, 3 * D), attn_std),
        "bqkv": r(ks[1], (L, 1, 3 * D), 0.02),
        # attn_out = concat_heads(o) @ wo + bo
        "wo": r(ks[2], (L, D, D), attn_std),
        "bo": jnp.zeros((L, 1, D), jnp.float32),
        "ln2_w": jnp.ones((L, 1, D), jnp.float32),
        "ln2_b": jnp.zeros((L, 1, D), jnp.float32),
        "wfc": r(ks[3], (L, D, F), attn_std),
        "bfc": jnp.zeros((L, 1, F), jnp.float32),
        "wproj": r(ks[4], (L, F, D), (2 * D) ** -0.5),
        "bproj": jnp.zeros((L, 1, D), jnp.float32),
    }


# ---------------- pure-JAX reference (for validation) ----------------

def _ref_transformer(x_sbd, params, n_head, attn_mask=None):
    hp = jax.lax.Precision.HIGHEST
    S, B, D = x_sbd.shape
    L = params["ln1_w"].shape[0]
    hd = D // n_head
    scale = 1.0 / math.sqrt(hd)
    mask = attn_mask.astype(jnp.float32) if attn_mask is not None else None
    x = jnp.transpose(x_sbd, (1, 0, 2)).astype(jnp.float32)       # (B, S, D)

    def ln(v, g, b):
        mu = jnp.mean(v, axis=-1, keepdims=True)
        c = v - mu
        var = jnp.mean(c * c, axis=-1, keepdims=True)
        return c * jax.lax.rsqrt(var + 1e-5) * g + b

    for l in range(L):
        h = ln(x, params["ln1_w"][l], params["ln1_b"][l])
        qkv = jnp.einsum("bsd,de->bse", h, params["wqkv"][l],
                         precision=hp) + params["bqkv"][l]
        q, k, v = jnp.split(qkv, 3, axis=-1)
        q = q.reshape(B, S, n_head, hd).transpose(0, 2, 1, 3)
        k = k.reshape(B, S, n_head, hd).transpose(0, 2, 1, 3)
        v = v.reshape(B, S, n_head, hd).transpose(0, 2, 1, 3)
        s = jnp.einsum("bhqe,bhke->bhqk", q * scale, k, precision=hp)
        if mask is not None:
            s = s + mask
        p = jax.nn.softmax(s, axis=-1)
        o = jnp.einsum("bhqk,bhke->bhqe", p, v, precision=hp)
        o = o.transpose(0, 2, 1, 3).reshape(B, S, D)
        x = x + jnp.einsum("bsd,de->bse", o, params["wo"][l],
                           precision=hp) + params["bo"][l]
        h = ln(x, params["ln2_w"][l], params["ln2_b"][l])
        h = jnp.einsum("bsd,df->bsf", h, params["wfc"][l],
                       precision=hp) + params["bfc"][l]
        h = h * jax.nn.sigmoid(1.702 * h)
        x = x + jnp.einsum("bsf,fd->bsd", h, params["wproj"][l],
                           precision=hp) + params["bproj"][l]
    return jnp.transpose(x, (1, 0, 2))


if __name__ == "__main__":
    SEQ, BATCH, WIDTH, HEADS, LAYERS = 8, 2, 64, 4, 2

    key = jax.random.PRNGKey(0)
    kx, kp = jax.random.split(key)

    x = jax.random.normal(kx, (SEQ, BATCH, WIDTH), jnp.float32)
    params = init_params(kp, WIDTH, LAYERS, HEADS)

    # Causal additive attention mask (same structure CLIP's text tower uses).
    causal = jnp.where(jnp.arange(SEQ)[:, None] >= jnp.arange(SEQ)[None, :],
                       0.0, -1e9).astype(jnp.float32)

    out = jax.block_until_ready(
        transformer_forward(x, params, HEADS, attn_mask=causal))
    assert out.shape == (SEQ, BATCH, WIDTH), out.shape

    ref = jax.block_until_ready(
        _ref_transformer(x, params, HEADS, attn_mask=causal))
    # bf16 matmul operands (f32 accumulation) + approx reciprocals -> loose tol.
    np.testing.assert_allclose(np.asarray(out), np.asarray(ref),
                               rtol=5e-2, atol=5e-2)

    # Also exercise the attn_mask=None (statically maskless) path.
    out2 = jax.block_until_ready(transformer_forward(x, params, HEADS))
    ref2 = jax.block_until_ready(_ref_transformer(x, params, HEADS))
    np.testing.assert_allclose(np.asarray(out2), np.asarray(ref2),
                               rtol=5e-2, atol=5e-2)

    print("KERNEL_OK")
</pallas_src>

<mosaic_0001>
module attributes {stable_mosaic.version = 11 : i64} {
  func.func @kernel(%arg0: i32, %arg1: i32, %arg2: memref<16x64xf32, #tpu.memory_space<vmem>>, %arg3: memref<8x8xf32, #tpu.memory_space<vmem>>, %arg4: memref<1x1x64xf32, #tpu.memory_space<vmem>>, %arg5: memref<1x1x64xf32, #tpu.memory_space<vmem>>, %arg6: memref<1x64x192xbf16, #tpu.memory_space<vmem>>, %arg7: memref<1x1x192xf32, #tpu.memory_space<vmem>>, %arg8: memref<1x64x64xbf16, #tpu.memory_space<vmem>>, %arg9: memref<1x1x64xf32, #tpu.memory_space<vmem>>, %arg10: memref<1x1x64xf32, #tpu.memory_space<vmem>>, %arg11: memref<1x1x64xf32, #tpu.memory_space<vmem>>, %arg12: memref<1x64x256xbf16, #tpu.memory_space<vmem>>, %arg13: memref<1x1x256xf32, #tpu.memory_space<vmem>>, %arg14: memref<1x256x64xbf16, #tpu.memory_space<vmem>>, %arg15: memref<1x1x64xf32, #tpu.memory_space<vmem>>, %arg16: memref<16x64xf32, #tpu.memory_space<vmem>>, %arg17: memref<16x64xf32, #tpu.memory_space<vmem>>) attributes {dimension_semantics = [#tpu.dimension_semantics<parallel>, #tpu.dimension_semantics<arbitrary>], iteration_bounds = array<i64: 1, 2>, scalar_prefetch = 0 : i64, scratch_operands = 1 : i64, tpu.core_type = #tpu.core_type<tc>, window_params = [{transform_indices = @transform_0, window_bounds = array<i64: 16, 64>}, {pipeline_mode = #tpu.pipeline_mode<synchronous>, transform_indices = @transform_1, window_bounds = array<i64: 8, 8>}, {transform_indices = @transform_2, window_bounds = array<i64: 1, 1, 64>}, {transform_indices = @transform_3, window_bounds = array<i64: 1, 1, 64>}, {transform_indices = @transform_4, window_bounds = array<i64: 1, 64, 192>}, {transform_indices = @transform_5, window_bounds = array<i64: 1, 1, 192>}, {transform_indices = @transform_6, window_bounds = array<i64: 1, 64, 64>}, {transform_indices = @transform_7, window_bounds = array<i64: 1, 1, 64>}, {transform_indices = @transform_8, window_bounds = array<i64: 1, 1, 64>}, {transform_indices = @transform_9, window_bounds = array<i64: 1, 1, 64>}, {transform_indices = @transform_10, window_bounds = array<i64: 1, 64, 256>}, {transform_indices = @transform_11, window_bounds = array<i64: 1, 1, 256>}, {transform_indices = @transform_12, window_bounds = array<i64: 1, 256, 64>}, {transform_indices = @transform_13, window_bounds = array<i64: 1, 1, 64>}, {transform_indices = @transform_14, window_bounds = array<i64: 16, 64>}]} {
    %c0_i32 = arith.constant 0 : i32
    %0 = arith.cmpi eq, %arg1, %c0_i32 : i32
    %1 = arith.extui %0 : i1 to i32
    %c0_i32_0 = arith.constant 0 : i32
    %2 = arith.cmpi ne, %1, %c0_i32_0 : i32
    scf.if %2 {
      %c0_99 = arith.constant 0 : index
      %c0_100 = arith.constant 0 : index
      %291 = vector.load %arg2[%c0_99, %c0_100] : memref<16x64xf32, #tpu.memory_space<vmem>>, vector<16x64xf32>
      %c0_101 = arith.constant 0 : index
      %c0_102 = arith.constant 0 : index
      %292 = vector.load %arg17[%c0_101, %c0_102] : memref<16x64xf32, #tpu.memory_space<vmem>>, vector<16x64xf32>
      tpu.vector_store %arg17[%c0_101, %c0_102], %291 {strides = array<i32>} : memref<16x64xf32, #tpu.memory_space<vmem>>, vector<16x64xf32>,
    } else {
    }
    %c0 = arith.constant 0 : index
    %c0_1 = arith.constant 0 : index
    %3 = vector.load %arg17[%c0, %c0_1] : memref<16x64xf32, #tpu.memory_space<vmem>>, vector<16x64xf32>
    %c0_2 = arith.constant 0 : index
    %c0_3 = arith.constant 0 : index
    %c0_4 = arith.constant 0 : index
    %4 = vector.load %arg4[%c0_2, %c0_3, %c0_4] : memref<1x1x64xf32, #tpu.memory_space<vmem>>, vector<1x1x64xf32>
    %5 = vector.shape_cast %4 : vector<1x1x64xf32> to vector<1x64xf32>
    %c0_5 = arith.constant 0 : index
    %c0_6 = arith.constant 0 : index
    %c0_7 = arith.constant 0 : index
    %6 = vector.load %arg5[%c0_5, %c0_6, %c0_7] : memref<1x1x64xf32, #tpu.memory_space<vmem>>, vector<1x1x64xf32>
    %7 = vector.shape_cast %6 : vector<1x1x64xf32> to vector<1x64xf32>
    %cst = arith.constant dense<0.000000e+00> : vector<16xf32>
    %8 = vector.multi_reduction <add>, %3, %cst [1] : vector<16x64xf32> to vector<16xf32>
    %9 = vector.shape_cast %8 : vector<16xf32> to vector<16x1xf32>
    %cst_8 = arith.constant 6.400000e+01 : f32
    %10 = vector.broadcast %cst_8 : f32 to vector<16x1xf32>
    %11 = arith.divf %9, %10 : vector<16x1xf32>
    %12 = vector.broadcast %11 : vector<16x1xf32> to vector<16x64xf32>
    %13 = arith.subf %3, %12 : vector<16x64xf32>
    %14 = arith.mulf %13, %13 : vector<16x64xf32>
    %cst_9 = arith.constant dense<0.000000e+00> : vector<16xf32>
    %15 = vector.multi_reduction <add>, %14, %cst_9 [1] : vector<16x64xf32> to vector<16xf32>
    %16 = vector.shape_cast %15 : vector<16xf32> to vector<16x1xf32>
    %cst_10 = arith.constant 6.400000e+01 : f32
    %17 = vector.broadcast %cst_10 : f32 to vector<16x1xf32>
    %18 = arith.divf %16, %17 : vector<16x1xf32>
    %cst_11 = arith.constant 9.99999974E-6 : f32
    %19 = vector.broadcast %cst_11 : f32 to vector<16x1xf32>
    %20 = arith.addf %18, %19 : vector<16x1xf32>
    %21 = math.rsqrt %20 : vector<16x1xf32>
    %22 = vector.broadcast %21 : vector<16x1xf32> to vector<16x64xf32>
    %23 = arith.mulf %13, %22 : vector<16x64xf32>
    %24 = vector.broadcast %5 : vector<1x64xf32> to vector<16x64xf32>
    %25 = arith.mulf %23, %24 : vector<16x64xf32>
    %26 = vector.broadcast %7 : vector<1x64xf32> to vector<16x64xf32>
    %27 = arith.addf %25, %26 : vector<16x64xf32>
    %28 = arith.truncf %27 : vector<16x64xf32> to vector<16x64xbf16>
    %c0_12 = arith.constant 0 : index
    %c0_13 = arith.constant 0 : index
    %c0_14 = arith.constant 0 : index
    %29 = vector.load %arg6[%c0_12, %c0_13, %c0_14] : memref<1x64x192xbf16, #tpu.memory_space<vmem>>, vector<1x64x192xbf16>
    %30 = vector.shape_cast %29 : vector<1x64x192xbf16> to vector<64x192xbf16>
    %cst_15 = arith.constant dense<0.000000e+00> : vector<16x192xf32>
    %31 = tpu.matmul %28, %30, %cst_15 {dimension_numbers = #tpu.dot_dimension_numbers<[1], [0], [0], [1], [0, 0, 1, 1], [], []>} : vector<16x64xbf16>, vector<64x192xbf16>, vector<16x192xf32> -> vector<16x192xf32>
    %c0_16 = arith.constant 0 : index
    %c0_17 = arith.constant 0 : index
    %c0_18 = arith.constant 0 : index
    %32 = vector.load %arg7[%c0_16, %c0_17, %c0_18] : memref<1x1x192xf32, #tpu.memory_space<vmem>>, vector<1x1x192xf32>
    %33 = vector.shape_cast %32 : vector<1x1x192xf32> to vector<1x192xf32>
    %34 = vector.broadcast %33 : vector<1x192xf32> to vector<16x192xf32>
    %35 = arith.addf %31, %34 : vector<16x192xf32>
    %c0_19 = arith.constant 0 : index
    %c0_20 = arith.constant 0 : index
    %c0_21 = arith.constant 0 : index
    %36 = vector.load %arg8[%c0_19, %c0_20, %c0_21] : memref<1x64x64xbf16, #tpu.memory_space<vmem>>, vector<1x64x64xbf16>
    %37 = vector.shape_cast %36 : vector<1x64x64xbf16> to vector<64x64xbf16>
    %c0_22 = arith.constant 0 : index
    %c0_23 = arith.constant 0 : index
    %38 = vector.load %arg3[%c0_22, %c0_23] : memref<8x8xf32, #tpu.memory_space<vmem>>, vector<8x8xf32>
    %cst_24 = arith.constant 0.000000e+00 : f32
    %39 = vector.broadcast %cst_24 : f32 to vector<8x64xf32>
    %40 = vector.extract_strided_slice %35 {offsets = [0, 0], sizes = [8, 16], strides = [1, 1]} : vector<16x192xf32> to vector<8x16xf32>
    %41 = vector.extract_strided_slice %35 {offsets = [0, 64], sizes = [8, 16], strides = [1, 1]} : vector<16x192xf32> to vector<8x16xf32>
    %42 = vector.extract_strided_slice %35 {offsets = [0, 128], sizes = [8, 16], strides = [1, 1]} : vector<16x192xf32> to vector<8x16xf32>
    %43 = arith.truncf %40 : vector<8x16xf32> to vector<8x16xbf16>
    %44 = arith.truncf %41 : vector<8x16xf32> to vector<8x16xbf16>
    %cst_25 = arith.constant dense<0.000000e+00> : vector<8x8xf32>
    %45 = tpu.matmul %43, %44, %cst_25 {dimension_numbers = #tpu.dot_dimension_numbers<[1], [1], [0], [0], [0, 0, 1, 0], [], []>} : vector<8x16xbf16>, vector<8x16xbf16>, vector<8x8xf32> -> vector<8x8xf32>
    %46 = arith.addf %45, %38 : vector<8x8xf32>
    %cst_26 = arith.constant dense<0xFF800000> : vector<8xf32>
    %47 = vector.multi_reduction <maximumf>, %46, %cst_26 [1] : vector<8x8xf32> to vector<8xf32>
    %48 = vector.shape_cast %47 : vector<8xf32> to vector<8x1xf32>
    %49 = vector.broadcast %48 : vector<8x1xf32> to vector<8x8xf32>
    %50 = arith.subf %46, %49 : vector<8x8xf32>
    %51 = math.exp %50 : vector<8x8xf32>
    %cst_27 = arith.constant dense<0.000000e+00> : vector<8xf32>
    %52 = vector.multi_reduction <add>, %51, %cst_27 [1] : vector<8x8xf32> to vector<8xf32>
    %53 = vector.shape_cast %52 : vector<8xf32> to vector<8x1xf32>
    %54 = tpu.reciprocal %53 {approx = true} : vector<8x1xf32> -> vector<8x1xf32>
    %55 = vector.broadcast %54 : vector<8x1xf32> to vector<8x8xf32>
    %56 = arith.mulf %51, %55 : vector<8x8xf32>
    %57 = arith.truncf %56 : vector<8x8xf32> to vector<8x8xbf16>
    %58 = arith.truncf %42 : vector<8x16xf32> to vector<8x16xbf16>
    %cst_28 = arith.constant dense<0.000000e+00> : vector<8x16xf32>
    %59 = tpu.matmul %57, %58, %cst_28 {dimension_numbers = #tpu.dot_dimension_numbers<[1], [0], [0], [1], [0, 0, 1, 1], [], []>} : vector<8x8xbf16>, vector<8x16xbf16>, vector<8x16xf32> -> vector<8x16xf32>
    %60 = arith.truncf %59 : vector<8x16xf32> to vector<8x16xbf16>
    %61 = vector.extract_strided_slice %37 {offsets = [0, 0], sizes = [16, 64], strides = [1, 1]} : vector<64x64xbf16> to vector<16x64xbf16>
    %cst_29 = arith.constant dense<0.000000e+00> : vector<8x64xf32>
    %62 = tpu.matmul %60, %61, %cst_29 {dimension_numbers = #tpu.dot_dimension_numbers<[1], [0], [0], [1], [0, 0, 1, 1], [], []>} : vector<8x16xbf16>, vector<16x64xbf16>, vector<8x64xf32> -> vector<8x64xf32>
    %63 = arith.addf %39, %62 : vector<8x64xf32>
    %64 = vector.extract_strided_slice %35 {offsets = [0, 16], sizes = [8, 16], strides = [1, 1]} : vector<16x192xf32> to vector<8x16xf32>
    %65 = vector.extract_strided_slice %35 {offsets = [0, 80], sizes = [8, 16], strides = [1, 1]} : vector<16x192xf32> to vector<8x16xf32>
    %66 = vector.extract_strided_slice %35 {offsets = [0, 144], sizes = [8, 16], strides = [1, 1]} : vector<16x192xf32> to vector<8x16xf32>
    %67 = arith.truncf %64 : vector<8x16xf32> to vector<8x16xbf16>
    %68 = arith.truncf %65 : vector<8x16xf32> to vector<8x16xbf16>
    %cst_30 = arith.constant dense<0.000000e+00> : vector<8x8xf32>
    %69 = tpu.matmul %67, %68, %cst_30 {dimension_numbers = #tpu.dot_dimension_numbers<[1], [1], [0], [0], [0, 0, 1, 0], [], []>} : vector<8x16xbf16>, vector<8x16xbf16>, vector<8x8xf32> -> vector<8x8xf32>
    %70 = arith.addf %69, %38 : vector<8x8xf32>
    %cst_31 = arith.constant dense<0xFF800000> : vector<8xf32>
    %71 = vector.multi_reduction <maximumf>, %70, %cst_31 [1] : vector<8x8xf32> to vector<8xf32>
    %72 = vector.shape_cast %71 : vector<8xf32> to vector<8x1xf32>
    %73 = vector.broadcast %72 : vector<8x1xf32> to vector<8x8xf32>
    %74 = arith.subf %70, %73 : vector<8x8xf32>
    %75 = math.exp %74 : vector<8x8xf32>
    %cst_32 = arith.constant dense<0.000000e+00> : vector<8xf32>
    %76 = vector.multi_reduction <add>, %75, %cst_32 [1] : vector<8x8xf32> to vector<8xf32>
    %77 = vector.shape_cast %76 : vector<8xf32> to vector<8x1xf32>
    %78 = tpu.reciprocal %77 {approx = true} : vector<8x1xf32> -> vector<8x1xf32>
    %79 = vector.broadcast %78 : vector<8x1xf32> to vector<8x8xf32>
    %80 = arith.mulf %75, %79 : vector<8x8xf32>
    %81 = arith.truncf %80 : vector<8x8xf32> to vector<8x8xbf16>
    %82 = arith.truncf %66 : vector<8x16xf32> to vector<8x16xbf16>
    %cst_33 = arith.constant dense<0.000000e+00> : vector<8x16xf32>
    %83 = tpu.matmul %81, %82, %cst_33 {dimension_numbers = #tpu.dot_dimension_numbers<[1], [0], [0], [1], [0, 0, 1, 1], [], []>} : vector<8x8xbf16>, vector<8x16xbf16>, vector<8x16xf32> -> vector<8x16xf32>
    %84 = arith.truncf %83 : vector<8x16xf32> to vector<8x16xbf16>
    %85 = vector.extract_strided_slice %37 {offsets = [16, 0], sizes = [16, 64], strides = [1, 1]} : vector<64x64xbf16> to vector<16x64xbf16>
    %cst_34 = arith.constant dense<0.000000e+00> : vector<8x64xf32>
    %86 = tpu.matmul %84, %85, %cst_34 {dimension_numbers = #tpu.dot_dimension_numbers<[1], [0], [0], [1], [0, 0, 1, 1], [], []>} : vector<8x16xbf16>, vector<16x64xbf16>, vector<8x64xf32> -> vector<8x64xf32>
    %87 = arith.addf %63, %86 : vector<8x64xf32>
    %88 = vector.extract_strided_slice %35 {offsets = [0, 32], sizes = [8, 16], strides = [1, 1]} : vector<16x192xf32> to vector<8x16xf32>
    %89 = vector.extract_strided_slice %35 {offsets = [0, 96], sizes = [8, 16], strides = [1, 1]} : vector<16x192xf32> to vector<8x16xf32>
    %90 = vector.extract_strided_slice %35 {offsets = [0, 160], sizes = [8, 16], strides = [1, 1]} : vector<16x192xf32> to vector<8x16xf32>
    %91 = arith.truncf %88 : vector<8x16xf32> to vector<8x16xbf16>
    %92 = arith.truncf %89 : vector<8x16xf32> to vector<8x16xbf16>
    %cst_35 = arith.constant dense<0.000000e+00> : vector<8x8xf32>
    %93 = tpu.matmul %91, %92, %cst_35 {dimension_numbers = #tpu.dot_dimension_numbers<[1], [1], [0], [0], [0, 0, 1, 0], [], []>} : vector<8x16xbf16>, vector<8x16xbf16>, vector<8x8xf32> -> vector<8x8xf32>
    %94 = arith.addf %93, %38 : vector<8x8xf32>
    %cst_36 = arith.constant dense<0xFF800000> : vector<8xf32>
    %95 = vector.multi_reduction <maximumf>, %94, %cst_36 [1] : vector<8x8xf32> to vector<8xf32>
    %96 = vector.shape_cast %95 : vector<8xf32> to vector<8x1xf32>
    %97 = vector.broadcast %96 : vector<8x1xf32> to vector<8x8xf32>
    %98 = arith.subf %94, %97 : vector<8x8xf32>
    %99 = math.exp %98 : vector<8x8xf32>
    %cst_37 = arith.constant dense<0.000000e+00> : vector<8xf32>
    %100 = vector.multi_reduction <add>, %99, %cst_37 [1] : vector<8x8xf32> to vector<8xf32>
    %101 = vector.shape_cast %100 : vector<8xf32> to vector<8x1xf32>
    %102 = tpu.reciprocal %101 {approx = true} : vector<8x1xf32> -> vector<8x1xf32>
    %103 = vector.broadcast %102 : vector<8x1xf32> to vector<8x8xf32>
    %104 = arith.mulf %99, %103 : vector<8x8xf32>
    %105 = arith.truncf %104 : vector<8x8xf32> to vector<8x8xbf16>
    %106 = arith.truncf %90 : vector<8x16xf32> to vector<8x16xbf16>
    %cst_38 = arith.constant dense<0.000000e+00> : vector<8x16xf32>
    %107 = tpu.matmul %105, %106, %cst_38 {dimension_numbers = #tpu.dot_dimension_numbers<[1], [0], [0], [1], [0, 0, 1, 1], [], []>} : vector<8x8xbf16>, vector<8x16xbf16>, vector<8x16xf32> -> vector<8x16xf32>
    %108 = arith.truncf %107 : vector<8x16xf32> to vector<8x16xbf16>
    %109 = vector.extract_strided_slice %37 {offsets = [32, 0], sizes = [16, 64], strides = [1, 1]} : vector<64x64xbf16> to vector<16x64xbf16>
    %cst_39 = arith.constant dense<0.000000e+00> : vector<8x64xf32>
    %110 = tpu.matmul %108, %109, %cst_39 {dimension_numbers = #tpu.dot_dimension_numbers<[1], [0], [0], [1], [0, 0, 1, 1], [], []>} : vector<8x16xbf16>, vector<16x64xbf16>, vector<8x64xf32> -> vector<8x64xf32>
    %111 = arith.addf %87, %110 : vector<8x64xf32>
    %112 = vector.extract_strided_slice %35 {offsets = [0, 48], sizes = [8, 16], strides = [1, 1]} : vector<16x192xf32> to vector<8x16xf32>
    %113 = vector.extract_strided_slice %35 {offsets = [0, 112], sizes = [8, 16], strides = [1, 1]} : vector<16x192xf32> to vector<8x16xf32>
    %114 = vector.extract_strided_slice %35 {offsets = [0, 176], sizes = [8, 16], strides = [1, 1]} : vector<16x192xf32> to vector<8x16xf32>
    %115 = arith.truncf %112 : vector<8x16xf32> to vector<8x16xbf16>
    %116 = arith.truncf %113 : vector<8x16xf32> to vector<8x16xbf16>
    %cst_40 = arith.constant dense<0.000000e+00> : vector<8x8xf32>
    %117 = tpu.matmul %115, %116, %cst_40 {dimension_numbers = #tpu.dot_dimension_numbers<[1], [1], [0], [0], [0, 0, 1, 0], [], []>} : vector<8x16xbf16>, vector<8x16xbf16>, vector<8x8xf32> -> vector<8x8xf32>
    %118 = arith.addf %117, %38 : vector<8x8xf32>
    %cst_41 = arith.constant dense<0xFF800000> : vector<8xf32>
    %119 = vector.multi_reduction <maximumf>, %118, %cst_41 [1] : vector<8x8xf32> to vector<8xf32>
    %120 = vector.shape_cast %119 : vector<8xf32> to vector<8x1xf32>
    %121 = vector.broadcast %120 : vector<8x1xf32> to vector<8x8xf32>
    %122 = arith.subf %118, %121 : vector<8x8xf32>
    %123 = math.exp %122 : vector<8x8xf32>
    %cst_42 = arith.constant dense<0.000000e+00> : vector<8xf32>
    %124 = vector.multi_reduction <add>, %123, %cst_42 [1] : vector<8x8xf32> to vector<8xf32>
    %125 = vector.shape_cast %124 : vector<8xf32> to vector<8x1xf32>
    %126 = tpu.reciprocal %125 {approx = true} : vector<8x1xf32> -> vector<8x1xf32>
    %127 = vector.broadcast %126 : vector<8x1xf32> to vector<8x8xf32>
    %128 = arith.mulf %123, %127 : vector<8x8xf32>
    %129 = arith.truncf %128 : vector<8x8xf32> to vector<8x8xbf16>
    %130 = arith.truncf %114 : vector<8x16xf32> to vector<8x16xbf16>
    %cst_43 = arith.constant dense<0.000000e+00> : vector<8x16xf32>
    %131 = tpu.matmul %129, %130, %cst_43 {dimension_numbers = #tpu.dot_dimension_numbers<[1], [0], [0], [1], [0, 0, 1, 1], [], []>} : vector<8x8xbf16>, vector<8x16xbf16>, vector<8x16xf32> -> vector<8x16xf32>
    %132 = arith.truncf %131 : vector<8x16xf32> to vector<8x16xbf16>
    %133 = vector.extract_strided_slice %37 {offsets = [48, 0], sizes = [16, 64], strides = [1, 1]} : vector<64x64xbf16> to vector<16x64xbf16>
    %cst_44 = arith.constant dense<0.000000e+00> : vector<8x64xf32>
    %134 = tpu.matmul %132, %133, %cst_44 {dimension_numbers = #tpu.dot_dimension_numbers<[1], [0], [0], [1], [0, 0, 1, 1], [], []>} : vector<8x16xbf16>, vector<16x64xbf16>, vector<8x64xf32> -> vector<8x64xf32>
    %135 = arith.addf %111, %134 : vector<8x64xf32>
    %cst_45 = arith.constant 0.000000e+00 : f32
    %136 = vector.broadcast %cst_45 : f32 to vector<8x64xf32>
    %137 = vector.extract_strided_slice %35 {offsets = [8, 0], sizes = [8, 16], strides = [1, 1]} : vector<16x192xf32> to vector<8x16xf32>
    %138 = vector.extract_strided_slice %35 {offsets = [8, 64], sizes = [8, 16], strides = [1, 1]} : vector<16x192xf32> to vector<8x16xf32>
    %139 = vector.extract_strided_slice %35 {offsets = [8, 128], sizes = [8, 16], strides = [1, 1]} : vector<16x192xf32> to vector<8x16xf32>
    %140 = arith.truncf %137 : vector<8x16xf32> to vector<8x16xbf16>
    %141 = arith.truncf %138 : vector<8x16xf32> to vector<8x16xbf16>
    %cst_46 = arith.constant dense<0.000000e+00> : vector<8x8xf32>
    %142 = tpu.matmul %140, %141, %cst_46 {dimension_numbers = #tpu.dot_dimension_numbers<[1], [1], [0], [0], [0, 0, 1, 0], [], []>} : vector<8x16xbf16>, vector<8x16xbf16>, vector<8x8xf32> -> vector<8x8xf32>
    %143 = arith.addf %142, %38 : vector<8x8xf32>
    %cst_47 = arith.constant dense<0xFF800000> : vector<8xf32>
    %144 = vector.multi_reduction <maximumf>, %143, %cst_47 [1] : vector<8x8xf32> to vector<8xf32>
    %145 = vector.shape_cast %144 : vector<8xf32> to vector<8x1xf32>
    %146 = vector.broadcast %145 : vector<8x1xf32> to vector<8x8xf32>
    %147 = arith.subf %143, %146 : vector<8x8xf32>
    %148 = math.exp %147 : vector<8x8xf32>
    %cst_48 = arith.constant dense<0.000000e+00> : vector<8xf32>
    %149 = vector.multi_reduction <add>, %148, %cst_48 [1] : vector<8x8xf32> to vector<8xf32>
    %150 = vector.shape_cast %149 : vector<8xf32> to vector<8x1xf32>
    %151 = tpu.reciprocal %150 {approx = true} : vector<8x1xf32> -> vector<8x1xf32>
    %152 = vector.broadcast %151 : vector<8x1xf32> to vector<8x8xf32>
    %153 = arith.mulf %148, %152 : vector<8x8xf32>
    %154 = arith.truncf %153 : vector<8x8xf32> to vector<8x8xbf16>
    %155 = arith.truncf %139 : vector<8x16xf32> to vector<8x16xbf16>
    %cst_49 = arith.constant dense<0.000000e+00> : vector<8x16xf32>
    %156 = tpu.matmul %154, %155, %cst_49 {dimension_numbers = #tpu.dot_dimension_numbers<[1], [0], [0], [1], [0, 0, 1, 1], [], []>} : vector<8x8xbf16>, vector<8x16xbf16>, vector<8x16xf32> -> vector<8x16xf32>
    %157 = arith.truncf %156 : vector<8x16xf32> to vector<8x16xbf16>
    %158 = vector.extract_strided_slice %37 {offsets = [0, 0], sizes = [16, 64], strides = [1, 1]} : vector<64x64xbf16> to vector<16x64xbf16>
    %cst_50 = arith.constant dense<0.000000e+00> : vector<8x64xf32>
    %159 = tpu.matmul %157, %158, %cst_50 {dimension_numbers = #tpu.dot_dimension_numbers<[1], [0], [0], [1], [0, 0, 1, 1], [], []>} : vector<8x16xbf16>, vector<16x64xbf16>, vector<8x64xf32> -> vector<8x64xf32>
    %160 = arith.addf %136, %159 : vector<8x64xf32>
    %161 = vector.extract_strided_slice %35 {offsets = [8, 16], sizes = [8, 16], strides = [1, 1]} : vector<16x192xf32> to vector<8x16xf32>
    %162 = vector.extract_strided_slice %35 {offsets = [8, 80], sizes = [8, 16], strides = [1, 1]} : vector<16x192xf32> to vector<8x16xf32>
    %163 = vector.extract_strided_slice %35 {offsets = [8, 144], sizes = [8, 16], strides = [1, 1]} : vector<16x192xf32> to vector<8x16xf32>
    %164 = arith.truncf %161 : vector<8x16xf32> to vector<8x16xbf16>
    %165 = arith.truncf %162 : vector<8x16xf32> to vector<8x16xbf16>
    %cst_51 = arith.constant dense<0.000000e+00> : vector<8x8xf32>
    %166 = tpu.matmul %164, %165, %cst_51 {dimension_numbers = #tpu.dot_dimension_numbers<[1], [1], [0], [0], [0, 0, 1, 0], [], []>} : vector<8x16xbf16>, vector<8x16xbf16>, vector<8x8xf32> -> vector<8x8xf32>
    %167 = arith.addf %166, %38 : vector<8x8xf32>
    %cst_52 = arith.constant dense<0xFF800000> : vector<8xf32>
    %168 = vector.multi_reduction <maximumf>, %167, %cst_52 [1] : vector<8x8xf32> to vector<8xf32>
    %169 = vector.shape_cast %168 : vector<8xf32> to vector<8x1xf32>
    %170 = vector.broadcast %169 : vector<8x1xf32> to vector<8x8xf32>
    %171 = arith.subf %167, %170 : vector<8x8xf32>
    %172 = math.exp %171 : vector<8x8xf32>
    %cst_53 = arith.constant dense<0.000000e+00> : vector<8xf32>
    %173 = vector.multi_reduction <add>, %172, %cst_53 [1] : vector<8x8xf32> to vector<8xf32>
    %174 = vector.shape_cast %173 : vector<8xf32> to vector<8x1xf32>
    %175 = tpu.reciprocal %174 {approx = true} : vector<8x1xf32> -> vector<8x1xf32>
    %176 = vector.broadcast %175 : vector<8x1xf32> to vector<8x8xf32>
    %177 = arith.mulf %172, %176 : vector<8x8xf32>
    %178 = arith.truncf %177 : vector<8x8xf32> to vector<8x8xbf16>
    %179 = arith.truncf %163 : vector<8x16xf32> to vector<8x16xbf16>
    %cst_54 = arith.constant dense<0.000000e+00> : vector<8x16xf32>
    %180 = tpu.matmul %178, %179, %cst_54 {dimension_numbers = #tpu.dot_dimension_numbers<[1], [0], [0], [1], [0, 0, 1, 1], [], []>} : vector<8x8xbf16>, vector<8x16xbf16>, vector<8x16xf32> -> vector<8x16xf32>
    %181 = arith.truncf %180 : vector<8x16xf32> to vector<8x16xbf16>
    %182 = vector.extract_strided_slice %37 {offsets = [16, 0], sizes = [16, 64], strides = [1, 1]} : vector<64x64xbf16> to vector<16x64xbf16>
    %cst_55 = arith.constant dense<0.000000e+00> : vector<8x64xf32>
    %183 = tpu.matmul %181, %182, %cst_55 {dimension_numbers = #tpu.dot_dimension_numbers<[1], [0], [0], [1], [0, 0, 1, 1], [], []>} : vector<8x16xbf16>, vector<16x64xbf16>, vector<8x64xf32> -> vector<8x64xf32>
    %184 = arith.addf %160, %183 : vector<8x64xf32>
    %185 = vector.extract_strided_slice %35 {offsets = [8, 32], sizes = [8, 16], strides = [1, 1]} : vector<16x192xf32> to vector<8x16xf32>
    %186 = vector.extract_strided_slice %35 {offsets = [8, 96], sizes = [8, 16], strides = [1, 1]} : vector<16x192xf32> to vector<8x16xf32>
    %187 = vector.extract_strided_slice %35 {offsets = [8, 160], sizes = [8, 16], strides = [1, 1]} : vector<16x192xf32> to vector<8x16xf32>
    %188 = arith.truncf %185 : vector<8x16xf32> to vector<8x16xbf16>
    %189 = arith.truncf %186 : vector<8x16xf32> to vector<8x16xbf16>
    %cst_56 = arith.constant dense<0.000000e+00> : vector<8x8xf32>
    %190 = tpu.matmul %188, %189, %cst_56 {dimension_numbers = #tpu.dot_dimension_numbers<[1], [1], [0], [0], [0, 0, 1, 0], [], []>} : vector<8x16xbf16>, vector<8x16xbf16>, vector<8x8xf32> -> vector<8x8xf32>
    %191 = arith.addf %190, %38 : vector<8x8xf32>
    %cst_57 = arith.constant dense<0xFF800000> : vector<8xf32>
    %192 = vector.multi_reduction <maximumf>, %191, %cst_57 [1] : vector<8x8xf32> to vector<8xf32>
    %193 = vector.shape_cast %192 : vector<8xf32> to vector<8x1xf32>
    %194 = vector.broadcast %193 : vector<8x1xf32> to vector<8x8xf32>
    %195 = arith.subf %191, %194 : vector<8x8xf32>
    %196 = math.exp %195 : vector<8x8xf32>
    %cst_58 = arith.constant dense<0.000000e+00> : vector<8xf32>
    %197 = vector.multi_reduction <add>, %196, %cst_58 [1] : vector<8x8xf32> to vector<8xf32>
    %198 = vector.shape_cast %197 : vector<8xf32> to vector<8x1xf32>
    %199 = tpu.reciprocal %198 {approx = true} : vector<8x1xf32> -> vector<8x1xf32>
    %200 = vector.broadcast %199 : vector<8x1xf32> to vector<8x8xf32>
    %201 = arith.mulf %196, %200 : vector<8x8xf32>
    %202 = arith.truncf %201 : vector<8x8xf32> to vector<8x8xbf16>
    %203 = arith.truncf %187 : vector<8x16xf32> to vector<8x16xbf16>
    %cst_59 = arith.constant dense<0.000000e+00> : vector<8x16xf32>
    %204 = tpu.matmul %202, %203, %cst_59 {dimension_numbers = #tpu.dot_dimension_numbers<[1], [0], [0], [1], [0, 0, 1, 1], [], []>} : vector<8x8xbf16>, vector<8x16xbf16>, vector<8x16xf32> -> vector<8x16xf32>
    %205 = arith.truncf %204 : vector<8x16xf32> to vector<8x16xbf16>
    %206 = vector.extract_strided_slice %37 {offsets = [32, 0], sizes = [16, 64], strides = [1, 1]} : vector<64x64xbf16> to vector<16x64xbf16>
    %cst_60 = arith.constant dense<0.000000e+00> : vector<8x64xf32>
    %207 = tpu.matmul %205, %206, %cst_60 {dimension_numbers = #tpu.dot_dimension_numbers<[1], [0], [0], [1], [0, 0, 1, 1], [], []>} : vector<8x16xbf16>, vector<16x64xbf16>, vector<8x64xf32> -> vector<8x64xf32>
    %208 = arith.addf %184, %207 : vector<8x64xf32>
    %209 = vector.extract_strided_slice %35 {offsets = [8, 48], sizes = [8, 16], strides = [1, 1]} : vector<16x192xf32> to vector<8x16xf32>
    %210 = vector.extract_strided_slice %35 {offsets = [8, 112], sizes = [8, 16], strides = [1, 1]} : vector<16x192xf32> to vector<8x16xf32>
    %211 = vector.extract_strided_slice %35 {offsets = [8, 176], sizes = [8, 16], strides = [1, 1]} : vector<16x192xf32> to vector<8x16xf32>
    %212 = arith.truncf %209 : vector<8x16xf32> to vector<8x16xbf16>
    %213 = arith.truncf %210 : vector<8x16xf32> to vector<8x16xbf16>
    %cst_61 = arith.constant dense<0.000000e+00> : vector<8x8xf32>
    %214 = tpu.matmul %212, %213, %cst_61 {dimension_numbers = #tpu.dot_dimension_numbers<[1], [1], [0], [0], [0, 0, 1, 0], [], []>} : vector<8x16xbf16>, vector<8x16xbf16>, vector<8x8xf32> -> vector<8x8xf32>
    %215 = arith.addf %214, %38 : vector<8x8xf32>
    %cst_62 = arith.constant dense<0xFF800000> : vector<8xf32>
    %216 = vector.multi_reduction <maximumf>, %215, %cst_62 [1] : vector<8x8xf32> to vector<8xf32>
    %217 = vector.shape_cast %216 : vector<8xf32> to vector<8x1xf32>
    %218 = vector.broadcast %217 : vector<8x1xf32> to vector<8x8xf32>
    %219 = arith.subf %215, %218 : vector<8x8xf32>
    %220 = math.exp %219 : vector<8x8xf32>
    %cst_63 = arith.constant dense<0.000000e+00> : vector<8xf32>
    %221 = vector.multi_reduction <add>, %220, %cst_63 [1] : vector<8x8xf32> to vector<8xf32>
    %222 = vector.shape_cast %221 : vector<8xf32> to vector<8x1xf32>
    %223 = tpu.reciprocal %222 {approx = true} : vector<8x1xf32> -> vector<8x1xf32>
    %224 = vector.broadcast %223 : vector<8x1xf32> to vector<8x8xf32>
    %225 = arith.mulf %220, %224 : vector<8x8xf32>
    %226 = arith.truncf %225 : vector<8x8xf32> to vector<8x8xbf16>
    %227 = arith.truncf %211 : vector<8x16xf32> to vector<8x16xbf16>
    %cst_64 = arith.constant dense<0.000000e+00> : vector<8x16xf32>
    %228 = tpu.matmul %226, %227, %cst_64 {dimension_numbers = #tpu.dot_dimension_numbers<[1], [0], [0], [1], [0, 0, 1, 1], [], []>} : vector<8x8xbf16>, vector<8x16xbf16>, vector<8x16xf32> -> vector<8x16xf32>
    %229 = arith.truncf %228 : vector<8x16xf32> to vector<8x16xbf16>
    %230 = vector.extract_strided_slice %37 {offsets = [48, 0], sizes = [16, 64], strides = [1, 1]} : vector<64x64xbf16> to vector<16x64xbf16>
    %cst_65 = arith.constant dense<0.000000e+00> : vector<8x64xf32>
    %231 = tpu.matmul %229, %230, %cst_65 {dimension_numbers = #tpu.dot_dimension_numbers<[1], [0], [0], [1], [0, 0, 1, 1], [], []>} : vector<8x16xbf16>, vector<16x64xbf16>, vector<8x64xf32> -> vector<8x64xf32>
    %232 = arith.addf %208, %231 : vector<8x64xf32>
    %233 = tpu.concatenate %135, %232 in 0 : vector<8x64xf32>, vector<8x64xf32> -> vector<16x64xf32>
    %234 = arith.addf %3, %233 : vector<16x64xf32>
    %c0_66 = arith.constant 0 : index
    %c0_67 = arith.constant 0 : index
    %c0_68 = arith.constant 0 : index
    %235 = vector.load %arg9[%c0_66, %c0_67, %c0_68] : memref<1x1x64xf32, #tpu.memory_space<vmem>>, vector<1x1x64xf32>
    %236 = vector.shape_cast %235 : vector<1x1x64xf32> to vector<1x64xf32>
    %237 = vector.broadcast %236 : vector<1x64xf32> to vector<16x64xf32>
    %238 = arith.addf %234, %237 : vector<16x64xf32>
    %c0_69 = arith.constant 0 : index
    %c0_70 = arith.constant 0 : index
    %c0_71 = arith.constant 0 : index
    %239 = vector.load %arg10[%c0_69, %c0_70, %c0_71] : memref<1x1x64xf32, #tpu.memory_space<vmem>>, vector<1x1x64xf32>
    %240 = vector.shape_cast %239 : vector<1x1x64xf32> to vector<1x64xf32>
    %c0_72 = arith.constant 0 : index
    %c0_73 = arith.constant 0 : index
    %c0_74 = arith.constant 0 : index
    %241 = vector.load %arg11[%c0_72, %c0_73, %c0_74] : memref<1x1x64xf32, #tpu.memory_space<vmem>>, vector<1x1x64xf32>
    %242 = vector.shape_cast %241 : vector<1x1x64xf32> to vector<1x64xf32>
    %cst_75 = arith.constant dense<0.000000e+00> : vector<16xf32>
    %243 = vector.multi_reduction <add>, %238, %cst_75 [1] : vector<16x64xf32> to vector<16xf32>
    %244 = vector.shape_cast %243 : vector<16xf32> to vector<16x1xf32>
    %cst_76 = arith.constant 6.400000e+01 : f32
    %245 = vector.broadcast %cst_76 : f32 to vector<16x1xf32>
    %246 = arith.divf %244, %245 : vector<16x1xf32>
    %247 = vector.broadcast %246 : vector<16x1xf32> to vector<16x64xf32>
    %248 = arith.subf %238, %247 : vector<16x64xf32>
    %249 = arith.mulf %248, %248 : vector<16x64xf32>
    %cst_77 = arith.constant dense<0.000000e+00> : vector<16xf32>
    %250 = vector.multi_reduction <add>, %249, %cst_77 [1] : vector<16x64xf32> to vector<16xf32>
    %251 = vector.shape_cast %250 : vector<16xf32> to vector<16x1xf32>
    %cst_78 = arith.constant 6.400000e+01 : f32
    %252 = vector.broadcast %cst_78 : f32 to vector<16x1xf32>
    %253 = arith.divf %251, %252 : vector<16x1xf32>
    %cst_79 = arith.constant 9.99999974E-6 : f32
    %254 = vector.broadcast %cst_79 : f32 to vector<16x1xf32>
    %255 = arith.addf %253, %254 : vector<16x1xf32>
    %256 = math.rsqrt %255 : vector<16x1xf32>
    %257 = vector.broadcast %256 : vector<16x1xf32> to vector<16x64xf32>
    %258 = arith.mulf %248, %257 : vector<16x64xf32>
    %259 = vector.broadcast %240 : vector<1x64xf32> to vector<16x64xf32>
    %260 = arith.mulf %258, %259 : vector<16x64xf32>
    %261 = vector.broadcast %242 : vector<1x64xf32> to vector<16x64xf32>
    %262 = arith.addf %260, %261 : vector<16x64xf32>
    %263 = arith.truncf %262 : vector<16x64xf32> to vector<16x64xbf16>
    %c0_80 = arith.constant 0 : index
    %c0_81 = arith.constant 0 : index
    %c0_82 = arith.constant 0 : index
    %264 = vector.load %arg12[%c0_80, %c0_81, %c0_82] : memref<1x64x256xbf16, #tpu.memory_space<vmem>>, vector<1x64x256xbf16>
    %265 = vector.shape_cast %264 : vector<1x64x256xbf16> to vector<64x256xbf16>
    %cst_83 = arith.constant dense<0.000000e+00> : vector<16x256xf32>
    %266 = tpu.matmul %263, %265, %cst_83 {dimension_numbers = #tpu.dot_dimension_numbers<[1], [0], [0], [1], [0, 0, 1, 1], [], []>} : vector<16x64xbf16>, vector<64x256xbf16>, vector<16x256xf32> -> vector<16x256xf32>
    %c0_84 = arith.constant 0 : index
    %c0_85 = arith.constant 0 : index
    %c0_86 = arith.constant 0 : index
    %267 = vector.load %arg13[%c0_84, %c0_85, %c0_86] : memref<1x1x256xf32, #tpu.memory_space<vmem>>, vector<1x1x256xf32>
    %268 = vector.shape_cast %267 : vector<1x1x256xf32> to vector<1x256xf32>
    %269 = vector.broadcast %268 : vector<1x256xf32> to vector<16x256xf32>
    %270 = arith.addf %266, %269 : vector<16x256xf32>
    %cst_87 = arith.constant -1.702000e+00 : f32
    %271 = vector.broadcast %cst_87 : f32 to vector<16x256xf32>
    %272 = arith.mulf %271, %270 : vector<16x256xf32>
    %273 = math.exp %272 : vector<16x256xf32>
    %cst_88 = arith.constant 1.000000e+00 : f32
    %274 = vector.broadcast %cst_88 : f32 to vector<16x256xf32>
    %275 = arith.addf %274, %273 : vector<16x256xf32>
    %276 = tpu.reciprocal %275 {approx = true} : vector<16x256xf32> -> vector<16x256xf32>
    %277 = arith.mulf %270, %276 : vector<16x256xf32>
    %278 = arith.truncf %277 : vector<16x256xf32> to vector<16x256xbf16>
    %c0_89 = arith.constant 0 : index
    %c0_90 = arith.constant 0 : index
    %c0_91 = arith.constant 0 : index
    %279 = vector.load %arg14[%c0_89, %c0_90, %c0_91] : memref<1x256x64xbf16, #tpu.memory_space<vmem>>, vector<1x256x64xbf16>
    %280 = vector.shape_cast %279 : vector<1x256x64xbf16> to vector<256x64xbf16>
    %cst_92 = arith.constant dense<0.000000e+00> : vector<16x64xf32>
    %281 = tpu.matmul %278, %280, %cst_92 {dimension_numbers = #tpu.dot_dimension_numbers<[1], [0], [0], [1], [0, 0, 1, 1], [], []>} : vector<16x256xbf16>, vector<256x64xbf16>, vector<16x64xf32> -> vector<16x64xf32>
    %282 = arith.addf %238, %281 : vector<16x64xf32>
    %c0_93 = arith.constant 0 : index
    %c0_94 = arith.constant 0 : index
    %c0_95 = arith.constant 0 : index
    %283 = vector.load %arg15[%c0_93, %c0_94, %c0_95] : memref<1x1x64xf32, #tpu.memory_space<vmem>>, vector<1x1x64xf32>
    %284 = vector.shape_cast %283 : vector<1x1x64xf32> to vector<1x64xf32>
    %285 = vector.broadcast %284 : vector<1x64xf32> to vector<16x64xf32>
    %286 = arith.addf %282, %285 : vector<16x64xf32>
    %c0_96 = arith.constant 0 : index
    %c0_97 = arith.constant 0 : index
    %287 = vector.load %arg17[%c0_96, %c0_97] : memref<16x64xf32, #tpu.memory_space<vmem>>, vector<16x64xf32>
    tpu.vector_store %arg17[%c0_96, %c0_97], %286 {strides = array<i32>} : memref<16x64xf32, #tpu.memory_space<vmem>>, vector<16x64xf32>,
    %c1_i32 = arith.constant 1 : i32
    %288 = arith.cmpi eq, %arg1, %c1_i32 : i32
    %289 = arith.extui %288 : i1 to i32
    %c0_i32_98 = arith.constant 0 : i32
    %290 = arith.cmpi ne, %289, %c0_i32_98 : i32
    scf.if %290 {
      %c0_99 = arith.constant 0 : index
      %c0_100 = arith.constant 0 : index
      %291 = vector.load %arg16[%c0_99, %c0_100] : memref<16x64xf32, #tpu.memory_space<vmem>>, vector<16x64xf32>
      tpu.vector_store %arg16[%c0_99, %c0_100], %286 {strides = array<i32>} : memref<16x64xf32, #tpu.memory_space<vmem>>, vector<16x64xf32>,
    } else {
    }
    return
  }
  func.func @transform_0(%arg0: i32, %arg1: i32) -> (i32, i32) {
    %c0_i32 = arith.constant 0 : i32
    %c0_i32_0 = arith.constant 0 : i32
    return %arg0, %c0_i32 : i32, i32
  }
  func.func @transform_1(%arg0: i32, %arg1: i32) -> (i32, i32) {
    %c0_i32 = arith.constant 0 : i32
    %c0_i32_0 = arith.constant 0 : i32
    %c0_i32_1 = arith.constant 0 : i32
    return %c0_i32, %c0_i32_0 : i32, i32
  }
  func.func @transform_2(%arg0: i32, %arg1: i32) -> (i32, i32, i32) {
    %c0_i32 = arith.constant 0 : i32
    %c0_i32_0 = arith.constant 0 : i32
    %c0_i32_1 = arith.constant 0 : i32
    return %arg1, %c0_i32, %c0_i32_0 : i32, i32, i32
  }
  func.func @transform_3(%arg0: i32, %arg1: i32) -> (i32, i32, i32) {
    %c0_i32 = arith.constant 0 : i32
    %c0_i32_0 = arith.constant 0 : i32
    %c0_i32_1 = arith.constant 0 : i32
    return %arg1, %c0_i32, %c0_i32_0 : i32, i32, i32
  }
  func.func @transform_4(%arg0: i32, %arg1: i32) -> (i32, i32, i32) {
    %c0_i32 = arith.constant 0 : i32
    %c0_i32_0 = arith.constant 0 : i32
    %c0_i32_1 = arith.constant 0 : i32
    return %arg1, %c0_i32, %c0_i32_0 : i32, i32, i32
  }
  func.func @transform_5(%arg0: i32, %arg1: i32) -> (i32, i32, i32) {
    %c0_i32 = arith.constant 0 : i32
    %c0_i32_0 = arith.constant 0 : i32
    %c0_i32_1 = arith.constant 0 : i32
    return %arg1, %c0_i32, %c0_i32_0 : i32, i32, i32
  }
  func.func @transform_6(%arg0: i32, %arg1: i32) -> (i32, i32, i32) {
    %c0_i32 = arith.constant 0 : i32
    %c0_i32_0 = arith.constant 0 : i32
    %c0_i32_1 = arith.constant 0 : i32
    return %arg1, %c0_i32, %c0_i32_0 : i32, i32, i32
  }
  func.func @transform_7(%arg0: i32, %arg1: i32) -> (i32, i32, i32) {
    %c0_i32 = arith.constant 0 : i32
    %c0_i32_0 = arith.constant 0 : i32
    %c0_i32_1 = arith.constant 0 : i32
    return %arg1, %c0_i32, %c0_i32_0 : i32, i32, i32
  }
  func.func @transform_8(%arg0: i32, %arg1: i32) -> (i32, i32, i32) {
    %c0_i32 = arith.constant 0 : i32
    %c0_i32_0 = arith.constant 0 : i32
    %c0_i32_1 = arith.constant 0 : i32
    return %arg1, %c0_i32, %c0_i32_0 : i32, i32, i32
  }
  func.func @transform_9(%arg0: i32, %arg1: i32) -> (i32, i32, i32) {
    %c0_i32 = arith.constant 0 : i32
    %c0_i32_0 = arith.constant 0 : i32
    %c0_i32_1 = arith.constant 0 : i32
    return %arg1, %c0_i32, %c0_i32_0 : i32, i32, i32
  }
  func.func @transform_10(%arg0: i32, %arg1: i32) -> (i32, i32, i32) {
    %c0_i32 = arith.constant 0 : i32
    %c0_i32_0 = arith.constant 0 : i32
    %c0_i32_1 = arith.constant 0 : i32
    return %arg1, %c0_i32, %c0_i32_0 : i32, i32, i32
  }
  func.func @transform_11(%arg0: i32, %arg1: i32) -> (i32, i32, i32) {
    %c0_i32 = arith.constant 0 : i32
    %c0_i32_0 = arith.constant 0 : i32
    %c0_i32_1 = arith.constant 0 : i32
    return %arg1, %c0_i32, %c0_i32_0 : i32, i32, i32
  }
  func.func @transform_12(%arg0: i32, %arg1: i32) -> (i32, i32, i32) {
    %c0_i32 = arith.constant 0 : i32
    %c0_i32_0 = arith.constant 0 : i32
    %c0_i32_1 = arith.constant 0 : i32
    return %arg1, %c0_i32, %c0_i32_0 : i32, i32, i32
  }
  func.func @transform_13(%arg0: i32, %arg1: i32) -> (i32, i32, i32) {
    %c0_i32 = arith.constant 0 : i32
    %c0_i32_0 = arith.constant 0 : i32
    %c0_i32_1 = arith.constant 0 : i32
    return %arg1, %c0_i32, %c0_i32_0 : i32, i32, i32
  }
  func.func @transform_14(%arg0: i32, %arg1: i32) -> (i32, i32) {
    %c0_i32 = arith.constant 0 : i32
    %c0_i32_0 = arith.constant 0 : i32
    return %arg0, %c0_i32 : i32, i32
  }
}

</mosaic_0001>

<llo_original>
// kernel: tpu_custom_call.1
$region0: #{tpu_custom_call.1}
  #allocation0 [shape = 'u32[]', space=smem, size = 0x4, offset = 0x4, fixed_abs, tag = 'smem constant byte address 0x4 - core index']
  #allocation1 [shape = 'u32[144,128]{1,0:T(1,128)}', space=vmem, size = 0x12000, scoped, tag = 'internal scratch']
  #allocation2 [shape = 'f32[16,64]{1,0:T(8,128)}', space=vmem, size = 0x2000, scoped, tag = 'scratch operand']
  %s0 = inlined_call_operand.vmem [shape: f32[16,64], index: 0, kind: input, shape index: {}]
  %s1 = inlined_call_operand.vmem [shape: f32[8,8], index: 1, kind: input, shape index: {}]
  %s2 = inlined_call_operand.vmem [shape: f32[2,1,64], index: 2, kind: input, shape index: {}]
  %s3 = inlined_call_operand.vmem [shape: f32[2,1,64], index: 3, kind: input, shape index: {}]
  %s4 = inlined_call_operand.vmem [shape: bf16[2,64,192], index: 4, kind: input, shape index: {}]
  %s5 = inlined_call_operand.vmem [shape: f32[2,1,192], index: 5, kind: input, shape index: {}]
  %s6 = inlined_call_operand.vmem [shape: bf16[2,64,64], index: 6, kind: input, shape index: {}]
  %s7 = inlined_call_operand.vmem [shape: f32[2,1,64], index: 7, kind: input, shape index: {}]
  %s8 = inlined_call_operand.vmem [shape: f32[2,1,64], index: 8, kind: input, shape index: {}]
  %s9 = inlined_call_operand.vmem [shape: f32[2,1,64], index: 9, kind: input, shape index: {}]
  %s10 = inlined_call_operand.vmem [shape: bf16[2,64,256], index: 10, kind: input, shape index: {}]
  %s11 = inlined_call_operand.vmem [shape: f32[2,1,256], index: 11, kind: input, shape index: {}]
  %s12 = inlined_call_operand.vmem [shape: bf16[2,256,64], index: 12, kind: input, shape index: {}]
  %s13 = inlined_call_operand.vmem [shape: f32[2,1,64], index: 13, kind: input, shape index: {}]
  %s14 = inlined_call_operand.hbm [shape: f32[16,64], index: 14, kind: output, shape index: {}]
  %s15 = sld [smem:[#allocation0]]
  $region97: #{tpu_custom_call.1} parent=0
    _
  %s17 = ssub.s32 1, %s15
  %s18 = scalar_select 0, %s17, %s15
  $region1: #{tpu_custom_call.1} parent=0
    #allocation3 [shape = 'u8[8192]{0}', space=vmem, size = 0x2000, scoped, tag = 'output window, operand 0, single buffered']
    #allocation4 [shape = 's32[2]{0}', space=sflag, size = 0x8, scoped, tag = 'scoped memory for tpu_custom_call.1']
    %19 = vsyncpa [#allocation4], 0
    loop: start=0, step=1, limit=4
    $region2: #{tpu_custom_call.1} parent=1 // loop_pre_header
      _
    $region3: #{tpu_custom_call.1} parent=1 // loop_header
      %s21 = sphi 0, %s25
      %p22 = scmp.ge.s32.totalorder %s21, 4
      %s28 = sphi 0, %s40
      %s29 = sphi 0, %s36
      %s30 = sphi 0, %s28
      %s31 = sphi 0, %s29
      %s32 = sphi 0, %s30
      %s33 = sphi 0, %s31
      %s43 = sphi 0, %s45
      %s46 = sphi 0, %s43
      %s47 = sphi 0, %s46
      %s63 = sphi 0, %s47
      %s67 = sphi 0, %s67
      %s69 = sphi 0, %s67
      %s70 = sphi 0, %s69
      %s84 = sphi 0, %s70
      %s90 = sphi 0, %s92
      %s93 = sphi 0, %s90
      %s94 = sphi 0, %s93
      %s110 = sphi 0, %s94
      %s116 = sphi 0, %s118
      %s119 = sphi 0, %s116
      %s120 = sphi 0, %s119
      %s136 = sphi 0, %s120
      %s142 = sphi 0, %s144
      %s145 = sphi 0, %s142
      %s146 = sphi 0, %s145
      %s162 = sphi 0, %s146
      %s168 = sphi 0, %s170
      %s171 = sphi 0, %s168
      %s172 = sphi 0, %s171
      %s188 = sphi 0, %s172
      %s194 = sphi 0, %s196
      %s197 = sphi 0, %s194
      %s198 = sphi 0, %s197
      %s214 = sphi 0, %s198
      %s220 = sphi 0, %s222
      %s223 = sphi 0, %s220
      %s224 = sphi 0, %s223
      %s240 = sphi 0, %s224
      %s246 = sphi 0, %s248
      %s249 = sphi 0, %s246
      %s250 = sphi 0, %s249
      %s266 = sphi 0, %s250
      %s272 = sphi 0, %s274
      %s275 = sphi 0, %s272
      %s276 = sphi 0, %s275
      %s292 = sphi 0, %s276
      %s298 = sphi 0, %s300
      %s301 = sphi 0, %s298
      %s302 = sphi 0, %s301
      %s318 = sphi 0, %s302
      %s324 = sphi 0, %s326
      %s327 = sphi 0, %s324
      %s328 = sphi 0, %s327
      %s344 = sphi 0, %s328
      %s350 = sphi 0, %s352
      %s353 = sphi 0, %s350
      %s354 = sphi 0, %s353
      %s370 = sphi 0, %s354
      %s376 = sphi 0, %s378
      %s379 = sphi 0, %s376
      %s380 = sphi 0, %s379
      %s396 = sphi 0, %s380
      %s402 = sphi 0, %s404
      %s405 = sphi 0, %s402
      %s406 = sphi 0, %s405
      %s422 = sphi 0, %s406
    $region4: #{tpu_custom_call.1} parent=1 // loop_header_branch
      %24 = sbr.rel (%p22) target = $region8
    $region5: #{tpu_custom_call.1} parent=1 // loop_body
      %s26 = ssub.s32 %s21, 1
      %s27 = ssub.s32 %s21, 2
      %s34 = sadd.s32 1, %s29
      %p35 = scmp.ge.s32.totalorder %s34, 2
      %s36 = scalar_select %p35, 0, %s34
      %s37 = sadd.s32 1, %s28
      %s38 = scalar_select %p35, %s37, %s28
      %p39 = scmp.ge.s32.totalorder %s38, 1
      %s40 = scalar_select %p39, 0, %s38
      %s41 = ssub.s32 %s28, %s40
      %p42 = scmp.eq.s32.totalorder %s41, 0
      %s44 = sadd.s32 %s43, 1
      %s45 = scalar_select %p42, %s43, %s44
      %p48 = pneg %p42
      %p49 = scmp.eq.s32.totalorder %s21, 1
      %p50 = por %p48, %p49
      %p51 = scmp.ne.s32.totalorder %s43, %s46
      %p52 = scmp.eq.s32.totalorder %s21, 0
      %p53 = por %p51, %p52
      %p54 = scmp.ne.s32.totalorder %s43, %s46
      %p55 = scmp.eq.s32.totalorder %s26, 1
      %p56 = por %p54, %p55
      %p57 = scmp.ne.s32.totalorder %s46, %s47
      %p58 = scmp.eq.s32.totalorder %s26, 0
      %p59 = por %p57, %p58
      %p60 = scmp.ne.s32.totalorder %s46, %s47
      %p61 = scmp.eq.s32.totalorder %s27, 1
      %p62 = por %p60, %p61
      %p64 = scmp.ne.s32.totalorder %s47, %s63
      %p65 = scmp.eq.s32.totalorder %s27, 0
      %p66 = por %p64, %p65
      %s68 = sadd.s32 %s67, 1
      %p71 = scmp.eq.s32.totalorder %s21, 1
      %p72 = scmp.ne.s32.totalorder %s67, %s69
      %p73 = scmp.eq.s32.totalorder %s21, 0
      %p74 = por %p72, %p73
      %p75 = scmp.ne.s32.totalorder %s67, %s69
      %p76 = scmp.eq.s32.totalorder %s26, 1
      %p77 = por %p75, %p76
      %p78 = scmp.ne.s32.totalorder %s69, %s70
      %p79 = scmp.eq.s32.totalorder %s26, 0
      %p80 = por %p78, %p79
      %p81 = scmp.ne.s32.totalorder %s69, %s70
      %p82 = scmp.eq.s32.totalorder %s27, 1
      %p83 = por %p81, %p82
      %p85 = scmp.ne.s32.totalorder %s70, %s84
      %p86 = scmp.eq.s32.totalorder %s27, 0
      %p87 = por %p85, %p86
      %s88 = ssub.s32 %s29, %s36
      %p89 = scmp.eq.s32.totalorder %s88, 0
      %s91 = sadd.s32 %s90, 1
      %s92 = scalar_select %p89, %s90, %s91
      %p95 = pneg %p89
      %p96 = scmp.eq.s32.totalorder %s21, 1
      %p97 = por %p95, %p96
      %p98 = scmp.ne.s32.totalorder %s90, %s93
      %p99 = scmp.eq.s32.totalorder %s21, 0
      %p100 = por %p98, %p99
      %p101 = scmp.ne.s32.totalorder %s90, %s93
      %p102 = scmp.eq.s32.totalorder %s26, 1
      %p103 = por %p101, %p102
      %p104 = scmp.ne.s32.totalorder %s93, %s94
      %p105 = scmp.eq.s32.totalorder %s26, 0
      %p106 = por %p104, %p105
      %p107 = scmp.ne.s32.totalorder %s93, %s94
      %p108 = scmp.eq.s32.totalorder %s27, 1
      %p109 = por %p107, %p108
      %p111 = scmp.ne.s32.totalorder %s94, %s110
      %p112 = scmp.eq.s32.totalorder %s27, 0
      %p113 = por %p111, %p112
      %s114 = ssub.s32 %s29, %s36
      %p115 = scmp.eq.s32.totalorder %s114, 0
      %s117 = sadd.s32 %s116, 1
      %s118 = scalar_select %p115, %s116, %s117
      %p121 = pneg %p115
      %p122 = scmp.eq.s32.totalorder %s21, 1
      %p123 = por %p121, %p122
      %p124 = scmp.ne.s32.totalorder %s116, %s119
      %p125 = scmp.eq.s32.totalorder %s21, 0
      %p126 = por %p124, %p125
      %p127 = scmp.ne.s32.totalorder %s116, %s119
      %p128 = scmp.eq.s32.totalorder %s26, 1
      %p129 = por %p127, %p128
      %p130 = scmp.ne.s32.totalorder %s119, %s120
      %p131 = scmp.eq.s32.totalorder %s26, 0
      %p132 = por %p130, %p131
      %p133 = scmp.ne.s32.totalorder %s119, %s120
      %p134 = scmp.eq.s32.totalorder %s27, 1
      %p135 = por %p133, %p134
      %p137 = scmp.ne.s32.totalorder %s120, %s136
      %p138 = scmp.eq.s32.totalorder %s27, 0
      %p139 = por %p137, %p138
      %s140 = ssub.s32 %s29, %s36
      %p141 = scmp.eq.s32.totalorder %s140, 0
      %s143 = sadd.s32 %s142, 1
      %s144 = scalar_select %p141, %s142, %s143
      %p147 = pneg %p141
      %p148 = scmp.eq.s32.totalorder %s21, 1
      %p149 = por %p147, %p148
      %p150 = scmp.ne.s32.totalorder %s142, %s145
      %p151 = scmp.eq.s32.totalorder %s21, 0
      %p152 = por %p150, %p151
      %p153 = scmp.ne.s32.totalorder %s142, %s145
      %p154 = scmp.eq.s32.totalorder %s26, 1
      %p155 = por %p153, %p154
      %p156 = scmp.ne.s32.totalorder %s145, %s146
      %p157 = scmp.eq.s32.totalorder %s26, 0
      %p158 = por %p156, %p157
      %p159 = scmp.ne.s32.totalorder %s145, %s146
      %p160 = scmp.eq.s32.totalorder %s27, 1
      %p161 = por %p159, %p160
      %p163 = scmp.ne.s32.totalorder %s146, %s162
      %p164 = scmp.eq.s32.totalorder %s27, 0
      %p165 = por %p163, %p164
      %s166 = ssub.s32 %s29, %s36
      %p167 = scmp.eq.s32.totalorder %s166, 0
      %s169 = sadd.s32 %s168, 1
      %s170 = scalar_select %p167, %s168, %s169
      %p173 = pneg %p167
      %p174 = scmp.eq.s32.totalorder %s21, 1
      %p175 = por %p173, %p174
      %p176 = scmp.ne.s32.totalorder %s168, %s171
      %p177 = scmp.eq.s32.totalorder %s21, 0
      %p178 = por %p176, %p177
      %p179 = scmp.ne.s32.totalorder %s168, %s171
      %p180 = scmp.eq.s32.totalorder %s26, 1
      %p181 = por %p179, %p180
      %p182 = scmp.ne.s32.totalorder %s171, %s172
      %p183 = scmp.eq.s32.totalorder %s26, 0
      %p184 = por %p182, %p183
      %p185 = scmp.ne.s32.totalorder %s171, %s172
      %p186 = scmp.eq.s32.totalorder %s27, 1
      %p187 = por %p185, %p186
      %p189 = scmp.ne.s32.totalorder %s172, %s188
      %p190 = scmp.eq.s32.totalorder %s27, 0
      %p191 = por %p189, %p190
      %s192 = ssub.s32 %s29, %s36
      %p193 = scmp.eq.s32.totalorder %s192, 0
      %s195 = sadd.s32 %s194, 1
      %s196 = scalar_select %p193, %s194, %s195
      %p199 = pneg %p193
      %p200 = scmp.eq.s32.totalorder %s21, 1
      %p201 = por %p199, %p200
      %p202 = scmp.ne.s32.totalorder %s194, %s197
      %p203 = scmp.eq.s32.totalorder %s21, 0
      %p204 = por %p202, %p203
      %p205 = scmp.ne.s32.totalorder %s194, %s197
      %p206 = scmp.eq.s32.totalorder %s26, 1
      %p207 = por %p205, %p206
      %p208 = scmp.ne.s32.totalorder %s197, %s198
      %p209 = scmp.eq.s32.totalorder %s26, 0
      %p210 = por %p208, %p209
      %p211 = scmp.ne.s32.totalorder %s197, %s198
      %p212 = scmp.eq.s32.totalorder %s27, 1
      %p213 = por %p211, %p212
      %p215 = scmp.ne.s32.totalorder %s198, %s214
      %p216 = scmp.eq.s32.totalorder %s27, 0
      %p217 = por %p215, %p216
      %s218 = ssub.s32 %s29, %s36
      %p219 = scmp.eq.s32.totalorder %s218, 0
      %s221 = sadd.s32 %s220, 1
      %s222 = scalar_select %p219, %s220, %s221
      %p225 = pneg %p219
      %p226 = scmp.eq.s32.totalorder %s21, 1
      %p227 = por %p225, %p226
      %p228 = scmp.ne.s32.totalorder %s220, %s223
      %p229 = scmp.eq.s32.totalorder %s21, 0
      %p230 = por %p228, %p229
      %p231 = scmp.ne.s32.totalorder %s220, %s223
      %p232 = scmp.eq.s32.totalorder %s26, 1
      %p233 = por %p231, %p232
      %p234 = scmp.ne.s32.totalorder %s223, %s224
      %p235 = scmp.eq.s32.totalorder %s26, 0
      %p236 = por %p234, %p235
      %p237 = scmp.ne.s32.totalorder %s223, %s224
      %p238 = scmp.eq.s32.totalorder %s27, 1
      %p239 = por %p237, %p238
      %p241 = scmp.ne.s32.totalorder %s224, %s240
      %p242 = scmp.eq.s32.totalorder %s27, 0
      %p243 = por %p241, %p242
      %s244 = ssub.s32 %s29, %s36
      %p245 = scmp.eq.s32.totalorder %s244, 0
      %s247 = sadd.s32 %s246, 1
      %s248 = scalar_select %p245, %s246, %s247
      %p251 = pneg %p245
      %p252 = scmp.eq.s32.totalorder %s21, 1
      %p253 = por %p251, %p252
      %p254 = scmp.ne.s32.totalorder %s246, %s249
      %p255 = scmp.eq.s32.totalorder %s21, 0
      %p256 = por %p254, %p255
      %p257 = scmp.ne.s32.totalorder %s246, %s249
      %p258 = scmp.eq.s32.totalorder %s26, 1
      %p259 = por %p257, %p258
      %p260 = scmp.ne.s32.totalorder %s249, %s250
      %p261 = scmp.eq.s32.totalorder %s26, 0
      %p262 = por %p260, %p261
      %p263 = scmp.ne.s32.totalorder %s249, %s250
      %p264 = scmp.eq.s32.totalorder %s27, 1
      %p265 = por %p263, %p264
      %p267 = scmp.ne.s32.totalorder %s250, %s266
      %p268 = scmp.eq.s32.totalorder %s27, 0
      %p269 = por %p267, %p268
      %s270 = ssub.s32 %s29, %s36
      %p271 = scmp.eq.s32.totalorder %s270, 0
      %s273 = sadd.s32 %s272, 1
      %s274 = scalar_select %p271, %s272, %s273
      %p277 = pneg %p271
      %p278 = scmp.eq.s32.totalorder %s21, 1
      %p279 = por %p277, %p278
      %p280 = scmp.ne.s32.totalorder %s272, %s275
      %p281 = scmp.eq.s32.totalorder %s21, 0
      %p282 = por %p280, %p281
      %p283 = scmp.ne.s32.totalorder %s272, %s275
      %p284 = scmp.eq.s32.totalorder %s26, 1
      %p285 = por %p283, %p284
      %p286 = scmp.ne.s32.totalorder %s275, %s276
      %p287 = scmp.eq.s32.totalorder %s26, 0
      %p288 = por %p286, %p287
      %p289 = scmp.ne.s32.totalorder %s275, %s276
      %p290 = scmp.eq.s32.totalorder %s27, 1
      %p291 = por %p289, %p290
      %p293 = scmp.ne.s32.totalorder %s276, %s292
      %p294 = scmp.eq.s32.totalorder %s27, 0
      %p295 = por %p293, %p294
      %s296 = ssub.s32 %s29, %s36
      %p297 = scmp.eq.s32.totalorder %s296, 0
      %s299 = sadd.s32 %s298, 1
      %s300 = scalar_select %p297, %s298, %s299
      %p303 = pneg %p297
      %p304 = scmp.eq.s32.totalorder %s21, 1
      %p305 = por %p303, %p304
      %p306 = scmp.ne.s32.totalorder %s298, %s301
      %p307 = scmp.eq.s32.totalorder %s21, 0
      %p308 = por %p306, %p307
      %p309 = scmp.ne.s32.totalorder %s298, %s301
      %p310 = scmp.eq.s32.totalorder %s26, 1
      %p311 = por %p309, %p310
      %p312 = scmp.ne.s32.totalorder %s301, %s302
      %p313 = scmp.eq.s32.totalorder %s26, 0
      %p314 = por %p312, %p313
      %p315 = scmp.ne.s32.totalorder %s301, %s302
      %p316 = scmp.eq.s32.totalorder %s27, 1
      %p317 = por %p315, %p316
      %p319 = scmp.ne.s32.totalorder %s302, %s318
      %p320 = scmp.eq.s32.totalorder %s27, 0
      %p321 = por %p319, %p320
      %s322 = ssub.s32 %s29, %s36
      %p323 = scmp.eq.s32.totalorder %s322, 0
      %s325 = sadd.s32 %s324, 1
      %s326 = scalar_select %p323, %s324, %s325
      %p329 = pneg %p323
      %p330 = scmp.eq.s32.totalorder %s21, 1
      %p331 = por %p329, %p330
      %p332 = scmp.ne.s32.totalorder %s324, %s327
      %p333 = scmp.eq.s32.totalorder %s21, 0
      %p334 = por %p332, %p333
      %p335 = scmp.ne.s32.totalorder %s324, %s327
      %p336 = scmp.eq.s32.totalorder %s26, 1
      %p337 = por %p335, %p336
      %p338 = scmp.ne.s32.totalorder %s327, %s328
      %p339 = scmp.eq.s32.totalorder %s26, 0
      %p340 = por %p338, %p339
      %p341 = scmp.ne.s32.totalorder %s327, %s328
      %p342 = scmp.eq.s32.totalorder %s27, 1
      %p343 = por %p341, %p342
      %p345 = scmp.ne.s32.totalorder %s328, %s344
      %p346 = scmp.eq.s32.totalorder %s27, 0
      %p347 = por %p345, %p346
      %s348 = ssub.s32 %s29, %s36
      %p349 = scmp.eq.s32.totalorder %s348, 0
      %s351 = sadd.s32 %s350, 1
      %s352 = scalar_select %p349, %s350, %s351
      %p355 = pneg %p349
      %p356 = scmp.eq.s32.totalorder %s21, 1
      %p357 = por %p355, %p356
      %p358 = scmp.ne.s32.totalorder %s350, %s353
      %p359 = scmp.eq.s32.totalorder %s21, 0
      %p360 = por %p358, %p359
      %p361 = scmp.ne.s32.totalorder %s350, %s353
      %p362 = scmp.eq.s32.totalorder %s26, 1
      %p363 = por %p361, %p362
      %p364 = scmp.ne.s32.totalorder %s353, %s354
      %p365 = scmp.eq.s32.totalorder %s26, 0
      %p366 = por %p364, %p365
      %p367 = scmp.ne.s32.totalorder %s353, %s354
      %p368 = scmp.eq.s32.totalorder %s27, 1
      %p369 = por %p367, %p368
      %p371 = scmp.ne.s32.totalorder %s354, %s370
      %p372 = scmp.eq.s32.totalorder %s27, 0
      %p373 = por %p371, %p372
      %s374 = ssub.s32 %s29, %s36
      %p375 = scmp.eq.s32.totalorder %s374, 0
      %s377 = sadd.s32 %s376, 1
      %s378 = scalar_select %p375, %s376, %s377
      %p381 = pneg %p375
      %p382 = scmp.eq.s32.totalorder %s21, 1
      %p383 = por %p381, %p382
      %p384 = scmp.ne.s32.totalorder %s376, %s379
      %p385 = scmp.eq.s32.totalorder %s21, 0
      %p386 = por %p384, %p385
      %p387 = scmp.ne.s32.totalorder %s376, %s379
      %p388 = scmp.eq.s32.totalorder %s26, 1
      %p389 = por %p387, %p388
      %p390 = scmp.ne.s32.totalorder %s379, %s380
      %p391 = scmp.eq.s32.totalorder %s26, 0
      %p392 = por %p390, %p391
      %p393 = scmp.ne.s32.totalorder %s379, %s380
      %p394 = scmp.eq.s32.totalorder %s27, 1
      %p395 = por %p393, %p394
      %p397 = scmp.ne.s32.totalorder %s380, %s396
      %p398 = scmp.eq.s32.totalorder %s27, 0
      %p399 = por %p397, %p398
      %s400 = ssub.s32 %s28, %s40
      %p401 = scmp.eq.s32.totalorder %s400, 0
      %s403 = sadd.s32 %s402, 1
      %s404 = scalar_select %p401, %s402, %s403
      %p407 = pneg %p401
      %p408 = scmp.eq.s32.totalorder %s21, 1
      %p409 = por %p407, %p408
      %p410 = scmp.ne.s32.totalorder %s402, %s405
      %p411 = scmp.eq.s32.totalorder %s21, 0
      %p412 = por %p410, %p411
      %p413 = scmp.ne.s32.totalorder %s402, %s405
      %p414 = scmp.eq.s32.totalorder %s26, 1
      %p415 = por %p413, %p414
      %p416 = scmp.ne.s32.totalorder %s405, %s406
      %p417 = scmp.eq.s32.totalorder %s26, 0
      %p418 = por %p416, %p417
      %p419 = scmp.ne.s32.totalorder %s405, %s406
      %p420 = scmp.eq.s32.totalorder %s27, 1
      %p421 = por %p419, %p420
      %p423 = scmp.ne.s32.totalorder %s406, %s422
      %p424 = scmp.eq.s32.totalorder %s27, 0
      %p425 = por %p423, %p424
      %p426 = scmp.le.s32.totalorder 1, %s21
      %p427 = scmp.lt.s32.totalorder %s21, 3
      %p428 = pnand %p426, %p427
      %p429 = pneg %p428
      // Predicated region
      $region9: #{tpu_custom_call.1} parent=5 // pred_check
        _
      $region10: #{tpu_custom_call.1} parent=5 // pred_check_branch
        %431 = sbr.rel (%p428) target = $region12
      $region11: #{tpu_custom_call.1} parent=5 // pred_region
        %s432 = ssub.s32 %s21, 1
        // Predicated region
        $region13: #{tpu_custom_call.1} parent=11 // pred_check
          %p433 = pneg %p59
        $region14: #{tpu_custom_call.1} parent=11 // pred_check_branch
          %435 = sbr.rel (%p433) target = $region16
        $region15: #{tpu_custom_call.1} parent=11 // pred_region
          %s436 = smul.u32 2, %s30
          %p437 = scmp.lt.s32.totalorder %s436, 1
          %s438 = scalar_select %p437, %s436, 1
          %s439 = smul.addr %s438, 8
          %s440 = scalar_lea.vmem %s0, %s439
          %s441 = smul.u32 2, %s30
        $region16: #{tpu_custom_call.1} parent=11 // pred_fallthru
          _
        // Predicated region
        $region17: #{tpu_custom_call.1} parent=11 // pred_check
          %p442 = pneg %p80
        $region18: #{tpu_custom_call.1} parent=11 // pred_check_branch
          %444 = sbr.rel (%p442) target = $region20
        $region19: #{tpu_custom_call.1} parent=11 // pred_region
          _
        $region20: #{tpu_custom_call.1} parent=11 // pred_fallthru
          _
      $region12: #{tpu_custom_call.1} parent=5 // pred_fallthru
        _
      %p445 = scmp.lt.s32.totalorder %s21, 2
      // Predicated region
      $region21: #{tpu_custom_call.1} parent=5 // pred_check
        %p446 = pneg %p445
      $region22: #{tpu_custom_call.1} parent=5 // pred_check_branch
        %448 = sbr.rel (%p446) target = $region24
      $region23: #{tpu_custom_call.1} parent=5 // pred_region
        // Predicated region
        $region25: #{tpu_custom_call.1} parent=23 // pred_check
          %p449 = pneg %p100
        $region26: #{tpu_custom_call.1} parent=23 // pred_check_branch
          %451 = sbr.rel (%p449) target = $region28
        $region27: #{tpu_custom_call.1} parent=23 // pred_region
          %p452 = scmp.lt.s32.totalorder %s29, 1
          %s453 = scalar_select %p452, %s29, 1
          %s454 = scalar_lea.vmem %s2, %s453
        $region28: #{tpu_custom_call.1} parent=23 // pred_fallthru
          _
        // Predicated region
        $region29: #{tpu_custom_call.1} parent=23 // pred_check
          %p455 = pneg %p126
        $region30: #{tpu_custom_call.1} parent=23 // pred_check_branch
          %457 = sbr.rel (%p455) target = $region32
        $region31: #{tpu_custom_call.1} parent=23 // pred_region
          %p458 = scmp.lt.s32.totalorder %s29, 1
          %s459 = scalar_select %p458, %s29, 1
          %s460 = scalar_lea.vmem %s3, %s459
        $region32: #{tpu_custom_call.1} parent=23 // pred_fallthru
          _
        // Predicated region
        $region33: #{tpu_custom_call.1} parent=23 // pred_check
          %p461 = pneg %p152
        $region34: #{tpu_custom_call.1} parent=23 // pred_check_branch
          %463 = sbr.rel (%p461) target = $region36
        $region35: #{tpu_custom_call.1} parent=23 // pred_region
          %p464 = scmp.lt.s32.totalorder %s29, 1
          %s465 = scalar_select %p464, %s29, 1
          %s466 = smul.addr %s465, 16
          %s467 = smul.addr %s466, 4
          %s468 = scalar_lea.vmem %s4, %s467
        $region36: #{tpu_custom_call.1} parent=23 // pred_fallthru
          _
        // Predicated region
        $region37: #{tpu_custom_call.1} parent=23 // pred_check
          %p469 = pneg %p178
        $region38: #{tpu_custom_call.1} parent=23 // pred_check_branch
          %471 = sbr.rel (%p469) target = $region40
        $region39: #{tpu_custom_call.1} parent=23 // pred_region
          %p472 = scmp.lt.s32.totalorder %s29, 1
          %s473 = scalar_select %p472, %s29, 1
          %s474 = smul.addr %s473, 2
          %s475 = scalar_lea.vmem %s5, %s474
        $region40: #{tpu_custom_call.1} parent=23 // pred_fallthru
          _
        // Predicated region
        $region41: #{tpu_custom_call.1} parent=23 // pred_check
          %p476 = pneg %p204
        $region42: #{tpu_custom_call.1} parent=23 // pred_check_branch
          %478 = sbr.rel (%p476) target = $region44
        $region43: #{tpu_custom_call.1} parent=23 // pred_region
          %p479 = scmp.lt.s32.totalorder %s29, 1
          %s480 = scalar_select %p479, %s29, 1
          %s481 = smul.addr %s480, 8
          %s482 = smul.addr %s481, 4
          %s483 = scalar_lea.vmem %s6, %s482
        $region44: #{tpu_custom_call.1} parent=23 // pred_fallthru
          _
        // Predicated region
        $region45: #{tpu_custom_call.1} parent=23 // pred_check
          %p484 = pneg %p230
        $region46: #{tpu_custom_call.1} parent=23 // pred_check_branch
          %486 = sbr.rel (%p484) target = $region48
        $region47: #{tpu_custom_call.1} parent=23 // pred_region
          %p487 = scmp.lt.s32.totalorder %s29, 1
          %s488 = scalar_select %p487, %s29, 1
          %s489 = scalar_lea.vmem %s7, %s488
        $region48: #{tpu_custom_call.1} parent=23 // pred_fallthru
          _
        // Predicated region
        $region49: #{tpu_custom_call.1} parent=23 // pred_check
          %p490 = pneg %p256
        $region50: #{tpu_custom_call.1} parent=23 // pred_check_branch
          %492 = sbr.rel (%p490) target = $region52
        $region51: #{tpu_custom_call.1} parent=23 // pred_region
          %p493 = scmp.lt.s32.totalorder %s29, 1
          %s494 = scalar_select %p493, %s29, 1
          %s495 = scalar_lea.vmem %s8, %s494
        $region52: #{tpu_custom_call.1} parent=23 // pred_fallthru
          _
        // Predicated region
        $region53: #{tpu_custom_call.1} parent=23 // pred_check
          %p496 = pneg %p282
        $region54: #{tpu_custom_call.1} parent=23 // pred_check_branch
          %498 = sbr.rel (%p496) target = $region56
        $region55: #{tpu_custom_call.1} parent=23 // pred_region
          %p499 = scmp.lt.s32.totalorder %s29, 1
          %s500 = scalar_select %p499, %s29, 1
          %s501 = scalar_lea.vmem %s9, %s500
        $region56: #{tpu_custom_call.1} parent=23 // pred_fallthru
          _
        // Predicated region
        $region57: #{tpu_custom_call.1} parent=23 // pred_check
          %p502 = pneg %p308
        $region58: #{tpu_custom_call.1} parent=23 // pred_check_branch
          %504 = sbr.rel (%p502) target = $region60
        $region59: #{tpu_custom_call.1} parent=23 // pred_region
          %p505 = scmp.lt.s32.totalorder %s29, 1
          %s506 = scalar_select %p505, %s29, 1
          %s507 = smul.addr %s506, 16
          %s508 = smul.addr %s507, 4
          %s509 = scalar_lea.vmem %s10, %s508
        $region60: #{tpu_custom_call.1} parent=23 // pred_fallthru
          _
        // Predicated region
        $region61: #{tpu_custom_call.1} parent=23 // pred_check
          %p510 = pneg %p334
        $region62: #{tpu_custom_call.1} parent=23 // pred_check_branch
          %512 = sbr.rel (%p510) target = $region64
        $region63: #{tpu_custom_call.1} parent=23 // pred_region
          %p513 = scmp.lt.s32.totalorder %s29, 1
          %s514 = scalar_select %p513, %s29, 1
          %s515 = smul.addr %s514, 2
          %s516 = scalar_lea.vmem %s11, %s515
        $region64: #{tpu_custom_call.1} parent=23 // pred_fallthru
          _
        // Predicated region
        $region65: #{tpu_custom_call.1} parent=23 // pred_check
          %p517 = pneg %p360
        $region66: #{tpu_custom_call.1} parent=23 // pred_check_branch
          %519 = sbr.rel (%p517) target = $region68
        $region67: #{tpu_custom_call.1} parent=23 // pred_region
          %p520 = scmp.lt.s32.totalorder %s29, 1
          %s521 = scalar_select %p520, %s29, 1
          %s522 = smul.addr %s521, 32
          %s523 = smul.addr %s522, 4
          %s524 = scalar_lea.vmem %s12, %s523
        $region68: #{tpu_custom_call.1} parent=23 // pred_fallthru
          _
        // Predicated region
        $region69: #{tpu_custom_call.1} parent=23 // pred_check
          %p525 = pneg %p386
        $region70: #{tpu_custom_call.1} parent=23 // pred_check_branch
          %527 = sbr.rel (%p525) target = $region72
        $region71: #{tpu_custom_call.1} parent=23 // pred_region
          %p528 = scmp.lt.s32.totalorder %s29, 1
          %s529 = scalar_select %p528, %s29, 1
          %s530 = scalar_lea.vmem %s13, %s529
        $region72: #{tpu_custom_call.1} parent=23 // pred_fallthru
          _
      $region24: #{tpu_custom_call.1} parent=5 // pred_fallthru
        _
      %p531 = scmp.le.s32.totalorder 1, %s21
      %p532 = scmp.lt.s32.totalorder %s21, 3
      %p533 = pnand %p531, %p532
      %p534 = pneg %p533
      // Predicated region
      $region73: #{tpu_custom_call.1} parent=5 // pred_check
        _
      $region74: #{tpu_custom_call.1} parent=5 // pred_check_branch
        %536 = sbr.rel (%p533) target = $region76
      $region75: #{tpu_custom_call.1} parent=5 // pred_region
        %s537 = ssub.s32 %s21, 1
        %s538 = smul.u32 2, %s30
        %p539 = scmp.lt.s32.totalorder %s538, 1
        %s540 = scalar_select %p539, %s538, 1
        %s541 = smul.addr %s540, 8
        %s542 = scalar_lea.vmem %s0, %s541
        %p543 = pneg %p59
        %p544 = pneg %p56
        %p545 = pneg %p80
        %p546 = pneg %p77
        %p547 = scmp.lt.s32.totalorder %s31, 1
        %s548 = scalar_select %p547, %s31, 1
        %s549 = scalar_lea.vmem %s2, %s548
        %p550 = pneg %p106
        %p551 = pneg %p103
        %p552 = scmp.lt.s32.totalorder %s31, 1
        %s553 = scalar_select %p552, %s31, 1
        %s554 = scalar_lea.vmem %s3, %s553
        %p555 = pneg %p132
        %p556 = pneg %p129
        %p557 = scmp.lt.s32.totalorder %s31, 1
        %s558 = scalar_select %p557, %s31, 1
        %s559 = smul.addr %s558, 16
        %s560 = smul.addr %s559, 4
        %s561 = scalar_lea.vmem %s4, %s560
        %p562 = pneg %p158
        %p563 = pneg %p155
        %p564 = scmp.lt.s32.totalorder %s31, 1
        %s565 = scalar_select %p564, %s31, 1
        %s566 = smul.addr %s565, 2
        %s567 = scalar_lea.vmem %s5, %s566
        %p568 = pneg %p184
        %p569 = pneg %p181
        %p570 = scmp.lt.s32.totalorder %s31, 1
        %s571 = scalar_select %p570, %s31, 1
        %s572 = smul.addr %s571, 8
        %s573 = smul.addr %s572, 4
        %s574 = scalar_lea.vmem %s6, %s573
        %p575 = pneg %p210
        %p576 = pneg %p207
        %p577 = scmp.lt.s32.totalorder %s31, 1
        %s578 = scalar_select %p577, %s31, 1
        %s579 = scalar_lea.vmem %s7, %s578
        %p580 = pneg %p236
        %p581 = pneg %p233
        %p582 = scmp.lt.s32.totalorder %s31, 1
        %s583 = scalar_select %p582, %s31, 1
        %s584 = scalar_lea.vmem %s8, %s583
        %p585 = pneg %p262
        %p586 = pneg %p259
        %p587 = scmp.lt.s32.totalorder %s31, 1
        %s588 = scalar_select %p587, %s31, 1
        %s589 = scalar_lea.vmem %s9, %s588
        %p590 = pneg %p288
        %p591 = pneg %p285
        %p592 = scmp.lt.s32.totalorder %s31, 1
        %s593 = scalar_select %p592, %s31, 1
        %s594 = smul.addr %s593, 16
        %s595 = smul.addr %s594, 4
        %s596 = scalar_lea.vmem %s10, %s595
        %p597 = pneg %p314
        %p598 = pneg %p311
        %p599 = scmp.lt.s32.totalorder %s31, 1
        %s600 = scalar_select %p599, %s31, 1
        %s601 = smul.addr %s600, 2
        %s602 = scalar_lea.vmem %s11, %s601
        %p603 = pneg %p340
        %p604 = pneg %p337
        %p605 = scmp.lt.s32.totalorder %s31, 1
        %s606 = scalar_select %p605, %s31, 1
        %s607 = smul.addr %s606, 32
        %s608 = smul.addr %s607, 4
        %s609 = scalar_lea.vmem %s12, %s608
        %p610 = pneg %p366
        %p611 = pneg %p363
        %p612 = scmp.lt.s32.totalorder %s31, 1
        %s613 = scalar_select %p612, %s31, 1
        %s614 = scalar_lea.vmem %s13, %s613
        %p615 = pneg %p392
        %p616 = pneg %p389
        %p617 = pneg %p418
        %p618 = pneg %p415
        %s619 = smul.u32 2, %s30
        %p620 = scmp.lt.s32.totalorder %s619, 1
        %s621 = scalar_select %p620, %s619, 1
        %s622 = smul.addr %s621, 8
        %s623 = scalar_lea.vmem %s0, %s622
        %s624 = smul.u32 2, %s30
        %p625 = scmp.lt.s32.totalorder %s31, 1
        %s626 = scalar_select %p625, %s31, 1
        %s627 = scalar_lea.vmem %s2, %s626
        %p628 = scmp.lt.s32.totalorder %s31, 1
        %s629 = scalar_select %p628, %s31, 1
        %s630 = scalar_lea.vmem %s3, %s629
        %p631 = scmp.lt.s32.totalorder %s31, 1
        %s632 = scalar_select %p631, %s31, 1
        %s633 = smul.addr %s632, 16
        %s634 = smul.addr %s633, 4
        %s635 = scalar_lea.vmem %s4, %s634
        %p636 = scmp.lt.s32.totalorder %s31, 1
        %s637 = scalar_select %p636, %s31, 1
        %s638 = smul.addr %s637, 2
        %s639 = scalar_lea.vmem %s5, %s638
        %p640 = scmp.lt.s32.totalorder %s31, 1
        %s641 = scalar_select %p640, %s31, 1
        %s642 = smul.addr %s641, 8
        %s643 = smul.addr %s642, 4
        %s644 = scalar_lea.vmem %s6, %s643
        %p645 = scmp.lt.s32.totalorder %s31, 1
        %s646 = scalar_select %p645, %s31, 1
        %s647 = scalar_lea.vmem %s7, %s646
        %p648 = scmp.lt.s32.totalorder %s31, 1
        %s649 = scalar_select %p648, %s31, 1
        %s650 = scalar_lea.vmem %s8, %s649
        %p651 = scmp.lt.s32.totalorder %s31, 1
        %s652 = scalar_select %p651, %s31, 1
        %s653 = scalar_lea.vmem %s9, %s652
        %p654 = scmp.lt.s32.totalorder %s31, 1
        %s655 = scalar_select %p654, %s31, 1
        %s656 = smul.addr %s655, 16
        %s657 = smul.addr %s656, 4
        %s658 = scalar_lea.vmem %s10, %s657
        %p659 = scmp.lt.s32.totalorder %s31, 1
        %s660 = scalar_select %p659, %s31, 1
        %s661 = smul.addr %s660, 2
        %s662 = scalar_lea.vmem %s11, %s661
        %p663 = scmp.lt.s32.totalorder %s31, 1
        %s664 = scalar_select %p663, %s31, 1
        %s665 = smul.addr %s664, 32
        %s666 = smul.addr %s665, 4
        %s667 = scalar_lea.vmem %s12, %s666
        %p668 = scmp.lt.s32.totalorder %s31, 1
        %s669 = scalar_select %p668, %s31, 1
        %s670 = scalar_lea.vmem %s13, %s669
        %s671 = smul.u32 2, %s30
        %p673 = scmp.eq.s32.totalorder %s31, 0
        // Predicated region
        $region77: #{tpu_custom_call.1} parent=75 // pred_check
          %p674 = pneg %p673
        $region78: #{tpu_custom_call.1} parent=75 // pred_check_branch
          %676 = sbr.rel (%p674) target = $region80
        $region79: #{tpu_custom_call.1} parent=75 // pred_region
          %v677 = vld [vmem:[%s623] sm:$0xff]
          %v678 = vld [vmem:[%s623 + $0x8] sm:$0xff]
          %vm679 = vcmask 523264
          %680 = vst.msk [vmem:[#allocation2] sm:$0xff] %vm679, %v677
          %681 = vst.msk [vmem:[#allocation2 + $0x8] sm:$0xff] %vm679, %v678
        $region80: #{tpu_custom_call.1} parent=75 // pred_fallthru
          _
        %v682 = vld [vmem:[#allocation2] sm:$0xff]
        %v683 = vld [vmem:[#allocation2 + $0x8] sm:$0xff]
        %v684 = vld [vmem:[%s627] sm:$0x1]
        %v685 = vld [vmem:[%s630] sm:$0x1]
        %vm686 = vcmask 523264
        %v687 = vsel %vm686, %v682, 0.0
        %688 = vadd.xlane.f32.xlu0 %v687
        %v689 = vpop.xlane.xlu0 %688
        %v690 = vsel %vm686, %v683, 0.0
        %691 = vadd.xlane.f32.xlu0 %v690
        %v692 = vpop.xlane.xlu0 %691
        %v693 = vrcp.pop 64.0
        %v694 = vmul.f32 %v689, %v693
        %v695 = vmul.f32 %v692, %v693
        %v696 = vsub.f32 %v682, %v694
        %v697 = vsub.f32 %v683, %v695
        %v698 = vmul.f32 %v696, %v696
        %v699 = vmul.f32 %v697, %v697
        %v700 = vsel %vm686, %v698, 0.0
        %701 = vadd.xlane.f32.xlu0 %v700
        %v702 = vpop.xlane.xlu0 %701
        %v703 = vsel %vm686, %v699, 0.0
        %704 = vadd.xlane.f32.xlu0 %v703
        %v705 = vpop.xlane.xlu0 %704
        %v706 = vmul.f32 %v702, %v693
        %v707 = vmul.f32 %v705, %v693
        %v708 = vadd.f32 %v706, 1e-05
        %v709 = vadd.f32 %v707, 1e-05
        %v710 = vrsqrt.pop %v708
        %v711 = vrsqrt.pop %v709
        %v712 = vmul.f32 %v696, %v710
        %v713 = vmul.f32 %v697, %v711
        %v715 = vlaneseq
        %v716 = vshrl.u32 %v715, 7
        %v717 = vsub.s32 0, %v716
        %v718 = vrot.slane %v684, %v717
        %v720 = vmul.f32 %v712, %v718
        %v721 = vmul.f32 %v713, %v718
        %v723 = vlaneseq
        %v724 = vshrl.u32 %v723, 7
        %v725 = vsub.s32 0, %v724
        %v726 = vrot.slane %v685, %v725
        %v728 = vadd.f32 %v720, %v726
        %v729 = vadd.f32 %v721, %v726
        %v730 = vpack.c.bf16 %v729, %v728
        %v731 = vld [vmem:[%s635] sm:$0xff]
        %v732 = vld [vmem:[%s635 + $0x8] sm:$0xff]
        %v733 = vld [vmem:[%s635 + $0x10] sm:$0xff]
        %v734 = vld [vmem:[%s635 + $0x18] sm:$0xff]
        %v735 = vld [vmem:[%s635 + $0x20] sm:$0xff]
        %v736 = vld [vmem:[%s635 + $0x28] sm:$0xff]
        %v737 = vld [vmem:[%s635 + $0x30] sm:$0xff]
        %v738 = vld [vmem:[%s635 + $0x38] sm:$0xff]
        %v739 = vld [vmem:[%s639] sm:$0x3]
        %v741 = vlaneseq
        %v742 = vshrl.u32 %v741, 7
        %v743 = vsub.s32 0, %v742
        %v744 = vrot.slane %v739, %v743
        %v745 = vlaneseq
        %v746 = vshrl.u32 %v745, 7
        %v747 = vsub.s32 1, %v746
        %v748 = vrot.slane %v739, %v747
        %v759 = vunpack.c.l.b16 %v731
        %v760 = vunpack.c.h.b16 %v731
        %v761 = vunpack.c.l.b16 %v732
        %v762 = vunpack.c.h.b16 %v732
        %v763 = vunpack.c.l.b16 %v733
        %v764 = vunpack.c.h.b16 %v733
        %v765 = vunpack.c.l.b16 %v734
        %v766 = vunpack.c.h.b16 %v734
        %v767 = vunpack.c.l.b16 %v735
        %v768 = vunpack.c.h.b16 %v735
        %v769 = vunpack.c.l.b16 %v736
        %v770 = vunpack.c.h.b16 %v736
        %v771 = vunpack.c.l.b16 %v737
        %v772 = vunpack.c.h.b16 %v737
        %v773 = vunpack.c.l.b16 %v738
        %v774 = vunpack.c.h.b16 %v738
        %v775 = vpack.c.b16 %v761, %v759
        %v776 = vpack.c.b16 %v762, %v760
        %v777 = vpack.c.b16 %v765, %v763
        %v778 = vpack.c.b16 %v766, %v764
        %v779 = vpack.c.b16 %v769, %v767
        %v780 = vpack.c.b16 %v770, %v768
        %v781 = vpack.c.b16 %v773, %v771
        %v782 = vpack.c.b16 %v774, %v772
        %v792 = vsel %vm686, %v730, 0
        %794 = vmatprep.subr.bf16.mxu0 %v776
        %795 = vmatpush1.bf16.msra.mxu0 %v775
        %796 = vmatprep.subr.bf16.mxu0 %v778
        %797 = vmatpush1.bf16.msra.mxu0 %v777
        %798 = vmatprep.subr.bf16.mxu0 %v780
        %799 = vmatpush1.bf16.msra.mxu0 %v779
        %800 = vmatprep.subr.bf16.mxu0 %v782
        %801 = vmatpush1.bf16.msra.mxu0 %v781
        %802 = vmatprep.subr.bf16.mxu0 0
        %803 = vmatpush1.bf16.msra.mxu0 0
        %804 = vmatprep.subr.bf16.mxu0 0
        %805 = vmatpush1.bf16.msra.mxu0 0
        %806 = vmatprep.subr.bf16.mxu0 0
        %807 = vmatpush1.bf16.msra.mxu0 0
        %808 = vmatprep.subr.bf16.mxu0 0
        %809 = vmatpush1.bf16.msra.mxu0 0
        %810 = vmatprep.subr.bf16.mxu0 0
        %811 = vmatpush1.bf16.msra.mxu0 0
        %812 = vmatprep.subr.bf16.mxu0 0
        %813 = vmatpush1.bf16.msra.mxu0 0
        %814 = vmatprep.subr.bf16.mxu0 0
        %815 = vmatpush1.bf16.msra.mxu0 0
        %816 = vmatprep.subr.bf16.mxu0 0
        %817 = vmatpush1.bf16.msra.mxu0 0
        %818 = vmatprep.subr.bf16.mxu0 0
        %819 = vmatpush1.bf16.msra.mxu0 0
        %820 = vmatprep.subr.bf16.mxu0 0
        %821 = vmatpush1.bf16.msra.mxu0 0
        %822 = vmatprep.subr.bf16.mxu0 0
        %823 = vmatpush1.bf16.msra.mxu0 0
        %824 = vmatprep.subr.bf16.mxu0 0
        %825 = vmatpush1.bf16.msra.mxu0 0
        %826 = vmatprep.mubr.bf16.mxu0 0
        %827 = vmatmul.mubr.bf16.gmra.mrb[0].mxu0 %v792
        %v828 = vpop.f32.mrb[0].mxu0
        %v829 = vadd.f32 %v744, %v828
        %v830 = vpop.f32.mrb[0].mxu0
        %v831 = vadd.f32 %v748, %v830
        %v832 = vpop.f32.mrb[0].mxu0
        %v833 = vadd.f32 %v744, %v832
        %v834 = vpop.f32.mrb[0].mxu0
        %v835 = vadd.f32 %v748, %v834
        %836 = vdwg.mxu0
        %v837 = vld [vmem:[%s644] sm:$0xf]
        %v838 = vld [vmem:[%s644 + $0x4] sm:$0xf]
        %v839 = vld [vmem:[%s644 + $0x8] sm:$0xf]
        %v840 = vld [vmem:[%s644 + $0xc] sm:$0xf]
        %v841 = vld [vmem:[%s644 + $0x10] sm:$0xf]
        %v842 = vld [vmem:[%s644 + $0x14] sm:$0xf]
        %v843 = vld [vmem:[%s644 + $0x18] sm:$0xf]
        %v844 = vld [vmem:[%s644 + $0x1c] sm:$0xf]
        %v845 = vld [vmem:[%s1] sm:$0xff]
        %v846 = vpack.c.bf16 %v829, %v829
        %848 = vrot.lane.b32.xlu0 %v846, 64
        %v849 = vpop.permute.xlu0 %848
        %vm850 = vcmask 130048
        %v852 = vsel %vm850, %v846, 0
        %v855 = vsel %vm850, %v849, 0
        %857 = vmatprep.subr.bf16.mxu0 0
        %858 = vmatpush1.bf16.xpose.msra.mxu0 %v855
        %859 = vmatprep.subr.bf16.mxu0 0
        %860 = vmatpush1.bf16.xpose.msra.mxu0 0
        %861 = vmatprep.subr.bf16.mxu0 0
        %862 = vmatpush1.bf16.xpose.msra.mxu0 0
        %863 = vmatprep.subr.bf16.mxu0 0
        %864 = vmatpush1.bf16.xpose.msra.mxu0 0
        %865 = vmatprep.subr.bf16.mxu0 0
        %866 = vmatpush1.bf16.xpose.msra.mxu0 0
        %867 = vmatprep.subr.bf16.mxu0 0
        %868 = vmatpush1.bf16.xpose.msra.mxu0 0
        %869 = vmatprep.subr.bf16.mxu0 0
        %870 = vmatpush1.bf16.xpose.msra.mxu0 0
        %871 = vmatprep.subr.bf16.mxu0 0
        %872 = vmatpush1.bf16.xpose.msra.mxu0 0
        %873 = vmatprep.subr.bf16.mxu0 0
        %874 = vmatpush1.bf16.xpose.msra.mxu0 0
        %875 = vmatprep.subr.bf16.mxu0 0
        %876 = vmatpush1.bf16.xpose.msra.mxu0 0
        %877 = vmatprep.subr.bf16.mxu0 0
        %878 = vmatpush1.bf16.xpose.msra.mxu0 0
        %879 = vmatprep.subr.bf16.mxu0 0
        %880 = vmatpush1.bf16.xpose.msra.mxu0 0
        %881 = vmatprep.subr.bf16.mxu0 0
        %882 = vmatpush1.bf16.xpose.msra.mxu0 0
        %883 = vmatprep.subr.bf16.mxu0 0
        %884 = vmatpush1.bf16.xpose.msra.mxu0 0
        %885 = vmatprep.subr.bf16.mxu0 0
        %886 = vmatpush1.bf16.xpose.msra.mxu0 0
        %887 = vmatprep.subr.bf16.mxu0 0
        %888 = vmatpush1.bf16.xpose.msra.mxu0 0
        %889 = vmatprep.mubr.bf16.mxu0 0
        %890 = vmatmul.mubr.bf16.gmra.mrb[0].mxu0 %v852
        %v891 = vpop.f32.mrb[0].mxu0
        %v892 = vadd.f32 %v845, %v891
        %v893 = vpop.f32.mrb[0].mxu0
        %v894 = vpop.f32.mrb[0].mxu0
        %v895 = vpop.f32.mrb[0].mxu0
        %896 = vdwg.mxu0
        %vm897 = vcmask 64512
        %v898 = vsel %vm897, %v892, -inf
        %899 = vmax.xlane.f32.xlu0 %v898
        %v900 = vpop.xlane.xlu0 %899
        %v901 = vsub.f32 %v892, %v900
        %v902 = vmul.f32 %v901, 1.442695
        %v903 = vpow.pop %v902
        %v904 = vsel %vm897, %v903, 0.0
        %905 = vadd.xlane.f32.xlu0 %v904
        %v906 = vpop.xlane.xlu0 %905
        %v907 = vrcp.pop %v906
        %v908 = vmul.f32 %v903, %v907
        %v909 = vpack.c.bf16 %v908, %v908
        %v910 = vpack.c.bf16 %v831, %v831
        %v912 = vsel %vm897, %v909, 0
        %vm914 = vcmask 1043456
        %v916 = vsel %vm914, %v910, 0
        %918 = vmatprep.subr.bf16.mxu0 0
        %919 = vmatpush1.bf16.msra.mxu0 %v916
        %920 = vmatprep.subr.bf16.mxu0 0
        %921 = vmatpush1.bf16.msra.mxu0 0
        %922 = vmatprep.subr.bf16.mxu0 0
        %923 = vmatpush1.bf16.msra.mxu0 0
        %924 = vmatprep.subr.bf16.mxu0 0
        %925 = vmatpush1.bf16.msra.mxu0 0
        %926 = vmatprep.subr.bf16.mxu0 0
        %927 = vmatpush1.bf16.msra.mxu0 0
        %928 = vmatprep.subr.bf16.mxu0 0
        %929 = vmatpush1.bf16.msra.mxu0 0
        %930 = vmatprep.subr.bf16.mxu0 0
        %931 = vmatpush1.bf16.msra.mxu0 0
        %932 = vmatprep.subr.bf16.mxu0 0
        %933 = vmatpush1.bf16.msra.mxu0 0
        %934 = vmatprep.subr.bf16.mxu0 0
        %935 = vmatpush1.bf16.msra.mxu0 0
        %936 = vmatprep.subr.bf16.mxu0 0
        %937 = vmatpush1.bf16.msra.mxu0 0
        %938 = vmatprep.subr.bf16.mxu0 0
        %939 = vmatpush1.bf16.msra.mxu0 0
        %940 = vmatprep.subr.bf16.mxu0 0
        %941 = vmatpush1.bf16.msra.mxu0 0
        %942 = vmatprep.subr.bf16.mxu0 0
        %943 = vmatpush1.bf16.msra.mxu0 0
        %944 = vmatprep.subr.bf16.mxu0 0
        %945 = vmatpush1.bf16.msra.mxu0 0
        %946 = vmatprep.subr.bf16.mxu0 0
        %947 = vmatpush1.bf16.msra.mxu0 0
        %948 = vmatprep.subr.bf16.mxu0 0
        %949 = vmatpush1.bf16.msra.mxu0 0
        %950 = vmatprep.mubr.bf16.mxu0 0
        %951 = vmatmul.mubr.bf16.gmra.mrb[0].mxu0 %v912
        %v952 = vpop.f32.mrb[0].mxu0
        %v953 = vadd.f32 0.0, %v952
        %v954 = vpop.f32.mrb[0].mxu0
        %v955 = vpop.f32.mrb[0].mxu0
        %v956 = vpop.f32.mrb[0].mxu0
        %957 = vdwg.mxu0
        %v958 = vpack.c.bf16 %v953, %v953
        %959 = vrot.lane.b32.xlu0 %v846, 112
        %v960 = vpop.permute.xlu0 %959
        %961 = vrot.lane.b32.xlu0 %v846, 48
        %v962 = vpop.permute.xlu0 %961
        %v964 = vsel %vm850, %v960, 0
        %v967 = vsel %vm850, %v962, 0
        %969 = vmatprep.subr.bf16.mxu0 0
        %970 = vmatpush1.bf16.xpose.msra.mxu0 %v967
        %971 = vmatprep.subr.bf16.mxu0 0
        %972 = vmatpush1.bf16.xpose.msra.mxu0 0
        %973 = vmatprep.subr.bf16.mxu0 0
        %974 = vmatpush1.bf16.xpose.msra.mxu0 0
        %975 = vmatprep.subr.bf16.mxu0 0
        %976 = vmatpush1.bf16.xpose.msra.mxu0 0
        %977 = vmatprep.subr.bf16.mxu0 0
        %978 = vmatpush1.bf16.xpose.msra.mxu0 0
        %979 = vmatprep.subr.bf16.mxu0 0
        %980 = vmatpush1.bf16.xpose.msra.mxu0 0
        %981 = vmatprep.subr.bf16.mxu0 0
        %982 = vmatpush1.bf16.xpose.msra.mxu0 0
        %983 = vmatprep.subr.bf16.mxu0 0
        %984 = vmatpush1.bf16.xpose.msra.mxu0 0
        %985 = vmatprep.subr.bf16.mxu0 0
        %986 = vmatpush1.bf16.xpose.msra.mxu0 0
        %987 = vmatprep.subr.bf16.mxu0 0
        %988 = vmatpush1.bf16.xpose.msra.mxu0 0
        %989 = vmatprep.subr.bf16.mxu0 0
        %990 = vmatpush1.bf16.xpose.msra.mxu0 0
        %991 = vmatprep.subr.bf16.mxu0 0
        %992 = vmatpush1.bf16.xpose.msra.mxu0 0
        %993 = vmatprep.subr.bf16.mxu0 0
        %994 = vmatpush1.bf16.xpose.msra.mxu0 0
        %995 = vmatprep.subr.bf16.mxu0 0
        %996 = vmatpush1.bf16.xpose.msra.mxu0 0
        %997 = vmatprep.subr.bf16.mxu0 0
        %998 = vmatpush1.bf16.xpose.msra.mxu0 0
        %999 = vmatprep.subr.bf16.mxu0 0
        %1000 = vmatpush1.bf16.xpose.msra.mxu0 0
        %1001 = vmatprep.mubr.bf16.mxu0 0
        %1002 = vmatmul.mubr.bf16.gmra.mrb[0].mxu0 %v964
        %v1003 = vpop.f32.mrb[0].mxu0
        %v1004 = vadd.f32 %v845, %v1003
        %v1005 = vpop.f32.mrb[0].mxu0
        %v1006 = vpop.f32.mrb[0].mxu0
        %v1007 = vpop.f32.mrb[0].mxu0
        %1008 = vdwg.mxu0
        %v1009 = vsel %vm897, %v1004, -inf
        %1010 = vmax.xlane.f32.xlu0 %v1009
        %v1011 = vpop.xlane.xlu0 %1010
        %v1012 = vsub.f32 %v1004, %v1011
        %v1013 = vmul.f32 %v1012, 1.442695
        %v1014 = vpow.pop %v1013
        %v1015 = vsel %vm897, %v1014, 0.0
        %1016 = vadd.xlane.f32.xlu0 %v1015
        %v1017 = vpop.xlane.xlu0 %1016
        %v1018 = vrcp.pop %v1017
        %v1019 = vmul.f32 %v1014, %v1018
        %v1020 = vpack.c.bf16 %v1019, %v1019
        %1022 = vrot.lane.b32.xlu0 %v910, 112
        %v1023 = vpop.permute.xlu0 %1022
        %v1025 = vsel %vm897, %v1020, 0
        %v1028 = vsel %vm914, %v1023, 0
        %1030 = vmatprep.subr.bf16.mxu0 0
        %1031 = vmatpush1.bf16.msra.mxu0 %v1028
        %1032 = vmatprep.subr.bf16.mxu0 0
        %1033 = vmatpush1.bf16.msra.mxu0 0
        %1034 = vmatprep.subr.bf16.mxu0 0
        %1035 = vmatpush1.bf16.msra.mxu0 0
        %1036 = vmatprep.subr.bf16.mxu0 0
        %1037 = vmatpush1.bf16.msra.mxu0 0
        %1038 = vmatprep.subr.bf16.mxu0 0
        %1039 = vmatpush1.bf16.msra.mxu0 0
        %1040 = vmatprep.subr.bf16.mxu0 0
        %1041 = vmatpush1.bf16.msra.mxu0 0
        %1042 = vmatprep.subr.bf16.mxu0 0
        %1043 = vmatpush1.bf16.msra.mxu0 0
        %1044 = vmatprep.subr.bf16.mxu0 0
        %1045 = vmatpush1.bf16.msra.mxu0 0
        %1046 = vmatprep.subr.bf16.mxu0 0
        %1047 = vmatpush1.bf16.msra.mxu0 0
        %1048 = vmatprep.subr.bf16.mxu0 0
        %1049 = vmatpush1.bf16.msra.mxu0 0
        %1050 = vmatprep.subr.bf16.mxu0 0
        %1051 = vmatpush1.bf16.msra.mxu0 0
        %1052 = vmatprep.subr.bf16.mxu0 0
        %1053 = vmatpush1.bf16.msra.mxu0 0
        %1054 = vmatprep.subr.bf16.mxu0 0
        %1055 = vmatpush1.bf16.msra.mxu0 0
        %1056 = vmatprep.subr.bf16.mxu0 0
        %1057 = vmatpush1.bf16.msra.mxu0 0
        %1058 = vmatprep.subr.bf16.mxu0 0
        %1059 = vmatpush1.bf16.msra.mxu0 0
        %1060 = vmatprep.subr.bf16.mxu0 0
        %1061 = vmatpush1.bf16.msra.mxu0 0
        %1062 = vmatprep.mubr.bf16.mxu0 0
        %1063 = vmatmul.mubr.bf16.gmra.mrb[0].mxu0 %v1025
        %v1064 = vpop.f32.mrb[0].mxu0
        %v1065 = vadd.f32 0.0, %v1064
        %v1066 = vpop.f32.mrb[0].mxu0
        %v1067 = vpop.f32.mrb[0].mxu0
        %v1068 = vpop.f32.mrb[0].mxu0
        %1069 = vdwg.mxu0
        %v1070 = vpack.c.bf16 %v1065, %v1065
        %v1073 = vunpack.c.l.b16 %v839
        %v1074 = vunpack.c.l.b16 %v840
        %v1075 = vpack.c.b16 %v1074, %v1073
        %v1078 = vsel %vm850, %v1070, 0
        %1080 = vmatprep.subr.bf16.mxu0 0
        %1081 = vmatpush1.bf16.msra.mxu0 %v1075
        %1082 = vmatprep.subr.bf16.mxu0 0
        %1083 = vmatpush1.bf16.msra.mxu0 0
        %1084 = vmatprep.subr.bf16.mxu0 0
        %1085 = vmatpush1.bf16.msra.mxu0 0
        %1086 = vmatprep.subr.bf16.mxu0 0
        %1087 = vmatpush1.bf16.msra.mxu0 0
        %1088 = vmatprep.subr.bf16.mxu0 0
        %1089 = vmatpush1.bf16.msra.mxu0 0
        %1090 = vmatprep.subr.bf16.mxu0 0
        %1091 = vmatpush1.bf16.msra.mxu0 0
        %1092 = vmatprep.subr.bf16.mxu0 0
        %1093 = vmatpush1.bf16.msra.mxu0 0
        %1094 = vmatprep.subr.bf16.mxu0 0
        %1095 = vmatpush1.bf16.msra.mxu0 0
        %1096 = vmatprep.subr.bf16.mxu0 0
        %1097 = vmatpush1.bf16.msra.mxu0 0
        %1098 = vmatprep.subr.bf16.mxu0 0
        %1099 = vmatpush1.bf16.msra.mxu0 0
        %1100 = vmatprep.subr.bf16.mxu0 0
        %1101 = vmatpush1.bf16.msra.mxu0 0
        %1102 = vmatprep.subr.bf16.mxu0 0
        %1103 = vmatpush1.bf16.msra.mxu0 0
        %1104 = vmatprep.subr.bf16.mxu0 0
        %1105 = vmatpush1.bf16.msra.mxu0 0
        %1106 = vmatprep.subr.bf16.mxu0 0
        %1107 = vmatpush1.bf16.msra.mxu0 0
        %1108 = vmatprep.subr.bf16.mxu0 0
        %1109 = vmatpush1.bf16.msra.mxu0 0
        %1110 = vmatprep.subr.bf16.mxu0 0
        %1111 = vmatpush1.bf16.msra.mxu0 0
        %1112 = vmatprep.mubr.bf16.mxu0 0
        %1113 = vmatmul.mubr.bf16.gmra.mrb[0].mxu0 %v1078
        %v1114 = vpop.f32.mrb[0].mxu0
        %v1115 = vadd.f32 0.0, %v1114
        %v1116 = vpop.f32.mrb[0].mxu0
        %v1117 = vpop.f32.mrb[0].mxu0
        %v1118 = vpop.f32.mrb[0].mxu0
        %1119 = vdwg.mxu0
        %v1122 = vunpack.c.l.b16 %v837
        %v1123 = vunpack.c.l.b16 %v838
        %v1124 = vpack.c.b16 %v1123, %v1122
        %v1127 = vsel %vm850, %v958, 0
        %1129 = vmatprep.subr.bf16.mxu0 0
        %1130 = vmatpush1.bf16.msra.mxu0 %v1124
        %1131 = vmatprep.subr.bf16.mxu0 0
        %1132 = vmatpush1.bf16.msra.mxu0 0
        %1133 = vmatprep.subr.bf16.mxu0 0
        %1134 = vmatpush1.bf16.msra.mxu0 0
        %1135 = vmatprep.subr.bf16.mxu0 0
        %1136 = vmatpush1.bf16.msra.mxu0 0
        %1137 = vmatprep.subr.bf16.mxu0 0
        %1138 = vmatpush1.bf16.msra.mxu0 0
        %1139 = vmatprep.subr.bf16.mxu0 0
        %1140 = vmatpush1.bf16.msra.mxu0 0
        %1141 = vmatprep.subr.bf16.mxu0 0
        %1142 = vmatpush1.bf16.msra.mxu0 0
        %1143 = vmatprep.subr.bf16.mxu0 0
        %1144 = vmatpush1.bf16.msra.mxu0 0
        %1145 = vmatprep.subr.bf16.mxu0 0
        %1146 = vmatpush1.bf16.msra.mxu0 0
        %1147 = vmatprep.subr.bf16.mxu0 0
        %1148 = vmatpush1.bf16.msra.mxu0 0
        %1149 = vmatprep.subr.bf16.mxu0 0
        %1150 = vmatpush1.bf16.msra.mxu0 0
        %1151 = vmatprep.subr.bf16.mxu0 0
        %1152 = vmatpush1.bf16.msra.mxu0 0
        %1153 = vmatprep.subr.bf16.mxu0 0
        %1154 = vmatpush1.bf16.msra.mxu0 0
        %1155 = vmatprep.subr.bf16.mxu0 0
        %1156 = vmatpush1.bf16.msra.mxu0 0
        %1157 = vmatprep.subr.bf16.mxu0 0
        %1158 = vmatpush1.bf16.msra.mxu0 0
        %1159 = vmatprep.subr.bf16.mxu0 0
        %1160 = vmatpush1.bf16.msra.mxu0 0
        %1161 = vmatprep.mubr.bf16.mxu0 0
        %1162 = vmatmul.mubr.bf16.gmra.mrb[0].mxu0 %v1127
        %v1163 = vpop.f32.mrb[0].mxu0
        %v1164 = vadd.f32 %v1115, %v1163
        %v1165 = vpop.f32.mrb[0].mxu0
        %v1166 = vpop.f32.mrb[0].mxu0
        %v1167 = vpop.f32.mrb[0].mxu0
        %1168 = vdwg.mxu0
        %1169 = vrot.lane.b32.xlu0 %v846, 96
        %v1170 = vpop.permute.xlu0 %1169
        %1171 = vrot.lane.b32.xlu0 %v846, 32
        %v1172 = vpop.permute.xlu0 %1171
        %v1174 = vsel %vm850, %v1170, 0
        %v1177 = vsel %vm850, %v1172, 0
        %1179 = vmatprep.subr.bf16.mxu0 0
        %1180 = vmatpush1.bf16.xpose.msra.mxu0 %v1177
        %1181 = vmatprep.subr.bf16.mxu0 0
        %1182 = vmatpush1.bf16.xpose.msra.mxu0 0
        %1183 = vmatprep.subr.bf16.mxu0 0
        %1184 = vmatpush1.bf16.xpose.msra.mxu0 0
        %1185 = vmatprep.subr.bf16.mxu0 0
        %1186 = vmatpush1.bf16.xpose.msra.mxu0 0
        %1187 = vmatprep.subr.bf16.mxu0 0
        %1188 = vmatpush1.bf16.xpose.msra.mxu0 0
        %1189 = vmatprep.subr.bf16.mxu0 0
        %1190 = vmatpush1.bf16.xpose.msra.mxu0 0
        %1191 = vmatprep.subr.bf16.mxu0 0
        %1192 = vmatpush1.bf16.xpose.msra.mxu0 0
        %1193 = vmatprep.subr.bf16.mxu0 0
        %1194 = vmatpush1.bf16.xpose.msra.mxu0 0
        %1195 = vmatprep.subr.bf16.mxu0 0
        %1196 = vmatpush1.bf16.xpose.msra.mxu0 0
        %1197 = vmatprep.subr.bf16.mxu0 0
        %1198 = vmatpush1.bf16.xpose.msra.mxu0 0
        %1199 = vmatprep.subr.bf16.mxu0 0
        %1200 = vmatpush1.bf16.xpose.msra.mxu0 0
        %1201 = vmatprep.subr.bf16.mxu0 0
        %1202 = vmatpush1.bf16.xpose.msra.mxu0 0
        %1203 = vmatprep.subr.bf16.mxu0 0
        %1204 = vmatpush1.bf16.xpose.msra.mxu0 0
        %1205 = vmatprep.subr.bf16.mxu0 0
        %1206 = vmatpush1.bf16.xpose.msra.mxu0 0
        %1207 = vmatprep.subr.bf16.mxu0 0
        %1208 = vmatpush1.bf16.xpose.msra.mxu0 0
        %1209 = vmatprep.subr.bf16.mxu0 0
        %1210 = vmatpush1.bf16.xpose.msra.mxu0 0
        %1211 = vmatprep.mubr.bf16.mxu0 0
        %1212 = vmatmul.mubr.bf16.gmra.mrb[0].mxu0 %v1174
        %v1213 = vpop.f32.mrb[0].mxu0
        %v1214 = vadd.f32 %v845, %v1213
        %v1215 = vpop.f32.mrb[0].mxu0
        %v1216 = vpop.f32.mrb[0].mxu0
        %v1217 = vpop.f32.mrb[0].mxu0
        %1218 = vdwg.mxu0
        %v1219 = vsel %vm897, %v1214, -inf
        %1220 = vmax.xlane.f32.xlu0 %v1219
        %v1221 = vpop.xlane.xlu0 %1220
        %v1222 = vsub.f32 %v1214, %v1221
        %v1223 = vmul.f32 %v1222, 1.442695
        %v1224 = vpow.pop %v1223
        %v1225 = vsel %vm897, %v1224, 0.0
        %1226 = vadd.xlane.f32.xlu0 %v1225
        %v1227 = vpop.xlane.xlu0 %1226
        %v1228 = vrcp.pop %v1227
        %v1229 = vmul.f32 %v1224, %v1228
        %v1230 = vpack.c.bf16 %v1229, %v1229
        %1231 = vrot.lane.b32.xlu0 %v910, 96
        %v1232 = vpop.permute.xlu0 %1231
        %v1234 = vsel %vm897, %v1230, 0
        %v1237 = vsel %vm914, %v1232, 0
        %1239 = vmatprep.subr.bf16.mxu0 0
        %1240 = vmatpush1.bf16.msra.mxu0 %v1237
        %1241 = vmatprep.subr.bf16.mxu0 0
        %1242 = vmatpush1.bf16.msra.mxu0 0
        %1243 = vmatprep.subr.bf16.mxu0 0
        %1244 = vmatpush1.bf16.msra.mxu0 0
        %1245 = vmatprep.subr.bf16.mxu0 0
        %1246 = vmatpush1.bf16.msra.mxu0 0
        %1247 = vmatprep.subr.bf16.mxu0 0
        %1248 = vmatpush1.bf16.msra.mxu0 0
        %1249 = vmatprep.subr.bf16.mxu0 0
        %1250 = vmatpush1.bf16.msra.mxu0 0
        %1251 = vmatprep.subr.bf16.mxu0 0
        %1252 = vmatpush1.bf16.msra.mxu0 0
        %1253 = vmatprep.subr.bf16.mxu0 0
        %1254 = vmatpush1.bf16.msra.mxu0 0
        %1255 = vmatprep.subr.bf16.mxu0 0
        %1256 = vmatpush1.bf16.msra.mxu0 0
        %1257 = vmatprep.subr.bf16.mxu0 0
        %1258 = vmatpush1.bf16.msra.mxu0 0
        %1259 = vmatprep.subr.bf16.mxu0 0
        %1260 = vmatpush1.bf16.msra.mxu0 0
        %1261 = vmatprep.subr.bf16.mxu0 0
        %1262 = vmatpush1.bf16.msra.mxu0 0
        %1263 = vmatprep.subr.bf16.mxu0 0
        %1264 = vmatpush1.bf16.msra.mxu0 0
        %1265 = vmatprep.subr.bf16.mxu0 0
        %1266 = vmatpush1.bf16.msra.mxu0 0
        %1267 = vmatprep.subr.bf16.mxu0 0
        %1268 = vmatpush1.bf16.msra.mxu0 0
        %1269 = vmatprep.subr.bf16.mxu0 0
        %1270 = vmatpush1.bf16.msra.mxu0 0
        %1271 = vmatprep.mubr.bf16.mxu0 0
        %1272 = vmatmul.mubr.bf16.gmra.mrb[0].mxu0 %v1234
        %v1273 = vpop.f32.mrb[0].mxu0
        %v1274 = vadd.f32 0.0, %v1273
        %v1275 = vpop.f32.mrb[0].mxu0
        %v1276 = vpop.f32.mrb[0].mxu0
        %v1277 = vpop.f32.mrb[0].mxu0
        %1278 = vdwg.mxu0
        %v1279 = vpack.c.bf16 %v1274, %v1274
        %v1282 = vunpack.c.l.b16 %v841
        %v1283 = vunpack.c.l.b16 %v842
        %v1284 = vpack.c.b16 %v1283, %v1282
        %v1287 = vsel %vm850, %v1279, 0
        %1289 = vmatprep.subr.bf16.mxu0 0
        %1290 = vmatpush1.bf16.msra.mxu0 %v1284
        %1291 = vmatprep.subr.bf16.mxu0 0
        %1292 = vmatpush1.bf16.msra.mxu0 0
        %1293 = vmatprep.subr.bf16.mxu0 0
        %1294 = vmatpush1.bf16.msra.mxu0 0
        %1295 = vmatprep.subr.bf16.mxu0 0
        %1296 = vmatpush1.bf16.msra.mxu0 0
        %1297 = vmatprep.subr.bf16.mxu0 0
        %1298 = vmatpush1.bf16.msra.mxu0 0
        %1299 = vmatprep.subr.bf16.mxu0 0
        %1300 = vmatpush1.bf16.msra.mxu0 0
        %1301 = vmatprep.subr.bf16.mxu0 0
        %1302 = vmatpush1.bf16.msra.mxu0 0
        %1303 = vmatprep.subr.bf16.mxu0 0
        %1304 = vmatpush1.bf16.msra.mxu0 0
        %1305 = vmatprep.subr.bf16.mxu0 0
        %1306 = vmatpush1.bf16.msra.mxu0 0
        %1307 = vmatprep.subr.bf16.mxu0 0
        %1308 = vmatpush1.bf16.msra.mxu0 0
        %1309 = vmatprep.subr.bf16.mxu0 0
        %1310 = vmatpush1.bf16.msra.mxu0 0
        %1311 = vmatprep.subr.bf16.mxu0 0
        %1312 = vmatpush1.bf16.msra.mxu0 0
        %1313 = vmatprep.subr.bf16.mxu0 0
        %1314 = vmatpush1.bf16.msra.mxu0 0
        %1315 = vmatprep.subr.bf16.mxu0 0
        %1316 = vmatpush1.bf16.msra.mxu0 0
        %1317 = vmatprep.subr.bf16.mxu0 0
        %1318 = vmatpush1.bf16.msra.mxu0 0
        %1319 = vmatprep.subr.bf16.mxu0 0
        %1320 = vmatpush1.bf16.msra.mxu0 0
        %1321 = vmatprep.mubr.bf16.mxu0 0
        %1322 = vmatmul.mubr.bf16.gmra.mrb[0].mxu0 %v1287
        %v1323 = vpop.f32.mrb[0].mxu0
        %v1324 = vadd.f32 0.0, %v1323
        %v1325 = vpop.f32.mrb[0].mxu0
        %v1326 = vpop.f32.mrb[0].mxu0
        %v1327 = vpop.f32.mrb[0].mxu0
        %1328 = vdwg.mxu0
        %v1329 = vadd.f32 %v1164, %v1324
        %1330 = vrot.lane.b32.xlu0 %v846, 80
        %v1331 = vpop.permute.xlu0 %1330
        %1332 = vrot.lane.b32.xlu0 %v846, 16
        %v1333 = vpop.permute.xlu0 %1332
        %v1335 = vsel %vm850, %v1331, 0
        %v1338 = vsel %vm850, %v1333, 0
        %1340 = vmatprep.subr.bf16.mxu0 0
        %1341 = vmatpush1.bf16.xpose.msra.mxu0 %v1338
        %1342 = vmatprep.subr.bf16.mxu0 0
        %1343 = vmatpush1.bf16.xpose.msra.mxu0 0
        %1344 = vmatprep.subr.bf16.mxu0 0
        %1345 = vmatpush1.bf16.xpose.msra.mxu0 0
        %1346 = vmatprep.subr.bf16.mxu0 0
        %1347 = vmatpush1.bf16.xpose.msra.mxu0 0
        %1348 = vmatprep.subr.bf16.mxu0 0
        %1349 = vmatpush1.bf16.xpose.msra.mxu0 0
        %1350 = vmatprep.subr.bf16.mxu0 0
        %1351 = vmatpush1.bf16.xpose.msra.mxu0 0
        %1352 = vmatprep.subr.bf16.mxu0 0
        %1353 = vmatpush1.bf16.xpose.msra.mxu0 0
        %1354 = vmatprep.subr.bf16.mxu0 0
        %1355 = vmatpush1.bf16.xpose.msra.mxu0 0
        %1356 = vmatprep.subr.bf16.mxu0 0
        %1357 = vmatpush1.bf16.xpose.msra.mxu0 0
        %1358 = vmatprep.subr.bf16.mxu0 0
        %1359 = vmatpush1.bf16.xpose.msra.mxu0 0
        %1360 = vmatprep.subr.bf16.mxu0 0
        %1361 = vmatpush1.bf16.xpose.msra.mxu0 0
        %1362 = vmatprep.subr.bf16.mxu0 0
        %1363 = vmatpush1.bf16.xpose.msra.mxu0 0
        %1364 = vmatprep.subr.bf16.mxu0 0
        %1365 = vmatpush1.bf16.xpose.msra.mxu0 0
        %1366 = vmatprep.subr.bf16.mxu0 0
        %1367 = vmatpush1.bf16.xpose.msra.mxu0 0
        %1368 = vmatprep.subr.bf16.mxu0 0
        %1369 = vmatpush1.bf16.xpose.msra.mxu0 0
        %1370 = vmatprep.subr.bf16.mxu0 0
        %1371 = vmatpush1.bf16.xpose.msra.mxu0 0
        %1372 = vmatprep.mubr.bf16.mxu0 0
        %1373 = vmatmul.mubr.bf16.gmra.mrb[0].mxu0 %v1335
        %v1374 = vpop.f32.mrb[0].mxu0
        %v1375 = vadd.f32 %v845, %v1374
        %v1376 = vpop.f32.mrb[0].mxu0
        %v1377 = vpop.f32.mrb[0].mxu0
        %v1378 = vpop.f32.mrb[0].mxu0
        %1379 = vdwg.mxu0
        %v1380 = vsel %vm897, %v1375, -inf
        %1381 = vmax.xlane.f32.xlu0 %v1380
        %v1382 = vpop.xlane.xlu0 %1381
        %v1383 = vsub.f32 %v1375, %v1382
        %v1384 = vmul.f32 %v1383, 1.442695
        %v1385 = vpow.pop %v1384
        %v1386 = vsel %vm897, %v1385, 0.0
        %1387 = vadd.xlane.f32.xlu0 %v1386
        %v1388 = vpop.xlane.xlu0 %1387
        %v1389 = vrcp.pop %v1388
        %v1390 = vmul.f32 %v1385, %v1389
        %v1391 = vpack.c.bf16 %v1390, %v1390
        %1392 = vrot.lane.b32.xlu0 %v910, 80
        %v1393 = vpop.permute.xlu0 %1392
        %v1395 = vsel %vm897, %v1391, 0
        %v1398 = vsel %vm914, %v1393, 0
        %1400 = vmatprep.subr.bf16.mxu0 0
        %1401 = vmatpush1.bf16.msra.mxu0 %v1398
        %1402 = vmatprep.subr.bf16.mxu0 0
        %1403 = vmatpush1.bf16.msra.mxu0 0
        %1404 = vmatprep.subr.bf16.mxu0 0
        %1405 = vmatpush1.bf16.msra.mxu0 0
        %1406 = vmatprep.subr.bf16.mxu0 0
        %1407 = vmatpush1.bf16.msra.mxu0 0
        %1408 = vmatprep.subr.bf16.mxu0 0
        %1409 = vmatpush1.bf16.msra.mxu0 0
        %1410 = vmatprep.subr.bf16.mxu0 0
        %1411 = vmatpush1.bf16.msra.mxu0 0
        %1412 = vmatprep.subr.bf16.mxu0 0
        %1413 = vmatpush1.bf16.msra.mxu0 0
        %1414 = vmatprep.subr.bf16.mxu0 0
        %1415 = vmatpush1.bf16.msra.mxu0 0
        %1416 = vmatprep.subr.bf16.mxu0 0
        %1417 = vmatpush1.bf16.msra.mxu0 0
        %1418 = vmatprep.subr.bf16.mxu0 0
        %1419 = vmatpush1.bf16.msra.mxu0 0
        %1420 = vmatprep.subr.bf16.mxu0 0
        %1421 = vmatpush1.bf16.msra.mxu0 0
        %1422 = vmatprep.subr.bf16.mxu0 0
        %1423 = vmatpush1.bf16.msra.mxu0 0
        %1424 = vmatprep.subr.bf16.mxu0 0
        %1425 = vmatpush1.bf16.msra.mxu0 0
        %1426 = vmatprep.subr.bf16.mxu0 0
        %1427 = vmatpush1.bf16.msra.mxu0 0
        %1428 = vmatprep.subr.bf16.mxu0 0
        %1429 = vmatpush1.bf16.msra.mxu0 0
        %1430 = vmatprep.subr.bf16.mxu0 0
        %1431 = vmatpush1.bf16.msra.mxu0 0
        %1432 = vmatprep.mubr.bf16.mxu0 0
        %1433 = vmatmul.mubr.bf16.gmra.mrb[0].mxu0 %v1395
        %v1434 = vpop.f32.mrb[0].mxu0
        %v1435 = vadd.f32 0.0, %v1434
        %v1436 = vpop.f32.mrb[0].mxu0
        %v1437 = vpop.f32.mrb[0].mxu0
        %v1438 = vpop.f32.mrb[0].mxu0
        %1439 = vdwg.mxu0
        %v1440 = vpack.c.bf16 %v1435, %v1435
        %v1443 = vunpack.c.l.b16 %v843
        %v1444 = vunpack.c.l.b16 %v844
        %v1445 = vpack.c.b16 %v1444, %v1443
        %v1448 = vsel %vm850, %v1440, 0
        %1450 = vmatprep.subr.bf16.mxu0 0
        %1451 = vmatpush1.bf16.msra.mxu0 %v1445
        %1452 = vmatprep.subr.bf16.mxu0 0
        %1453 = vmatpush1.bf16.msra.mxu0 0
        %1454 = vmatprep.subr.bf16.mxu0 0
        %1455 = vmatpush1.bf16.msra.mxu0 0
        %1456 = vmatprep.subr.bf16.mxu0 0
        %1457 = vmatpush1.bf16.msra.mxu0 0
        %1458 = vmatprep.subr.bf16.mxu0 0
        %1459 = vmatpush1.bf16.msra.mxu0 0
        %1460 = vmatprep.subr.bf16.mxu0 0
        %1461 = vmatpush1.bf16.msra.mxu0 0
        %1462 = vmatprep.subr.bf16.mxu0 0
        %1463 = vmatpush1.bf16.msra.mxu0 0
        %1464 = vmatprep.subr.bf16.mxu0 0
        %1465 = vmatpush1.bf16.msra.mxu0 0
        %1466 = vmatprep.subr.bf16.mxu0 0
        %1467 = vmatpush1.bf16.msra.mxu0 0
        %1468 = vmatprep.subr.bf16.mxu0 0
        %1469 = vmatpush1.bf16.msra.mxu0 0
        %1470 = vmatprep.subr.bf16.mxu0 0
        %1471 = vmatpush1.bf16.msra.mxu0 0
        %1472 = vmatprep.subr.bf16.mxu0 0
        %1473 = vmatpush1.bf16.msra.mxu0 0
        %1474 = vmatprep.subr.bf16.mxu0 0
        %1475 = vmatpush1.bf16.msra.mxu0 0
        %1476 = vmatprep.subr.bf16.mxu0 0
        %1477 = vmatpush1.bf16.msra.mxu0 0
        %1478 = vmatprep.subr.bf16.mxu0 0
        %1479 = vmatpush1.bf16.msra.mxu0 0
        %1480 = vmatprep.subr.bf16.mxu0 0
        %1481 = vmatpush1.bf16.msra.mxu0 0
        %1482 = vmatprep.mubr.bf16.mxu0 0
        %1483 = vmatmul.mubr.bf16.gmra.mrb[0].mxu0 %v1448
        %v1484 = vpop.f32.mrb[0].mxu0
        %v1485 = vadd.f32 0.0, %v1484
        %v1486 = vpop.f32.mrb[0].mxu0
        %v1487 = vpop.f32.mrb[0].mxu0
        %v1488 = vpop.f32.mrb[0].mxu0
        %1489 = vdwg.mxu0
        %v1490 = vadd.f32 %v1329, %v1485
        %v1491 = vpack.c.bf16 %v833, %v833
        %1493 = vrot.lane.b32.xlu0 %v1491, 64
        %v1494 = vpop.permute.xlu0 %1493
        %v1496 = vsel %vm850, %v1491, 0
        %v1499 = vsel %vm850, %v1494, 0
        %1501 = vmatprep.subr.bf16.mxu0 0
        %1502 = vmatpush1.bf16.xpose.msra.mxu0 %v1499
        %1503 = vmatprep.subr.bf16.mxu0 0
        %1504 = vmatpush1.bf16.xpose.msra.mxu0 0
        %1505 = vmatprep.subr.bf16.mxu0 0
        %1506 = vmatpush1.bf16.xpose.msra.mxu0 0
        %1507 = vmatprep.subr.bf16.mxu0 0
        %1508 = vmatpush1.bf16.xpose.msra.mxu0 0
        %1509 = vmatprep.subr.bf16.mxu0 0
        %1510 = vmatpush1.bf16.xpose.msra.mxu0 0
        %1511 = vmatprep.subr.bf16.mxu0 0
        %1512 = vmatpush1.bf16.xpose.msra.mxu0 0
        %1513 = vmatprep.subr.bf16.mxu0 0
        %1514 = vmatpush1.bf16.xpose.msra.mxu0 0
        %1515 = vmatprep.subr.bf16.mxu0 0
        %1516 = vmatpush1.bf16.xpose.msra.mxu0 0
        %1517 = vmatprep.subr.bf16.mxu0 0
        %1518 = vmatpush1.bf16.xpose.msra.mxu0 0
        %1519 = vmatprep.subr.bf16.mxu0 0
        %1520 = vmatpush1.bf16.xpose.msra.mxu0 0
        %1521 = vmatprep.subr.bf16.mxu0 0
        %1522 = vmatpush1.bf16.xpose.msra.mxu0 0
        %1523 = vmatprep.subr.bf16.mxu0 0
        %1524 = vmatpush1.bf16.xpose.msra.mxu0 0
        %1525 = vmatprep.subr.bf16.mxu0 0
        %1526 = vmatpush1.bf16.xpose.msra.mxu0 0
        %1527 = vmatprep.subr.bf16.mxu0 0
        %1528 = vmatpush1.bf16.xpose.msra.mxu0 0
        %1529 = vmatprep.subr.bf16.mxu0 0
        %1530 = vmatpush1.bf16.xpose.msra.mxu0 0
        %1531 = vmatprep.subr.bf16.mxu0 0
        %1532 = vmatpush1.bf16.xpose.msra.mxu0 0
        %1533 = vmatprep.mubr.bf16.mxu0 0
        %1534 = vmatmul.mubr.bf16.gmra.mrb[0].mxu0 %v1496
        %v1535 = vpop.f32.mrb[0].mxu0
        %v1536 = vadd.f32 %v845, %v1535
        %v1537 = vpop.f32.mrb[0].mxu0
        %v1538 = vpop.f32.mrb[0].mxu0
        %v1539 = vpop.f32.mrb[0].mxu0
        %1540 = vdwg.mxu0
        %v1541 = vsel %vm897, %v1536, -inf
        %1542 = vmax.xlane.f32.xlu0 %v1541
        %v1543 = vpop.xlane.xlu0 %1542
        %v1544 = vsub.f32 %v1536, %v1543
        %v1545 = vmul.f32 %v1544, 1.442695
        %v1546 = vpow.pop %v1545
        %v1547 = vsel %vm897, %v1546, 0.0
        %1548 = vadd.xlane.f32.xlu0 %v1547
        %v1549 = vpop.xlane.xlu0 %1548
        %v1550 = vrcp.pop %v1549
        %v1551 = vmul.f32 %v1546, %v1550
        %v1552 = vpack.c.bf16 %v1551, %v1551
        %v1553 = vpack.c.bf16 %v835, %v835
        %v1555 = vsel %vm897, %v1552, 0
        %v1558 = vsel %vm914, %v1553, 0
        %1560 = vmatprep.subr.bf16.mxu0 0
        %1561 = vmatpush1.bf16.msra.mxu0 %v1558
        %1562 = vmatprep.subr.bf16.mxu0 0
        %1563 = vmatpush1.bf16.msra.mxu0 0
        %1564 = vmatprep.subr.bf16.mxu0 0
        %1565 = vmatpush1.bf16.msra.mxu0 0
        %1566 = vmatprep.subr.bf16.mxu0 0
        %1567 = vmatpush1.bf16.msra.mxu0 0
        %1568 = vmatprep.subr.bf16.mxu0 0
        %1569 = vmatpush1.bf16.msra.mxu0 0
        %1570 = vmatprep.subr.bf16.mxu0 0
        %1571 = vmatpush1.bf16.msra.mxu0 0
        %1572 = vmatprep.subr.bf16.mxu0 0
        %1573 = vmatpush1.bf16.msra.mxu0 0
        %1574 = vmatprep.subr.bf16.mxu0 0
        %1575 = vmatpush1.bf16.msra.mxu0 0
        %1576 = vmatprep.subr.bf16.mxu0 0
        %1577 = vmatpush1.bf16.msra.mxu0 0
        %1578 = vmatprep.subr.bf16.mxu0 0
        %1579 = vmatpush1.bf16.msra.mxu0 0
        %1580 = vmatprep.subr.bf16.mxu0 0
        %1581 = vmatpush1.bf16.msra.mxu0 0
        %1582 = vmatprep.subr.bf16.mxu0 0
        %1583 = vmatpush1.bf16.msra.mxu0 0
        %1584 = vmatprep.subr.bf16.mxu0 0
        %1585 = vmatpush1.bf16.msra.mxu0 0
        %1586 = vmatprep.subr.bf16.mxu0 0
        %1587 = vmatpush1.bf16.msra.mxu0 0
        %1588 = vmatprep.subr.bf16.mxu0 0
        %1589 = vmatpush1.bf16.msra.mxu0 0
        %1590 = vmatprep.subr.bf16.mxu0 0
        %1591 = vmatpush1.bf16.msra.mxu0 0
        %1592 = vmatprep.mubr.bf16.mxu0 0
        %1593 = vmatmul.mubr.bf16.gmra.mrb[0].mxu0 %v1555
        %v1594 = vpop.f32.mrb[0].mxu0
        %v1595 = vadd.f32 0.0, %v1594
        %v1596 = vpop.f32.mrb[0].mxu0
        %v1597 = vpop.f32.mrb[0].mxu0
        %v1598 = vpop.f32.mrb[0].mxu0
        %1599 = vdwg.mxu0
        %v1600 = vpack.c.bf16 %v1595, %v1595
        %1601 = vrot.lane.b32.xlu0 %v1491, 112
        %v1602 = vpop.permute.xlu0 %1601
        %1603 = vrot.lane.b32.xlu0 %v1491, 48
        %v1604 = vpop.permute.xlu0 %1603
        %v1606 = vsel %vm850, %v1602, 0
        %v1609 = vsel %vm850, %v1604, 0
        %1611 = vmatprep.subr.bf16.mxu0 0
        %1612 = vmatpush1.bf16.xpose.msra.mxu0 %v1609
        %1613 = vmatprep.subr.bf16.mxu0 0
        %1614 = vmatpush1.bf16.xpose.msra.mxu0 0
        %1615 = vmatprep.subr.bf16.mxu0 0
        %1616 = vmatpush1.bf16.xpose.msra.mxu0 0
        %1617 = vmatprep.subr.bf16.mxu0 0
        %1618 = vmatpush1.bf16.xpose.msra.mxu0 0
        %1619 = vmatprep.subr.bf16.mxu0 0
        %1620 = vmatpush1.bf16.xpose.msra.mxu0 0
        %1621 = vmatprep.subr.bf16.mxu0 0
        %1622 = vmatpush1.bf16.xpose.msra.mxu0 0
        %1623 = vmatprep.subr.bf16.mxu0 0
        %1624 = vmatpush1.bf16.xpose.msra.mxu0 0
        %1625 = vmatprep.subr.bf16.mxu0 0
        %1626 = vmatpush1.bf16.xpose.msra.mxu0 0
        %1627 = vmatprep.subr.bf16.mxu0 0
        %1628 = vmatpush1.bf16.xpose.msra.mxu0 0
        %1629 = vmatprep.subr.bf16.mxu0 0
        %1630 = vmatpush1.bf16.xpose.msra.mxu0 0
        %1631 = vmatprep.subr.bf16.mxu0 0
        %1632 = vmatpush1.bf16.xpose.msra.mxu0 0
        %1633 = vmatprep.subr.bf16.mxu0 0
        %1634 = vmatpush1.bf16.xpose.msra.mxu0 0
        %1635 = vmatprep.subr.bf16.mxu0 0
        %1636 = vmatpush1.bf16.xpose.msra.mxu0 0
        %1637 = vmatprep.subr.bf16.mxu0 0
        %1638 = vmatpush1.bf16.xpose.msra.mxu0 0
        %1639 = vmatprep.subr.bf16.mxu0 0
        %1640 = vmatpush1.bf16.xpose.msra.mxu0 0
        %1641 = vmatprep.subr.bf16.mxu0 0
        %1642 = vmatpush1.bf16.xpose.msra.mxu0 0
        %1643 = vmatprep.mubr.bf16.mxu0 0
        %1644 = vmatmul.mubr.bf16.gmra.mrb[0].mxu0 %v1606
        %v1645 = vpop.f32.mrb[0].mxu0
        %v1646 = vadd.f32 %v845, %v1645
        %v1647 = vpop.f32.mrb[0].mxu0
        %v1648 = vpop.f32.mrb[0].mxu0
        %v1649 = vpop.f32.mrb[0].mxu0
        %1650 = vdwg.mxu0
        %v1651 = vsel %vm897, %v1646, -inf
        %1652 = vmax.xlane.f32.xlu0 %v1651
        %v1653 = vpop.xlane.xlu0 %1652
        %v1654 = vsub.f32 %v1646, %v1653
        %v1655 = vmul.f32 %v1654, 1.442695
        %v1656 = vpow.pop %v1655
        %v1657 = vsel %vm897, %v1656, 0.0
        %1658 = vadd.xlane.f32.xlu0 %v1657
        %v1659 = vpop.xlane.xlu0 %1658
        %v1660 = vrcp.pop %v1659
        %v1661 = vmul.f32 %v1656, %v1660
        %v1662 = vpack.c.bf16 %v1661, %v1661
        %1664 = vrot.lane.b32.xlu0 %v1553, 112
        %v1665 = vpop.permute.xlu0 %1664
        %v1667 = vsel %vm897, %v1662, 0
        %v1670 = vsel %vm914, %v1665, 0
        %1672 = vmatprep.subr.bf16.mxu0 0
        %1673 = vmatpush1.bf16.msra.mxu0 %v1670
        %1674 = vmatprep.subr.bf16.mxu0 0
        %1675 = vmatpush1.bf16.msra.mxu0 0
        %1676 = vmatprep.subr.bf16.mxu0 0
        %1677 = vmatpush1.bf16.msra.mxu0 0
        %1678 = vmatprep.subr.bf16.mxu0 0
        %1679 = vmatpush1.bf16.msra.mxu0 0
        %1680 = vmatprep.subr.bf16.mxu0 0
        %1681 = vmatpush1.bf16.msra.mxu0 0
        %1682 = vmatprep.subr.bf16.mxu0 0
        %1683 = vmatpush1.bf16.msra.mxu0 0
        %1684 = vmatprep.subr.bf16.mxu0 0
        %1685 = vmatpush1.bf16.msra.mxu0 0
        %1686 = vmatprep.subr.bf16.mxu0 0
        %1687 = vmatpush1.bf16.msra.mxu0 0
        %1688 = vmatprep.subr.bf16.mxu0 0
        %1689 = vmatpush1.bf16.msra.mxu0 0
        %1690 = vmatprep.subr.bf16.mxu0 0
        %1691 = vmatpush1.bf16.msra.mxu0 0
        %1692 = vmatprep.subr.bf16.mxu0 0
        %1693 = vmatpush1.bf16.msra.mxu0 0
        %1694 = vmatprep.subr.bf16.mxu0 0
        %1695 = vmatpush1.bf16.msra.mxu0 0
        %1696 = vmatprep.subr.bf16.mxu0 0
        %1697 = vmatpush1.bf16.msra.mxu0 0
        %1698 = vmatprep.subr.bf16.mxu0 0
        %1699 = vmatpush1.bf16.msra.mxu0 0
        %1700 = vmatprep.subr.bf16.mxu0 0
        %1701 = vmatpush1.bf16.msra.mxu0 0
        %1702 = vmatprep.subr.bf16.mxu0 0
        %1703 = vmatpush1.bf16.msra.mxu0 0
        %1704 = vmatprep.mubr.bf16.mxu0 0
        %1705 = vmatmul.mubr.bf16.gmra.mrb[0].mxu0 %v1667
        %v1706 = vpop.f32.mrb[0].mxu0
        %v1707 = vadd.f32 0.0, %v1706
        %v1708 = vpop.f32.mrb[0].mxu0
        %v1709 = vpop.f32.mrb[0].mxu0
        %v1710 = vpop.f32.mrb[0].mxu0
        %1711 = vdwg.mxu0
        %v1712 = vpack.c.bf16 %v1707, %v1707
        %v1714 = vsel %vm850, %v1712, 0
        %1716 = vmatprep.subr.bf16.mxu0 0
        %1717 = vmatpush1.bf16.msra.mxu0 %v1075
        %1718 = vmatprep.subr.bf16.mxu0 0
        %1719 = vmatpush1.bf16.msra.mxu0 0
        %1720 = vmatprep.subr.bf16.mxu0 0
        %1721 = vmatpush1.bf16.msra.mxu0 0
        %1722 = vmatprep.subr.bf16.mxu0 0
        %1723 = vmatpush1.bf16.msra.mxu0 0
        %1724 = vmatprep.subr.bf16.mxu0 0
        %1725 = vmatpush1.bf16.msra.mxu0 0
        %1726 = vmatprep.subr.bf16.mxu0 0
        %1727 = vmatpush1.bf16.msra.mxu0 0
        %1728 = vmatprep.subr.bf16.mxu0 0
        %1729 = vmatpush1.bf16.msra.mxu0 0
        %1730 = vmatprep.subr.bf16.mxu0 0
        %1731 = vmatpush1.bf16.msra.mxu0 0
        %1732 = vmatprep.subr.bf16.mxu0 0
        %1733 = vmatpush1.bf16.msra.mxu0 0
        %1734 = vmatprep.subr.bf16.mxu0 0
        %1735 = vmatpush1.bf16.msra.mxu0 0
        %1736 = vmatprep.subr.bf16.mxu0 0
        %1737 = vmatpush1.bf16.msra.mxu0 0
        %1738 = vmatprep.subr.bf16.mxu0 0
        %1739 = vmatpush1.bf16.msra.mxu0 0
        %1740 = vmatprep.subr.bf16.mxu0 0
        %1741 = vmatpush1.bf16.msra.mxu0 0
        %1742 = vmatprep.subr.bf16.mxu0 0
        %1743 = vmatpush1.bf16.msra.mxu0 0
        %1744 = vmatprep.subr.bf16.mxu0 0
        %1745 = vmatpush1.bf16.msra.mxu0 0
        %1746 = vmatprep.subr.bf16.mxu0 0
        %1747 = vmatpush1.bf16.msra.mxu0 0
        %1748 = vmatprep.mubr.bf16.mxu0 0
        %1749 = vmatmul.mubr.bf16.gmra.mrb[0].mxu0 %v1714
        %v1750 = vpop.f32.mrb[0].mxu0
        %v1751 = vadd.f32 0.0, %v1750
        %v1752 = vpop.f32.mrb[0].mxu0
        %v1753 = vpop.f32.mrb[0].mxu0
        %v1754 = vpop.f32.mrb[0].mxu0
        %1755 = vdwg.mxu0
        %v1757 = vsel %vm850, %v1600, 0
        %1759 = vmatprep.subr.bf16.mxu0 0
        %1760 = vmatpush1.bf16.msra.mxu0 %v1124
        %1761 = vmatprep.subr.bf16.mxu0 0
        %1762 = vmatpush1.bf16.msra.mxu0 0
        %1763 = vmatprep.subr.bf16.mxu0 0
        %1764 = vmatpush1.bf16.msra.mxu0 0
        %1765 = vmatprep.subr.bf16.mxu0 0
        %1766 = vmatpush1.bf16.msra.mxu0 0
        %1767 = vmatprep.subr.bf16.mxu0 0
        %1768 = vmatpush1.bf16.msra.mxu0 0
        %1769 = vmatprep.subr.bf16.mxu0 0
        %1770 = vmatpush1.bf16.msra.mxu0 0
        %1771 = vmatprep.subr.bf16.mxu0 0
        %1772 = vmatpush1.bf16.msra.mxu0 0
        %1773 = vmatprep.subr.bf16.mxu0 0
        %1774 = vmatpush1.bf16.msra.mxu0 0
        %1775 = vmatprep.subr.bf16.mxu0 0
        %1776 = vmatpush1.bf16.msra.mxu0 0
        %1777 = vmatprep.subr.bf16.mxu0 0
        %1778 = vmatpush1.bf16.msra.mxu0 0
        %1779 = vmatprep.subr.bf16.mxu0 0
        %1780 = vmatpush1.bf16.msra.mxu0 0
        %1781 = vmatprep.subr.bf16.mxu0 0
        %1782 = vmatpush1.bf16.msra.mxu0 0
        %1783 = vmatprep.subr.bf16.mxu0 0
        %1784 = vmatpush1.bf16.msra.mxu0 0
        %1785 = vmatprep.subr.bf16.mxu0 0
        %1786 = vmatpush1.bf16.msra.mxu0 0
        %1787 = vmatprep.subr.bf16.mxu0 0
        %1788 = vmatpush1.bf16.msra.mxu0 0
        %1789 = vmatprep.subr.bf16.mxu0 0
        %1790 = vmatpush1.bf16.msra.mxu0 0
        %1791 = vmatprep.mubr.bf16.mxu0 0
        %1792 = vmatmul.mubr.bf16.gmra.mrb[0].mxu0 %v1757
        %v1793 = vpop.f32.mrb[0].mxu0
        %v1794 = vadd.f32 %v1751, %v1793
        %v1795 = vpop.f32.mrb[0].mxu0
        %v1796 = vpop.f32.mrb[0].mxu0
        %v1797 = vpop.f32.mrb[0].mxu0
        %1798 = vdwg.mxu0
        %1799 = vrot.lane.b32.xlu0 %v1491, 96
        %v1800 = vpop.permute.xlu0 %1799
        %1801 = vrot.lane.b32.xlu0 %v1491, 32
        %v1802 = vpop.permute.xlu0 %1801
        %v1804 = vsel %vm850, %v1800, 0
        %v1807 = vsel %vm850, %v1802, 0
        %1809 = vmatprep.subr.bf16.mxu0 0
        %1810 = vmatpush1.bf16.xpose.msra.mxu0 %v1807
        %1811 = vmatprep.subr.bf16.mxu0 0
        %1812 = vmatpush1.bf16.xpose.msra.mxu0 0
        %1813 = vmatprep.subr.bf16.mxu0 0
        %1814 = vmatpush1.bf16.xpose.msra.mxu0 0
        %1815 = vmatprep.subr.bf16.mxu0 0
        %1816 = vmatpush1.bf16.xpose.msra.mxu0 0
        %1817 = vmatprep.subr.bf16.mxu0 0
        %1818 = vmatpush1.bf16.xpose.msra.mxu0 0
        %1819 = vmatprep.subr.bf16.mxu0 0
        %1820 = vmatpush1.bf16.xpose.msra.mxu0 0
        %1821 = vmatprep.subr.bf16.mxu0 0
        %1822 = vmatpush1.bf16.xpose.msra.mxu0 0
        %1823 = vmatprep.subr.bf16.mxu0 0
        %1824 = vmatpush1.bf16.xpose.msra.mxu0 0
        %1825 = vmatprep.subr.bf16.mxu0 0
        %1826 = vmatpush1.bf16.xpose.msra.mxu0 0
        %1827 = vmatprep.subr.bf16.mxu0 0
        %1828 = vmatpush1.bf16.xpose.msra.mxu0 0
        %1829 = vmatprep.subr.bf16.mxu0 0
        %1830 = vmatpush1.bf16.xpose.msra.mxu0 0
        %1831 = vmatprep.subr.bf16.mxu0 0
        %1832 = vmatpush1.bf16.xpose.msra.mxu0 0
        %1833 = vmatprep.subr.bf16.mxu0 0
        %1834 = vmatpush1.bf16.xpose.msra.mxu0 0
        %1835 = vmatprep.subr.bf16.mxu0 0
        %1836 = vmatpush1.bf16.xpose.msra.mxu0 0
        %1837 = vmatprep.subr.bf16.mxu0 0
        %1838 = vmatpush1.bf16.xpose.msra.mxu0 0
        %1839 = vmatprep.subr.bf16.mxu0 0
        %1840 = vmatpush1.bf16.xpose.msra.mxu0 0
        %1841 = vmatprep.mubr.bf16.mxu0 0
        %1842 = vmatmul.mubr.bf16.gmra.mrb[0].mxu0 %v1804
        %v1843 = vpop.f32.mrb[0].mxu0
        %v1844 = vadd.f32 %v845, %v1843
        %v1845 = vpop.f32.mrb[0].mxu0
        %v1846 = vpop.f32.mrb[0].mxu0
        %v1847 = vpop.f32.mrb[0].mxu0
        %1848 = vdwg.mxu0
        %v1849 = vsel %vm897, %v1844, -inf
        %1850 = vmax.xlane.f32.xlu0 %v1849
        %v1851 = vpop.xlane.xlu0 %1850
        %v1852 = vsub.f32 %v1844, %v1851
        %v1853 = vmul.f32 %v1852, 1.442695
        %v1854 = vpow.pop %v1853
        %v1855 = vsel %vm897, %v1854, 0.0
        %1856 = vadd.xlane.f32.xlu0 %v1855
        %v1857 = vpop.xlane.xlu0 %1856
        %v1858 = vrcp.pop %v1857
        %v1859 = vmul.f32 %v1854, %v1858
        %v1860 = vpack.c.bf16 %v1859, %v1859
        %1861 = vrot.lane.b32.xlu0 %v1553, 96
        %v1862 = vpop.permute.xlu0 %1861
        %v1864 = vsel %vm897, %v1860, 0
        %v1867 = vsel %vm914, %v1862, 0
        %1869 = vmatprep.subr.bf16.mxu0 0
        %1870 = vmatpush1.bf16.msra.mxu0 %v1867
        %1871 = vmatprep.subr.bf16.mxu0 0
        %1872 = vmatpush1.bf16.msra.mxu0 0
        %1873 = vmatprep.subr.bf16.mxu0 0
        %1874 = vmatpush1.bf16.msra.mxu0 0
        %1875 = vmatprep.subr.bf16.mxu0 0
        %1876 = vmatpush1.bf16.msra.mxu0 0
        %1877 = vmatprep.subr.bf16.mxu0 0
        %1878 = vmatpush1.bf16.msra.mxu0 0
        %1879 = vmatprep.subr.bf16.mxu0 0
        %1880 = vmatpush1.bf16.msra.mxu0 0
        %1881 = vmatprep.subr.bf16.mxu0 0
        %1882 = vmatpush1.bf16.msra.mxu0 0
        %1883 = vmatprep.subr.bf16.mxu0 0
        %1884 = vmatpush1.bf16.msra.mxu0 0
        %1885 = vmatprep.subr.bf16.mxu0 0
        %1886 = vmatpush1.bf16.msra.mxu0 0
        %1887 = vmatprep.subr.bf16.mxu0 0
        %1888 = vmatpush1.bf16.msra.mxu0 0
        %1889 = vmatprep.subr.bf16.mxu0 0
        %1890 = vmatpush1.bf16.msra.mxu0 0
        %1891 = vmatprep.subr.bf16.mxu0 0
        %1892 = vmatpush1.bf16.msra.mxu0 0
        %1893 = vmatprep.subr.bf16.mxu0 0
        %1894 = vmatpush1.bf16.msra.mxu0 0
        %1895 = vmatprep.subr.bf16.mxu0 0
        %1896 = vmatpush1.bf16.msra.mxu0 0
        %1897 = vmatprep.subr.bf16.mxu0 0
        %1898 = vmatpush1.bf16.msra.mxu0 0
        %1899 = vmatprep.subr.bf16.mxu0 0
        %1900 = vmatpush1.bf16.msra.mxu0 0
        %1901 = vmatprep.mubr.bf16.mxu0 0
        %1902 = vmatmul.mubr.bf16.gmra.mrb[0].mxu0 %v1864
        %v1903 = vpop.f32.mrb[0].mxu0
        %v1904 = vadd.f32 0.0, %v1903
        %v1905 = vpop.f32.mrb[0].mxu0
        %v1906 = vpop.f32.mrb[0].mxu0
        %v1907 = vpop.f32.mrb[0].mxu0
        %1908 = vdwg.mxu0
        %v1909 = vpack.c.bf16 %v1904, %v1904
        %v1911 = vsel %vm850, %v1909, 0
        %1913 = vmatprep.subr.bf16.mxu0 0
        %1914 = vmatpush1.bf16.msra.mxu0 %v1284
        %1915 = vmatprep.subr.bf16.mxu0 0
        %1916 = vmatpush1.bf16.msra.mxu0 0
        %1917 = vmatprep.subr.bf16.mxu0 0
        %1918 = vmatpush1.bf16.msra.mxu0 0
        %1919 = vmatprep.subr.bf16.mxu0 0
        %1920 = vmatpush1.bf16.msra.mxu0 0
        %1921 = vmatprep.subr.bf16.mxu0 0
        %1922 = vmatpush1.bf16.msra.mxu0 0
        %1923 = vmatprep.subr.bf16.mxu0 0
        %1924 = vmatpush1.bf16.msra.mxu0 0
        %1925 = vmatprep.subr.bf16.mxu0 0
        %1926 = vmatpush1.bf16.msra.mxu0 0
        %1927 = vmatprep.subr.bf16.mxu0 0
        %1928 = vmatpush1.bf16.msra.mxu0 0
        %1929 = vmatprep.subr.bf16.mxu0 0
        %1930 = vmatpush1.bf16.msra.mxu0 0
        %1931 = vmatprep.subr.bf16.mxu0 0
        %1932 = vmatpush1.bf16.msra.mxu0 0
        %1933 = vmatprep.subr.bf16.mxu0 0
        %1934 = vmatpush1.bf16.msra.mxu0 0
        %1935 = vmatprep.subr.bf16.mxu0 0
        %1936 = vmatpush1.bf16.msra.mxu0 0
        %1937 = vmatprep.subr.bf16.mxu0 0
        %1938 = vmatpush1.bf16.msra.mxu0 0
        %1939 = vmatprep.subr.bf16.mxu0 0
        %1940 = vmatpush1.bf16.msra.mxu0 0
        %1941 = vmatprep.subr.bf16.mxu0 0
        %1942 = vmatpush1.bf16.msra.mxu0 0
        %1943 = vmatprep.subr.bf16.mxu0 0
        %1944 = vmatpush1.bf16.msra.mxu0 0
        %1945 = vmatprep.mubr.bf16.mxu0 0
        %1946 = vmatmul.mubr.bf16.gmra.mrb[0].mxu0 %v1911
        %v1947 = vpop.f32.mrb[0].mxu0
        %v1948 = vadd.f32 0.0, %v1947
        %v1949 = vpop.f32.mrb[0].mxu0
        %v1950 = vpop.f32.mrb[0].mxu0
        %v1951 = vpop.f32.mrb[0].mxu0
        %1952 = vdwg.mxu0
        %v1953 = vadd.f32 %v1794, %v1948
        %1954 = vrot.lane.b32.xlu0 %v1491, 80
        %v1955 = vpop.permute.xlu0 %1954
        %1956 = vrot.lane.b32.xlu0 %v1491, 16
        %v1957 = vpop.permute.xlu0 %1956
        %v1959 = vsel %vm850, %v1955, 0
        %v1962 = vsel %vm850, %v1957, 0
        %1964 = vmatprep.subr.bf16.mxu0 0
        %1965 = vmatpush1.bf16.xpose.msra.mxu0 %v1962
        %1966 = vmatprep.subr.bf16.mxu0 0
        %1967 = vmatpush1.bf16.xpose.msra.mxu0 0
        %1968 = vmatprep.subr.bf16.mxu0 0
        %1969 = vmatpush1.bf16.xpose.msra.mxu0 0
        %1970 = vmatprep.subr.bf16.mxu0 0
        %1971 = vmatpush1.bf16.xpose.msra.mxu0 0
        %1972 = vmatprep.subr.bf16.mxu0 0
        %1973 = vmatpush1.bf16.xpose.msra.mxu0 0
        %1974 = vmatprep.subr.bf16.mxu0 0
        %1975 = vmatpush1.bf16.xpose.msra.mxu0 0
        %1976 = vmatprep.subr.bf16.mxu0 0
        %1977 = vmatpush1.bf16.xpose.msra.mxu0 0
        %1978 = vmatprep.subr.bf16.mxu0 0
        %1979 = vmatpush1.bf16.xpose.msra.mxu0 0
        %1980 = vmatprep.subr.bf16.mxu0 0
        %1981 = vmatpush1.bf16.xpose.msra.mxu0 0
        %1982 = vmatprep.subr.bf16.mxu0 0
        %1983 = vmatpush1.bf16.xpose.msra.mxu0 0
        %1984 = vmatprep.subr.bf16.mxu0 0
        %1985 = vmatpush1.bf16.xpose.msra.mxu0 0
        %1986 = vmatprep.subr.bf16.mxu0 0
        %1987 = vmatpush1.bf16.xpose.msra.mxu0 0
        %1988 = vmatprep.subr.bf16.mxu0 0
        %1989 = vmatpush1.bf16.xpose.msra.mxu0 0
        %1990 = vmatprep.subr.bf16.mxu0 0
        %1991 = vmatpush1.bf16.xpose.msra.mxu0 0
        %1992 = vmatprep.subr.bf16.mxu0 0
        %1993 = vmatpush1.bf16.xpose.msra.mxu0 0
        %1994 = vmatprep.subr.bf16.mxu0 0
        %1995 = vmatpush1.bf16.xpose.msra.mxu0 0
        %1996 = vmatprep.mubr.bf16.mxu0 0
        %1997 = vmatmul.mubr.bf16.gmra.mrb[0].mxu0 %v1959
        %v1998 = vpop.f32.mrb[0].mxu0
        %v1999 = vadd.f32 %v845, %v1998
        %v2000 = vpop.f32.mrb[0].mxu0
        %v2001 = vpop.f32.mrb[0].mxu0
        %v2002 = vpop.f32.mrb[0].mxu0
        %2003 = vdwg.mxu0
        %v2004 = vsel %vm897, %v1999, -inf
        %2005 = vmax.xlane.f32.xlu0 %v2004
        %v2006 = vpop.xlane.xlu0 %2005
        %v2007 = vsub.f32 %v1999, %v2006
        %v2008 = vmul.f32 %v2007, 1.442695
        %v2009 = vpow.pop %v2008
        %v2010 = vsel %vm897, %v2009, 0.0
        %2011 = vadd.xlane.f32.xlu0 %v2010
        %v2012 = vpop.xlane.xlu0 %2011
        %v2013 = vrcp.pop %v2012
        %v2014 = vmul.f32 %v2009, %v2013
        %v2015 = vpack.c.bf16 %v2014, %v2014
        %2016 = vrot.lane.b32.xlu0 %v1553, 80
        %v2017 = vpop.permute.xlu0 %2016
        %v2019 = vsel %vm897, %v2015, 0
        %v2022 = vsel %vm914, %v2017, 0
        %2024 = vmatprep.subr.bf16.mxu0 0
        %2025 = vmatpush1.bf16.msra.mxu0 %v2022
        %2026 = vmatprep.subr.bf16.mxu0 0
        %2027 = vmatpush1.bf16.msra.mxu0 0
        %2028 = vmatprep.subr.bf16.mxu0 0
        %2029 = vmatpush1.bf16.msra.mxu0 0
        %2030 = vmatprep.subr.bf16.mxu0 0
        %2031 = vmatpush1.bf16.msra.mxu0 0
        %2032 = vmatprep.subr.bf16.mxu0 0
        %2033 = vmatpush1.bf16.msra.mxu0 0
        %2034 = vmatprep.subr.bf16.mxu0 0
        %2035 = vmatpush1.bf16.msra.mxu0 0
        %2036 = vmatprep.subr.bf16.mxu0 0
        %2037 = vmatpush1.bf16.msra.mxu0 0
        %2038 = vmatprep.subr.bf16.mxu0 0
        %2039 = vmatpush1.bf16.msra.mxu0 0
        %2040 = vmatprep.subr.bf16.mxu0 0
        %2041 = vmatpush1.bf16.msra.mxu0 0
        %2042 = vmatprep.subr.bf16.mxu0 0
        %2043 = vmatpush1.bf16.msra.mxu0 0
        %2044 = vmatprep.subr.bf16.mxu0 0
        %2045 = vmatpush1.bf16.msra.mxu0 0
        %2046 = vmatprep.subr.bf16.mxu0 0
        %2047 = vmatpush1.bf16.msra.mxu0 0
        %2048 = vmatprep.subr.bf16.mxu0 0
        %2049 = vmatpush1.bf16.msra.mxu0 0
        %2050 = vmatprep.subr.bf16.mxu0 0
        %2051 = vmatpush1.bf16.msra.mxu0 0
        %2052 = vmatprep.subr.bf16.mxu0 0
        %2053 = vmatpush1.bf16.msra.mxu0 0
        %2054 = vmatprep.subr.bf16.mxu0 0
        %2055 = vmatpush1.bf16.msra.mxu0 0
        %2056 = vmatprep.mubr.bf16.mxu0 0
        %2057 = vmatmul.mubr.bf16.gmra.mrb[0].mxu0 %v2019
        %v2058 = vpop.f32.mrb[0].mxu0
        %v2059 = vadd.f32 0.0, %v2058
        %v2060 = vpop.f32.mrb[0].mxu0
        %v2061 = vpop.f32.mrb[0].mxu0
        %v2062 = vpop.f32.mrb[0].mxu0
        %2063 = vdwg.mxu0
        %v2064 = vpack.c.bf16 %v2059, %v2059
        %v2066 = vsel %vm850, %v2064, 0
        %2068 = vmatprep.subr.bf16.mxu0 0
        %2069 = vmatpush1.bf16.msra.mxu0 %v1445
        %2070 = vmatprep.subr.bf16.mxu0 0
        %2071 = vmatpush1.bf16.msra.mxu0 0
        %2072 = vmatprep.subr.bf16.mxu0 0
        %2073 = vmatpush1.bf16.msra.mxu0 0
        %2074 = vmatprep.subr.bf16.mxu0 0
        %2075 = vmatpush1.bf16.msra.mxu0 0
        %2076 = vmatprep.subr.bf16.mxu0 0
        %2077 = vmatpush1.bf16.msra.mxu0 0
        %2078 = vmatprep.subr.bf16.mxu0 0
        %2079 = vmatpush1.bf16.msra.mxu0 0
        %2080 = vmatprep.subr.bf16.mxu0 0
        %2081 = vmatpush1.bf16.msra.mxu0 0
        %2082 = vmatprep.subr.bf16.mxu0 0
        %2083 = vmatpush1.bf16.msra.mxu0 0
        %2084 = vmatprep.subr.bf16.mxu0 0
        %2085 = vmatpush1.bf16.msra.mxu0 0
        %2086 = vmatprep.subr.bf16.mxu0 0
        %2087 = vmatpush1.bf16.msra.mxu0 0
        %2088 = vmatprep.subr.bf16.mxu0 0
        %2089 = vmatpush1.bf16.msra.mxu0 0
        %2090 = vmatprep.subr.bf16.mxu0 0
        %2091 = vmatpush1.bf16.msra.mxu0 0
        %2092 = vmatprep.subr.bf16.mxu0 0
        %2093 = vmatpush1.bf16.msra.mxu0 0
        %2094 = vmatprep.subr.bf16.mxu0 0
        %2095 = vmatpush1.bf16.msra.mxu0 0
        %2096 = vmatprep.subr.bf16.mxu0 0
        %2097 = vmatpush1.bf16.msra.mxu0 0
        %2098 = vmatprep.subr.bf16.mxu0 0
        %2099 = vmatpush1.bf16.msra.mxu0 0
        %2100 = vmatprep.mubr.bf16.mxu0 0
        %2101 = vmatmul.mubr.bf16.gmra.mrb[0].mxu0 %v2066
        %v2102 = vpop.f32.mrb[0].mxu0
        %v2103 = vadd.f32 0.0, %v2102
        %v2104 = vpop.f32.mrb[0].mxu0
        %v2105 = vpop.f32.mrb[0].mxu0
        %v2106 = vpop.f32.mrb[0].mxu0
        %2107 = vdwg.mxu0
        %v2108 = vadd.f32 %v1953, %v2103
        %v2109 = vadd.f32 %v682, %v1490
        %v2110 = vadd.f32 %v683, %v2108
        %v2111 = vld [vmem:[%s647] sm:$0x1]
        %v2113 = vlaneseq
        %v2114 = vshrl.u32 %v2113, 7
        %v2115 = vsub.s32 0, %v2114
        %v2116 = vrot.slane %v2111, %v2115
        %v2118 = vadd.f32 %v2109, %v2116
        %v2119 = vadd.f32 %v2110, %v2116
        %v2120 = vld [vmem:[%s650] sm:$0x1]
        %v2121 = vld [vmem:[%s653] sm:$0x1]
        %v2122 = vsel %vm686, %v2118, 0.0
        %2123 = vadd.xlane.f32.xlu0 %v2122
        %v2124 = vpop.xlane.xlu0 %2123
        %v2125 = vsel %vm686, %v2119, 0.0
        %2126 = vadd.xlane.f32.xlu0 %v2125
        %v2127 = vpop.xlane.xlu0 %2126
        %v2128 = vmul.f32 %v2124, %v693
        %v2129 = vmul.f32 %v2127, %v693
        %v2130 = vsub.f32 %v2118, %v2128
        %v2131 = vsub.f32 %v2119, %v2129
        %v2132 = vmul.f32 %v2130, %v2130
        %v2133 = vmul.f32 %v2131, %v2131
        %v2134 = vsel %vm686, %v2132, 0.0
        %2135 = vadd.xlane.f32.xlu0 %v2134
        %v2136 = vpop.xlane.xlu0 %2135
        %v2137 = vsel %vm686, %v2133, 0.0
        %2138 = vadd.xlane.f32.xlu0 %v2137
        %v2139 = vpop.xlane.xlu0 %2138
        %v2140 = vmul.f32 %v2136, %v693
        %v2141 = vmul.f32 %v2139, %v693
        %v2142 = vadd.f32 %v2140, 1e-05
        %v2143 = vadd.f32 %v2141, 1e-05
        %v2144 = vrsqrt.pop %v2142
        %v2145 = vrsqrt.pop %v2143
        %v2146 = vmul.f32 %v2130, %v2144
        %v2147 = vmul.f32 %v2131, %v2145
        %v2149 = vlaneseq
        %v2150 = vshrl.u32 %v2149, 7
        %v2151 = vsub.s32 0, %v2150
        %v2152 = vrot.slane %v2120, %v2151
        %v2154 = vmul.f32 %v2146, %v2152
        %v2155 = vmul.f32 %v2147, %v2152
        %v2157 = vlaneseq
        %v2158 = vshrl.u32 %v2157, 7
        %v2159 = vsub.s32 0, %v2158
        %v2160 = vrot.slane %v2121, %v2159
        %v2162 = vadd.f32 %v2154, %v2160
        %v2163 = vadd.f32 %v2155, %v2160
        %v2164 = vpack.c.bf16 %v2163, %v2162
        %v2165 = vld [vmem:[%s658] sm:$0xff]
        %v2166 = vld [vmem:[%s658 + $0x8] sm:$0xff]
        %v2167 = vld [vmem:[%s658 + $0x10] sm:$0xff]
        %v2168 = vld [vmem:[%s658 + $0x18] sm:$0xff]
        %v2169 = vld [vmem:[%s658 + $0x20] sm:$0xff]
        %v2170 = vld [vmem:[%s658 + $0x28] sm:$0xff]
        %v2171 = vld [vmem:[%s658 + $0x30] sm:$0xff]
        %v2172 = vld [vmem:[%s658 + $0x38] sm:$0xff]
        %v2173 = vld [vmem:[%s662] sm:$0x3]
        %v2175 = vlaneseq
        %v2176 = vshrl.u32 %v2175, 7
        %v2177 = vsub.s32 0, %v2176
        %v2178 = vrot.slane %v2173, %v2177
        %v2179 = vlaneseq
        %v2180 = vshrl.u32 %v2179, 7
        %v2181 = vsub.s32 1, %v2180
        %v2182 = vrot.slane %v2173, %v2181
        %v2193 = vunpack.c.l.b16 %v2165
        %v2194 = vunpack.c.h.b16 %v2165
        %v2195 = vunpack.c.l.b16 %v2166
        %v2196 = vunpack.c.h.b16 %v2166
        %v2197 = vunpack.c.l.b16 %v2167
        %v2198 = vunpack.c.h.b16 %v2167
        %v2199 = vunpack.c.l.b16 %v2168
        %v2200 = vunpack.c.h.b16 %v2168
        %v2201 = vunpack.c.l.b16 %v2169
        %v2202 = vunpack.c.h.b16 %v2169
        %v2203 = vunpack.c.l.b16 %v2170
        %v2204 = vunpack.c.h.b16 %v2170
        %v2205 = vunpack.c.l.b16 %v2171
        %v2206 = vunpack.c.h.b16 %v2171
        %v2207 = vunpack.c.l.b16 %v2172
        %v2208 = vunpack.c.h.b16 %v2172
        %v2209 = vpack.c.b16 %v2195, %v2193
        %v2210 = vpack.c.b16 %v2196, %v2194
        %v2211 = vpack.c.b16 %v2199, %v2197
        %v2212 = vpack.c.b16 %v2200, %v2198
        %v2213 = vpack.c.b16 %v2203, %v2201
        %v2214 = vpack.c.b16 %v2204, %v2202
        %v2215 = vpack.c.b16 %v2207, %v2205
        %v2216 = vpack.c.b16 %v2208, %v2206
        %v2226 = vsel %vm686, %v2164, 0
        %2228 = vmatprep.subr.bf16.mxu0 %v2210
        %2229 = vmatpush1.bf16.msra.mxu0 %v2209
        %2230 = vmatprep.subr.bf16.mxu0 %v2212
        %2231 = vmatpush1.bf16.msra.mxu0 %v2211
        %2232 = vmatprep.subr.bf16.mxu0 %v2214
        %2233 = vmatpush1.bf16.msra.mxu0 %v2213
        %2234 = vmatprep.subr.bf16.mxu0 %v2216
        %2235 = vmatpush1.bf16.msra.mxu0 %v2215
        %2236 = vmatprep.subr.bf16.mxu0 0
        %2237 = vmatpush1.bf16.msra.mxu0 0
        %2238 = vmatprep.subr.bf16.mxu0 0
        %2239 = vmatpush1.bf16.msra.mxu0 0
        %2240 = vmatprep.subr.bf16.mxu0 0
        %2241 = vmatpush1.bf16.msra.mxu0 0
        %2242 = vmatprep.subr.bf16.mxu0 0
        %2243 = vmatpush1.bf16.msra.mxu0 0
        %2244 = vmatprep.subr.bf16.mxu0 0
        %2245 = vmatpush1.bf16.msra.mxu0 0
        %2246 = vmatprep.subr.bf16.mxu0 0
        %2247 = vmatpush1.bf16.msra.mxu0 0
        %2248 = vmatprep.subr.bf16.mxu0 0
        %2249 = vmatpush1.bf16.msra.mxu0 0
        %2250 = vmatprep.subr.bf16.mxu0 0
        %2251 = vmatpush1.bf16.msra.mxu0 0
        %2252 = vmatprep.subr.bf16.mxu0 0
        %2253 = vmatpush1.bf16.msra.mxu0 0
        %2254 = vmatprep.subr.bf16.mxu0 0
        %2255 = vmatpush1.bf16.msra.mxu0 0
        %2256 = vmatprep.subr.bf16.mxu0 0
        %2257 = vmatpush1.bf16.msra.mxu0 0
        %2258 = vmatprep.subr.bf16.mxu0 0
        %2259 = vmatpush1.bf16.msra.mxu0 0
        %2260 = vmatprep.mubr.bf16.mxu0 0
        %2261 = vmatmul.mubr.bf16.gmra.mrb[0].mxu0 %v2226
        %v2262 = vpop.f32.mrb[0].mxu0
        %v2263 = vadd.f32 %v2178, %v2262
        %v2264 = vpop.f32.mrb[0].mxu0
        %v2265 = vadd.f32 %v2182, %v2264
        %v2266 = vpop.f32.mrb[0].mxu0
        %v2267 = vadd.f32 %v2178, %v2266
        %v2268 = vpop.f32.mrb[0].mxu0
        %v2269 = vadd.f32 %v2182, %v2268
        %2270 = vdwg.mxu0
        %v2271 = vmul.f32 %v2263, -1.702
        %v2272 = vmul.f32 %v2265, -1.702
        %v2273 = vmul.f32 %v2267, -1.702
        %v2274 = vmul.f32 %v2269, -1.702
        %v2275 = vmul.f32 %v2271, 1.442695
        %v2276 = vpow.pop %v2275
        %v2277 = vmul.f32 %v2272, 1.442695
        %v2278 = vpow.pop %v2277
        %v2279 = vmul.f32 %v2273, 1.442695
        %v2280 = vpow.pop %v2279
        %v2281 = vmul.f32 %v2274, 1.442695
        %v2282 = vpow.pop %v2281
        %v2283 = vadd.f32 %v2276, 1.0
        %v2284 = vadd.f32 %v2278, 1.0
        %v2285 = vadd.f32 %v2280, 1.0
        %v2286 = vadd.f32 %v2282, 1.0
        %v2287 = vrcp.pop %v2283
        %v2288 = vrcp.pop %v2284
        %v2289 = vrcp.pop %v2285
        %v2290 = vrcp.pop %v2286
        %v2291 = vmul.f32 %v2263, %v2287
        %v2292 = vmul.f32 %v2265, %v2288
        %v2293 = vmul.f32 %v2267, %v2289
        %v2294 = vmul.f32 %v2269, %v2290
        %v2295 = vpack.c.bf16 %v2293, %v2291
        %v2296 = vpack.c.bf16 %v2294, %v2292
        %v2297 = vld [vmem:[%s667] sm:$0xf]
        %v2298 = vld [vmem:[%s667 + $0x4] sm:$0xf]
        %v2299 = vld [vmem:[%s667 + $0x8] sm:$0xf]
        %v2300 = vld [vmem:[%s667 + $0xc] sm:$0xf]
        %v2301 = vld [vmem:[%s667 + $0x10] sm:$0xf]
        %v2302 = vld [vmem:[%s667 + $0x14] sm:$0xf]
        %v2303 = vld [vmem:[%s667 + $0x18] sm:$0xf]
        %v2304 = vld [vmem:[%s667 + $0x1c] sm:$0xf]
        %v2305 = vld [vmem:[%s667 + $0x20] sm:$0xf]
        %v2306 = vld [vmem:[%s667 + $0x24] sm:$0xf]
        %v2307 = vld [vmem:[%s667 + $0x28] sm:$0xf]
        %v2308 = vld [vmem:[%s667 + $0x2c] sm:$0xf]
        %v2309 = vld [vmem:[%s667 + $0x30] sm:$0xf]
        %v2310 = vld [vmem:[%s667 + $0x34] sm:$0xf]
        %v2311 = vld [vmem:[%s667 + $0x38] sm:$0xf]
        %v2312 = vld [vmem:[%s667 + $0x3c] sm:$0xf]
        %v2313 = vld [vmem:[%s667 + $0x40] sm:$0xf]
        %v2314 = vld [vmem:[%s667 + $0x44] sm:$0xf]
        %v2315 = vld [vmem:[%s667 + $0x48] sm:$0xf]
        %v2316 = vld [vmem:[%s667 + $0x4c] sm:$0xf]
        %v2317 = vld [vmem:[%s667 + $0x50] sm:$0xf]
        %v2318 = vld [vmem:[%s667 + $0x54] sm:$0xf]
        %v2319 = vld [vmem:[%s667 + $0x58] sm:$0xf]
        %v2320 = vld [vmem:[%s667 + $0x5c] sm:$0xf]
        %v2321 = vld [vmem:[%s667 + $0x60] sm:$0xf]
        %v2322 = vld [vmem:[%s667 + $0x64] sm:$0xf]
        %v2323 = vld [vmem:[%s667 + $0x68] sm:$0xf]
        %v2324 = vld [vmem:[%s667 + $0x6c] sm:$0xf]
        %v2325 = vld [vmem:[%s667 + $0x70] sm:$0xf]
        %v2326 = vld [vmem:[%s667 + $0x74] sm:$0xf]
        %v2327 = vld [vmem:[%s667 + $0x78] sm:$0xf]
        %v2328 = vld [vmem:[%s667 + $0x7c] sm:$0xf]
        %v2361 = vunpack.c.l.b16 %v2297
        %v2362 = vunpack.c.l.b16 %v2298
        %v2363 = vunpack.c.l.b16 %v2299
        %v2364 = vunpack.c.l.b16 %v2300
        %v2365 = vunpack.c.l.b16 %v2301
        %v2366 = vunpack.c.l.b16 %v2302
        %v2367 = vunpack.c.l.b16 %v2303
        %v2368 = vunpack.c.l.b16 %v2304
        %v2369 = vunpack.c.l.b16 %v2305
        %v2370 = vunpack.c.l.b16 %v2306
        %v2371 = vunpack.c.l.b16 %v2307
        %v2372 = vunpack.c.l.b16 %v2308
        %v2373 = vunpack.c.l.b16 %v2309
        %v2374 = vunpack.c.l.b16 %v2310
        %v2375 = vunpack.c.l.b16 %v2311
        %v2376 = vunpack.c.l.b16 %v2312
        %v2377 = vunpack.c.l.b16 %v2313
        %v2378 = vunpack.c.l.b16 %v2314
        %v2379 = vunpack.c.l.b16 %v2315
        %v2380 = vunpack.c.l.b16 %v2316
        %v2381 = vunpack.c.l.b16 %v2317
        %v2382 = vunpack.c.l.b16 %v2318
        %v2383 = vunpack.c.l.b16 %v2319
        %v2384 = vunpack.c.l.b16 %v2320
        %v2385 = vunpack.c.l.b16 %v2321
        %v2386 = vunpack.c.l.b16 %v2322
        %v2387 = vunpack.c.l.b16 %v2323
        %v2388 = vunpack.c.l.b16 %v2324
        %v2389 = vunpack.c.l.b16 %v2325
        %v2390 = vunpack.c.l.b16 %v2326
        %v2391 = vunpack.c.l.b16 %v2327
        %v2392 = vunpack.c.l.b16 %v2328
        %v2393 = vpack.c.b16 %v2362, %v2361
        %v2394 = vpack.c.b16 %v2364, %v2363
        %v2395 = vpack.c.b16 %v2366, %v2365
        %v2396 = vpack.c.b16 %v2368, %v2367
        %v2397 = vpack.c.b16 %v2370, %v2369
        %v2398 = vpack.c.b16 %v2372, %v2371
        %v2399 = vpack.c.b16 %v2374, %v2373
        %v2400 = vpack.c.b16 %v2376, %v2375
        %v2401 = vpack.c.b16 %v2378, %v2377
        %v2402 = vpack.c.b16 %v2380, %v2379
        %v2403 = vpack.c.b16 %v2382, %v2381
        %v2404 = vpack.c.b16 %v2384, %v2383
        %v2405 = vpack.c.b16 %v2386, %v2385
        %v2406 = vpack.c.b16 %v2388, %v2387
        %v2407 = vpack.c.b16 %v2390, %v2389
        %v2408 = vpack.c.b16 %v2392, %v2391
        %2425 = vmatprep.subr.bf16.mxu0 0
        %2426 = vmatpush1.bf16.msra.mxu0 %v2393
        %2427 = vmatprep.subr.bf16.mxu0 0
        %2428 = vmatpush1.bf16.msra.mxu0 %v2394
        %2429 = vmatprep.subr.bf16.mxu0 0
        %2430 = vmatpush1.bf16.msra.mxu0 %v2395
        %2431 = vmatprep.subr.bf16.mxu0 0
        %2432 = vmatpush1.bf16.msra.mxu0 %v2396
        %2433 = vmatprep.subr.bf16.mxu0 0
        %2434 = vmatpush1.bf16.msra.mxu0 %v2397
        %2435 = vmatprep.subr.bf16.mxu0 0
        %2436 = vmatpush1.bf16.msra.mxu0 %v2398
        %2437 = vmatprep.subr.bf16.mxu0 0
        %2438 = vmatpush1.bf16.msra.mxu0 %v2399
        %2439 = vmatprep.subr.bf16.mxu0 0
        %2440 = vmatpush1.bf16.msra.mxu0 %v2400
        %2441 = vmatprep.subr.bf16.mxu0 0
        %2442 = vmatpush1.bf16.msra.mxu0 %v2401
        %2443 = vmatprep.subr.bf16.mxu0 0
        %2444 = vmatpush1.bf16.msra.mxu0 %v2402
        %2445 = vmatprep.subr.bf16.mxu0 0
        %2446 = vmatpush1.bf16.msra.mxu0 %v2403
        %2447 = vmatprep.subr.bf16.mxu0 0
        %2448 = vmatpush1.bf16.msra.mxu0 %v2404
        %2449 = vmatprep.subr.bf16.mxu0 0
        %2450 = vmatpush1.bf16.msra.mxu0 %v2405
        %2451 = vmatprep.subr.bf16.mxu0 0
        %2452 = vmatpush1.bf16.msra.mxu0 %v2406
        %2453 = vmatprep.subr.bf16.mxu0 0
        %2454 = vmatpush1.bf16.msra.mxu0 %v2407
        %2455 = vmatprep.subr.bf16.mxu0 0
        %2456 = vmatpush1.bf16.msra.mxu0 %v2408
        %2457 = vmatprep.mubr.bf16.mxu0 %v2296
        %2458 = vmatmul.mubr.bf16.gmra.mrb[0].mxu0 %v2295
        %v2459 = vpop.f32.mrb[0].mxu0
        %v2460 = vadd.f32 0.0, %v2459
        %v2461 = vpop.f32.mrb[0].mxu0
        %v2462 = vpop.f32.mrb[0].mxu0
        %v2463 = vadd.f32 0.0, %v2462
        %v2464 = vpop.f32.mrb[0].mxu0
        %2465 = vdwg.mxu0
        %v2466 = vadd.f32 %v2118, %v2460
        %v2467 = vadd.f32 %v2119, %v2463
        %v2468 = vld [vmem:[%s670] sm:$0x1]
        %v2470 = vlaneseq
        %v2471 = vshrl.u32 %v2470, 7
        %v2472 = vsub.s32 0, %v2471
        %v2473 = vrot.slane %v2468, %v2472
        %v2475 = vadd.f32 %v2466, %v2473
        %v2476 = vadd.f32 %v2467, %v2473
        %2477 = vst.msk [vmem:[#allocation2] sm:$0xff] %vm686, %v2475
        %2478 = vst.msk [vmem:[#allocation2 + $0x8] sm:$0xff] %vm686, %v2476
        %p2479 = scmp.eq.s32.totalorder %s31, 1
        // Predicated region
        $region81: #{tpu_custom_call.1} parent=75 // pred_check
          %p2480 = pneg %p2479
        $region82: #{tpu_custom_call.1} parent=75 // pred_check_branch
          %2482 = sbr.rel (%p2480) target = $region84
        $region83: #{tpu_custom_call.1} parent=75 // pred_region
          %2483 = vst.msk [vmem:[#allocation3] sm:$0xff] %vm686, %v2475
          %2484 = vst.msk [vmem:[#allocation3 + $0x8] sm:$0xff] %vm686, %v2476
        $region84: #{tpu_custom_call.1} parent=75 // pred_fallthru
          _
        // Predicated region
        $region85: #{tpu_custom_call.1} parent=75 // pred_check
          %p2485 = pneg %p415
        $region86: #{tpu_custom_call.1} parent=75 // pred_check_branch
          %2487 = sbr.rel (%p2485) target = $region88
        $region87: #{tpu_custom_call.1} parent=75 // pred_region
          %s2488 = smul.u32 2, %s30
          %s2490 = ssub.s32 256, 256
          %2491 = vsyncadd [#allocation4], %s2490
          %s2492 = smul.addr %s2488, 128
          %s2493 = scalar_lea.hbm %s14, %s2492
          %s2494 = sshll.u32 [#allocation3], 4
          %s2495 = int_to_ptr.vmem [resolvable:$true] %s2494
          %2500 = dma.vmem_to_hbm [thread:$0]  %s2495, 256, %s2493, [#allocation4], 128, 128, 8
        $region88: #{tpu_custom_call.1} parent=75 // pred_fallthru
          _
        // Predicated region
        $region89: #{tpu_custom_call.1} parent=75 // pred_check
          %p2501 = pneg %p415
        $region90: #{tpu_custom_call.1} parent=75 // pred_check_branch
          %2503 = sbr.rel (%p2501) target = $region92
        $region91: #{tpu_custom_call.1} parent=75 // pred_region
          %2504 = dma.done [#allocation4], 256
        $region92: #{tpu_custom_call.1} parent=75 // pred_fallthru
          _
      $region76: #{tpu_custom_call.1} parent=5 // pred_fallthru
        _
      %p2505 = scmp.le.s32.totalorder 2, %s21
      // Predicated region
      $region93: #{tpu_custom_call.1} parent=5 // pred_check
        %p2506 = pneg %p2505
      $region94: #{tpu_custom_call.1} parent=5 // pred_check_branch
        %2508 = sbr.rel (%p2506) target = $region96
      $region95: #{tpu_custom_call.1} parent=5 // pred_region
        %s2509 = ssub.s32 %s21, 2
      $region96: #{tpu_custom_call.1} parent=5 // pred_fallthru
        _
    $region6: #{tpu_custom_call.1} parent=1 // loop_footer
      %s25 = sadd.s32 1, %s21
    $region7: #{tpu_custom_call.1} parent=1 // loop_footer_branch
      %20 = sbr.rel target = $region3
    $region8: #{tpu_custom_call.1} parent=1 // loop_exit
      _
    %2510 = vsyncpa [#allocation4], 1
    %s2511 = scalar_lea.sflag [#allocation4], 1
    %2512 = vsyncpa %s2511, 1

</llo_original>
